<compile_context>
chip_gen: v6e
topology: v6e:2x2x1
jax: 0.10.0
libtpu: 0.0.40
codegen_flags: <defaults>
</compile_context>

<pallas_src>
import math
from functools import partial

import jax
import jax.numpy as jnp
from jax.experimental import pallas as pl
from jax.experimental.pallas import tpu as pltpu

LANE = 128
_NEG_MASK = -1e9      # sparsemax "minus infinity" (moderate: avoids f32 overflow)
_NEG_CLASS = -1e30    # mask for padded logit lanes in log_softmax


# ----------------------------------------------------------------------------- helpers
def _round_up(x, m):
    return ((x + m - 1) // m) * m


def _pick_tile(n, pref, align):
    """Largest tile <= pref that divides n and is a multiple of `align`
    (falls back to the full dimension, which is always a legal block)."""
    if n <= pref:
        return n
    t = (pref // align) * align
    while t >= align:
        if n % t == 0:
            return t
        t -= align
    return n


def _pad2(w, rows, cols):
    out = jnp.zeros((rows, cols), jnp.float32)
    return out.at[: w.shape[0], : w.shape[1]].set(w.astype(jnp.float32))


def _pad1(b, cols):
    return jnp.zeros((cols,), jnp.float32).at[: b.shape[0]].set(b.astype(jnp.float32))


def _pad_cols(x, cols):
    out = jnp.zeros((x.shape[0], cols), jnp.float32)
    return out.at[:, : x.shape[1]].set(x.astype(jnp.float32))


_VMEM = pl.BlockSpec(memory_space=pltpu.MemorySpace.VMEM)


def _small_call(kernel, n_in, out_shape):
    # whole-operand kernels for the tiny post-pooling / readout / head stages
    return pl.pallas_call(
        kernel,
        out_shape=out_shape,
        in_specs=[_VMEM] * n_in,
        out_specs=_VMEM,
    )


# ----------------------------------------------------------------------------- kernels
def _gcn_kernel(a_ref, dr_ref, dc_ref, x_ref, w_ref, b_ref, o_ref, acc_ref):
    """GCN conv: accumulate (A_norm @ X) over column tiles; finalize relu(acc @ W + b).

    A_norm is built per tile from the *raw* adjacency: missing self loops are
    filled with 1 on the diagonal, rows/cols scaled by D^-1/2 (VPU work hidden
    under the MXU slot). MXU runs bf16 x bf16 -> f32.
    """
    k = pl.program_id(1)

    @pl.when(k == 0)
    def _():
        acc_ref[...] = jnp.zeros_like(acc_ref)

    tm, tk = a_ref.shape
    rows = pl.program_id(0) * tm + jax.lax.broadcasted_iota(jnp.int32, (tm, tk), 0)
    cols = k * tk + jax.lax.broadcasted_iota(jnp.int32, (tm, tk), 1)
    a = a_ref[...]
    a = a + jnp.where(jnp.logical_and(rows == cols, a == 0.0), 1.0, 0.0)
    a = a * dr_ref[...] * dc_ref[...]

    acc_ref[...] += jnp.dot(a.astype(jnp.bfloat16),
                            x_ref[...].astype(jnp.bfloat16),
                            preferred_element_type=jnp.float32)

    @pl.when(k == pl.num_programs(1) - 1)
    def _():
        h = jnp.dot(acc_ref[...], w_ref[...], preferred_element_type=jnp.float32)
        o_ref[...] = jnp.maximum(h + b_ref[...], 0.0)


def _info_kernel(a_ref, dr_ref, dc_ref, hcol_ref, hrow_ref, o_ref, acc_ref):
    """NodeInformationScore: s_i = sum_h |(D^-1/2 (A - diag A) D^-1/2 h)_ih - h_ih|.

    The per-node score is lane-broadcast to 128 lanes so the store is unmasked.
    """
    k = pl.program_id(1)

    @pl.when(k == 0)
    def _():
        acc_ref[...] = jnp.zeros_like(acc_ref)

    tm, tk = a_ref.shape
    rows = pl.program_id(0) * tm + jax.lax.broadcasted_iota(jnp.int32, (tm, tk), 0)
    cols = k * tk + jax.lax.broadcasted_iota(jnp.int32, (tm, tk), 1)
    a = jnp.where(rows == cols, 0.0, a_ref[...])       # remove self loops
    a = a * dr_ref[...] * dc_ref[...]

    acc_ref[...] += jnp.dot(a.astype(jnp.bfloat16),
                            hcol_ref[...].astype(jnp.bfloat16),
                            preferred_element_type=jnp.float32)

    @pl.when(k == pl.num_programs(1) - 1)
    def _():
        s = jnp.sum(jnp.abs(acc_ref[...] - hrow_ref[...]), axis=1, keepdims=True)
        o_ref[...] = jnp.broadcast_to(s, o_ref.shape)


def _attn_kernel(x_ref, attl_ref, attr_ref, adj_ref, bcol_ref, brow_ref, o_ref, *,
                 lamb, slope):
    """Structure learning scores: leaky_relu(att_l.x_i + att_r.x_j) + lamb*A_ind,
    masked to -1e9 outside the same-graph block so sparsemax zeroes them."""
    xl = jnp.dot(x_ref[...], attl_ref[...], preferred_element_type=jnp.float32)   # (K, 1)
    xr = jnp.einsum("od,kd->ok", attr_ref[...], x_ref[...],
                    preferred_element_type=jnp.float32)                           # (1, K)
    w = xl + xr                                                                   # (K, K)
    w = jnp.where(w > 0.0, w, slope * w)
    w = w + lamb * adj_ref[...]
    same = bcol_ref[...] == brow_ref[...]
    o_ref[...] = jnp.where(same, w, _NEG_MASK)


def _readout_kernel(x_ref, o_ref, *, inv_k):
    """concat([global_max_pool, global_mean_pool]); x is (G, k_per_graph, Hp)."""
    x = x_ref[...]
    mx = jnp.max(x, axis=1)                 # (G, Hp)
    mn = jnp.sum(x, axis=1) * inv_k         # (G, Hp)
    o_ref[...] = jnp.concatenate([mx, mn], axis=1)


def _head_kernel(x1_ref, x2_ref, x3_ref, w1_ref, b1_ref, w2_ref, b2_ref,
                 w3_ref, b3_ref, o_ref, *, num_classes):
    # x = relu(x1)+relu(x2)+relu(x3); lin1->relu->lin2->relu->lin3->log_softmax
    x = (jnp.maximum(x1_ref[...], 0.0) + jnp.maximum(x2_ref[...], 0.0)
         + jnp.maximum(x3_ref[...], 0.0))
    h = jnp.maximum(jnp.dot(x, w1_ref[...], preferred_element_type=jnp.float32)
                    + b1_ref[...], 0.0)
    # TODO(synk): F.dropout omitted (inference / training=False semantics -> identity).
    h = jnp.maximum(jnp.dot(h, w2_ref[...], preferred_element_type=jnp.float32)
                    + b2_ref[...], 0.0)
    logits = jnp.dot(h, w3_ref[...], preferred_element_type=jnp.float32) + b3_ref[...]
    cmask = jax.lax.broadcasted_iota(jnp.int32, logits.shape, 1) < num_classes
    z = jnp.where(cmask, logits, _NEG_CLASS)
    z = z - jnp.max(z, axis=-1, keepdims=True)
    denom = jnp.sum(jnp.where(cmask, jnp.exp(z), 0.0), axis=-1, keepdims=True)
    o_ref[...] = z - jnp.log(denom)


# ----------------------------------------------------------------------------- kernel wrappers
def gcn_conv_relu(adj, x, w, b, *, tm_pref=512, tk_pref=512):
    """relu( gcn_norm(adj) @ x @ w + b ), gridded + pipelined over adjacency tiles."""
    n = adj.shape[0]
    fp, hp = w.shape
    diag = jnp.diagonal(adj)
    deg = jnp.sum(adj, axis=1) + jnp.where(diag == 0.0, 1.0, 0.0)   # add missing self loops
    dinv = jnp.where(deg > 0.0, jax.lax.rsqrt(deg), 0.0)

    tm = _pick_tile(n, tm_pref, 8)
    tk = _pick_tile(n, tk_pref, LANE)
    grid = (n // tm, n // tk)
    return pl.pallas_call(
        _gcn_kernel,
        out_shape=jax.ShapeDtypeStruct((n, hp), jnp.float32),
        grid=grid,
        in_specs=[
            pl.BlockSpec((tm, tk), lambda i, k: (i, k)),     # adjacency tile
            pl.BlockSpec((tm, 1), lambda i, k: (i, 0)),      # D^-1/2 rows
            pl.BlockSpec((1, tk), lambda i, k: (0, k)),      # D^-1/2 cols
            pl.BlockSpec((tk, fp), lambda i, k: (k, 0)),     # X tile
            pl.BlockSpec((fp, hp), lambda i, k: (0, 0)),     # W (resident)
            pl.BlockSpec((1, hp), lambda i, k: (0, 0)),      # b (resident)
        ],
        out_specs=pl.BlockSpec((tm, hp), lambda i, k: (i, 0)),
        scratch_shapes=[pltpu.VMEM((tm, fp), jnp.float32)],
        compiler_params=pltpu.CompilerParams(
            dimension_semantics=("parallel", "arbitrary"),
            vmem_limit_bytes=32 * 1024 * 1024),
    )(adj, dinv.reshape(n, 1), dinv.reshape(1, n), x, w, b.reshape(1, hp))


def node_information_score(adj, h):
    n = adj.shape[0]
    hp = h.shape[1]
    deg = jnp.sum(adj, axis=1) - jnp.diagonal(adj)                  # degree w/o self loops
    dinv = jnp.where(deg > 0.0, jax.lax.rsqrt(deg), 0.0)

    tm = _pick_tile(n, 512, 8)
    tk = _pick_tile(n, 512, LANE)
    grid = (n // tm, n // tk)
    out = pl.pallas_call(
        _info_kernel,
        out_shape=jax.ShapeDtypeStruct((n, hp), jnp.float32),
        grid=grid,
        in_specs=[
            pl.BlockSpec((tm, tk), lambda i, k: (i, k)),     # adjacency tile
            pl.BlockSpec((tm, 1), lambda i, k: (i, 0)),
            pl.BlockSpec((1, tk), lambda i, k: (0, k)),
            pl.BlockSpec((tk, hp), lambda i, k: (k, 0)),     # h (matmul operand)
            pl.BlockSpec((tm, hp), lambda i, k: (i, 0)),     # h (row tile, for the diff)
        ],
        out_specs=pl.BlockSpec((tm, hp), lambda i, k: (i, 0)),
        scratch_shapes=[pltpu.VMEM((tm, hp), jnp.float32)],
        compiler_params=pltpu.CompilerParams(
            dimension_semantics=("parallel", "arbitrary"),
            vmem_limit_bytes=32 * 1024 * 1024),
    )(adj, dinv.reshape(n, 1), dinv.reshape(1, n), h, h)
    return out[:, 0]


def structure_attention_scores(x, att_l, att_r, adj_ind, batch_p, lamb):
    k = x.shape[0]
    bcol = batch_p.astype(jnp.float32).reshape(k, 1)
    brow = batch_p.astype(jnp.float32).reshape(1, k)
    kern = partial(_attn_kernel, lamb=float(lamb), slope=0.2)
    return _small_call(kern, 6, jax.ShapeDtypeStruct((k, k), jnp.float32))(
        x, att_l, att_r, adj_ind, bcol, brow)


def readout(h, num_graphs, k_per_graph):
    hp = h.shape[1]
    x3d = h.reshape(num_graphs, k_per_graph, hp)   # graphs are contiguous equal blocks
    kern = partial(_readout_kernel, inv_k=1.0 / float(k_per_graph))
    return _small_call(kern, 1,
                       jax.ShapeDtypeStruct((num_graphs, 2 * hp), jnp.float32))(x3d)


def mlp_head(x1, x2, x3, p, num_classes):
    g = x1.shape[0]
    cp = p["w_lin3"].shape[1]
    kern = partial(_head_kernel, num_classes=num_classes)
    return _small_call(kern, 9, jax.ShapeDtypeStruct((g, cp), jnp.float32))(
        x1, x2, x3,
        p["w_lin1"], p["b_lin1"].reshape(1, -1),
        p["w_lin2"], p["b_lin2"].reshape(1, -1),
        p["w_lin3"], p["b_lin3"].reshape(1, -1))


# ----------------------------------------------------------------------------- JAX glue
def topk_perm(score, nodes_per_graph, k):
    # per-graph top-k (graphs are contiguous, equal-sized blocks) -> global node indices
    g = score.shape[0] // nodes_per_graph
    s = score.reshape(g, nodes_per_graph)
    _, idx = jax.lax.top_k(s, k)                                   # (G, k)
    return (idx + (jnp.arange(g) * nodes_per_graph)[:, None]).reshape(-1)


def sparsemax_rows(z, mask):
    # row-wise sparsemax; masked entries arrive as -1e9 and project to exactly 0
    # TODO(synk): sort-based sparsemax stays in XLA glue (lax.sort has no Mosaic lowering).
    z_sorted = -jnp.sort(-z, axis=-1)                              # descending
    ks = jnp.arange(1, z.shape[-1] + 1, dtype=z.dtype)
    z_cumsum = jnp.cumsum(z_sorted, axis=-1)
    support = (1.0 + ks * z_sorted) > z_cumsum
    k_support = jnp.sum(support.astype(z.dtype), axis=-1, keepdims=True)
    idx = jnp.maximum(k_support.astype(jnp.int32) - 1, 0)
    cs_k = jnp.take_along_axis(z_cumsum, idx, axis=-1)
    tau = (cs_k - 1.0) / k_support
    p = jnp.maximum(z - tau, 0.0)
    return jnp.where(mask, p, 0.0)


def hgpsl_pool(h, adj, batch, nodes_per_graph, k, att_l, att_r, lamb):
    # 1) node information score (gridded kernel) + per-graph top-k selection
    score = node_information_score(adj, h)
    perm = topk_perm(score, nodes_per_graph, k)
    x_p = h[perm]
    batch_p = batch[perm]
    adj_ind = adj[perm][:, perm]
    # 2) dense structure learning among retained nodes (sample=False, sl=True branch)
    # TODO(synk): sample_neighbor=True branch (k-hop neighbour sampling) not implemented.
    z = structure_attention_scores(x_p, att_l, att_r, adj_ind, batch_p, lamb)
    same = batch_p[:, None] == batch_p[None, :]
    adj_new = sparsemax_rows(z, same)                              # sparse_attention=True
    return x_p, adj_new, batch_p


def hgp_sl_forward(x, adj, batch, params, *, nodes_per_graph, num_graphs,
                   pooling_ratio, lamb, num_classes):
    fp = params["w_conv1"].shape[0]
    xp = _pad_cols(x, fp)

    # conv1 + pool1 + readout1
    h = gcn_conv_relu(adj, xp, params["w_conv1"], params["b_conv1"])
    k1 = int(math.ceil(pooling_ratio * nodes_per_graph))
    h, adj1, batch1 = hgpsl_pool(h, adj, batch, nodes_per_graph, k1,
                                 params["att1_l"], params["att1_r"], lamb)
    x1 = readout(h, num_graphs, k1)

    # conv2 + pool2 + readout2
    h = gcn_conv_relu(adj1, h, params["w_conv2"], params["b_conv2"])
    k2 = int(math.ceil(pooling_ratio * k1))
    h, adj2, batch2 = hgpsl_pool(h, adj1, batch1, k1, k2,
                                 params["att2_l"], params["att2_r"], lamb)
    x2 = readout(h, num_graphs, k2)

    # conv3 + readout3
    h = gcn_conv_relu(adj2, h, params["w_conv3"], params["b_conv3"])
    x3 = readout(h, num_graphs, k2)

    # MLP head (relu-sum of readouts, lin1/lin2/lin3, log_softmax over real classes)
    logp = mlp_head(x1, x2, x3, params, num_classes)
    return logp[:, :num_classes]


# ----------------------------------------------------------------------------- params
def init_params(key, num_features, nhid, num_classes):
    ks = jax.random.split(key, 16)
    w = lambda k, shape: jax.random.normal(k, shape, jnp.float32) * 0.1
    return dict(
        w_conv1=w(ks[0], (num_features, nhid)), b_conv1=w(ks[1], (nhid,)),
        w_conv2=w(ks[2], (nhid, nhid)),         b_conv2=w(ks[3], (nhid,)),
        w_conv3=w(ks[4], (nhid, nhid)),         b_conv3=w(ks[5], (nhid,)),
        att1=w(ks[6], (1, 2 * nhid)),           att2=w(ks[7], (1, 2 * nhid)),
        w_lin1=w(ks[8], (2 * nhid, nhid)),      b_lin1=w(ks[9], (nhid,)),
        w_lin2=w(ks[10], (nhid, nhid // 2)),    b_lin2=w(ks[11], (nhid // 2,)),
        w_lin3=w(ks[12], (nhid // 2, num_classes)), b_lin3=w(ks[13], (num_classes,)),
    )


def pad_params(p, num_features, nhid, num_classes):
    """Zero-pad every lane dim to a multiple of 128 so all kernels stay lane-dense."""
    fp = _round_up(num_features, LANE)
    hp = _round_up(nhid, LANE)
    h2p = _round_up(nhid // 2, LANE)
    cp = _round_up(num_classes, LANE)
    q = {}
    q["w_conv1"] = _pad2(p["w_conv1"], fp, hp); q["b_conv1"] = _pad1(p["b_conv1"], hp)
    q["w_conv2"] = _pad2(p["w_conv2"], hp, hp); q["b_conv2"] = _pad1(p["b_conv2"], hp)
    q["w_conv3"] = _pad2(p["w_conv3"], hp, hp); q["b_conv3"] = _pad1(p["b_conv3"], hp)
    for name in ("att1", "att2"):
        att = p[name].astype(jnp.float32)
        q[name + "_l"] = jnp.zeros((hp, 1), jnp.float32).at[:nhid, 0].set(att[0, :nhid])
        q[name + "_r"] = jnp.zeros((1, hp), jnp.float32).at[0, :nhid].set(att[0, nhid:])
    # lin1 consumes the readout concat [max (hp lanes) | mean (hp lanes)]:
    # place the original (2*nhid, nhid) weight rows at lane offsets 0 and hp.
    w1 = jnp.zeros((2 * hp, hp), jnp.float32)
    w1 = w1.at[:nhid, :nhid].set(p["w_lin1"][:nhid].astype(jnp.float32))
    w1 = w1.at[hp:hp + nhid, :nhid].set(p["w_lin1"][nhid:].astype(jnp.float32))
    q["w_lin1"] = w1; q["b_lin1"] = _pad1(p["b_lin1"], hp)
    q["w_lin2"] = _pad2(p["w_lin2"], hp, h2p); q["b_lin2"] = _pad1(p["b_lin2"], h2p)
    q["w_lin3"] = _pad2(p["w_lin3"], h2p, cp); q["b_lin3"] = _pad1(p["b_lin3"], cp)
    return q


# ----------------------------------------------------------------------------- example
if __name__ == "__main__":
    num_features, nhid, num_classes = 8, 32, 4
    pooling_ratio, lamb = 0.5, 1.0
    num_graphs, nodes_per_graph = 2, 8
    n = num_graphs * nodes_per_graph

    key = jax.random.PRNGKey(0)
    k_x, k_p = jax.random.split(key, 2)

    x = jax.random.normal(k_x, (n, num_features), jnp.float32)
    batch = jnp.repeat(jnp.arange(num_graphs), nodes_per_graph)

    # block-diagonal undirected adjacency: ring within each graph plus two chords
    rows, cols = [], []
    for g in range(num_graphs):
        off = g * nodes_per_graph
        for i in range(nodes_per_graph):
            j = (i + 1) % nodes_per_graph
            rows += [off + i, off + j]; cols += [off + j, off + i]
        rows += [off + 0, off + 4, off + 1, off + 5]
        cols += [off + 4, off + 0, off + 5, off + 1]
    adj = jnp.zeros((n, n), jnp.float32).at[jnp.array(rows), jnp.array(cols)].set(1.0)

    params = pad_params(init_params(k_p, num_features, nhid, num_classes),
                        num_features, nhid, num_classes)

    fwd = jax.jit(partial(hgp_sl_forward,
                          nodes_per_graph=nodes_per_graph, num_graphs=num_graphs,
                          pooling_ratio=pooling_ratio, lamb=lamb,
                          num_classes=num_classes))
    out = jax.block_until_ready(fwd(x, adj, batch, params))

    assert out.shape == (num_graphs, num_classes), out.shape
    assert bool(jnp.all(jnp.isfinite(out)))
    print("KERNEL_OK")
</pallas_src>

<mosaic_0001>
module attributes {stable_mosaic.version = 11 : i64} {
  func.func @_gcn_kernel(%arg0: i32, %arg1: i32, %arg2: memref<16x16xf32, #tpu.memory_space<vmem>>, %arg3: memref<16x1xf32, #tpu.memory_space<vmem>>, %arg4: memref<1x16xf32, #tpu.memory_space<vmem>>, %arg5: memref<16x128xf32, #tpu.memory_space<vmem>>, %arg6: memref<128x128xf32, #tpu.memory_space<vmem>>, %arg7: memref<1x128xf32, #tpu.memory_space<vmem>>, %arg8: memref<16x128xf32, #tpu.memory_space<vmem>>, %arg9: memref<16x128xf32, #tpu.memory_space<vmem>>) attributes {dimension_semantics = [#tpu.dimension_semantics<parallel>, #tpu.dimension_semantics<arbitrary>], iteration_bounds = array<i64: 1, 1>, scalar_prefetch = 0 : i64, scratch_operands = 1 : i64, tpu.core_type = #tpu.core_type<tc>, window_params = [{transform_indices = @transform_0, window_bounds = array<i64: 16, 16>}, {transform_indices = @transform_1, window_bounds = array<i64: 16, 1>}, {transform_indices = @transform_2, window_bounds = array<i64: 1, 16>}, {transform_indices = @transform_3, window_bounds = array<i64: 16, 128>}, {pipeline_mode = #tpu.pipeline_mode<synchronous>, transform_indices = @transform_4, window_bounds = array<i64: 128, 128>}, {pipeline_mode = #tpu.pipeline_mode<synchronous>, transform_indices = @transform_5, window_bounds = array<i64: 1, 128>}, {transform_indices = @transform_6, window_bounds = array<i64: 16, 128>}]} {
    %c0_i32 = arith.constant 0 : i32
    %0 = arith.cmpi eq, %arg1, %c0_i32 : i32
    %1 = arith.extui %0 : i1 to i32
    %c0_i32_0 = arith.constant 0 : i32
    %2 = arith.cmpi ne, %1, %c0_i32_0 : i32
    scf.if %2 {
      %cst_18 = arith.constant 0.000000e+00 : f32
      %36 = vector.broadcast %cst_18 : f32 to vector<16x128xf32>
      %c0_19 = arith.constant 0 : index
      %c0_20 = arith.constant 0 : index
      %37 = vector.load %arg9[%c0_19, %c0_20] : memref<16x128xf32, #tpu.memory_space<vmem>>, vector<16x128xf32>
      tpu.vector_store %arg9[%c0_19, %c0_20], %36 {strides = array<i32>} : memref<16x128xf32, #tpu.memory_space<vmem>>, vector<16x128xf32>,
    } else {
    }
    %c16_i32 = arith.constant 16 : i32
    %3 = arith.muli %arg0, %c16_i32 : i32
    %4 = tpu.iota {dimensions = array<i32: 0>} : vector<16x16xi32>
    %5 = vector.broadcast %3 : i32 to vector<16x16xi32>
    %6 = arith.addi %5, %4 : vector<16x16xi32>
    %c16_i32_1 = arith.constant 16 : i32
    %7 = arith.muli %arg1, %c16_i32_1 : i32
    %8 = tpu.iota {dimensions = array<i32: 1>} : vector<16x16xi32>
    %9 = vector.broadcast %7 : i32 to vector<16x16xi32>
    %10 = arith.addi %9, %8 : vector<16x16xi32>
    %c0 = arith.constant 0 : index
    %c0_2 = arith.constant 0 : index
    %11 = vector.load %arg2[%c0, %c0_2] : memref<16x16xf32, #tpu.memory_space<vmem>>, vector<16x16xf32>
    %12 = arith.cmpi eq, %6, %10 : vector<16x16xi32>
    %cst = arith.constant 0.000000e+00 : f32
    %13 = vector.broadcast %cst : f32 to vector<16x16xf32>
    %14 = arith.cmpf oeq, %11, %13 : vector<16x16xf32>
    %15 = arith.andi %12, %14 : vector<16x16xi1>
    %cst_3 = arith.constant 1.000000e+00 : f32
    %cst_4 = arith.constant 0.000000e+00 : f32
    %16 = vector.broadcast %cst_3 : f32 to vector<16x16xf32>
    %17 = vector.broadcast %cst_4 : f32 to vector<16x16xf32>
    %18 = arith.select %15, %16, %17 : vector<16x16xi1>, vector<16x16xf32>
    %19 = arith.addf %11, %18 : vector<16x16xf32>
    %c0_5 = arith.constant 0 : index
    %c0_6 = arith.constant 0 : index
    %20 = vector.load %arg3[%c0_5, %c0_6] : memref<16x1xf32, #tpu.memory_space<vmem>>, vector<16x1xf32>
    %21 = vector.broadcast %20 : vector<16x1xf32> to vector<16x16xf32>
    %22 = arith.mulf %19, %21 : vector<16x16xf32>
    %c0_7 = arith.constant 0 : index
    %c0_8 = arith.constant 0 : index
    %23 = vector.load %arg4[%c0_7, %c0_8] : memref<1x16xf32, #tpu.memory_space<vmem>>, vector<1x16xf32>
    %24 = vector.broadcast %23 : vector<1x16xf32> to vector<16x16xf32>
    %25 = arith.mulf %22, %24 : vector<16x16xf32>
    %c0_9 = arith.constant 0 : index
    %c0_10 = arith.constant 0 : index
    %26 = vector.load %arg9[%c0_9, %c0_10] : memref<16x128xf32, #tpu.memory_space<vmem>>, vector<16x128xf32>
    %27 = arith.truncf %25 : vector<16x16xf32> to vector<16x16xbf16>
    %c0_11 = arith.constant 0 : index
    %c0_12 = arith.constant 0 : index
    %28 = vector.load %arg5[%c0_11, %c0_12] : memref<16x128xf32, #tpu.memory_space<vmem>>, vector<16x128xf32>
    %29 = arith.truncf %28 : vector<16x128xf32> to vector<16x128xbf16>
    %cst_13 = arith.constant dense<0.000000e+00> : vector<16x128xf32>
    %30 = tpu.matmul %27, %29, %cst_13 {dimension_numbers = #tpu.dot_dimension_numbers<[1], [0], [0], [1], [0, 0, 1, 1], [], []>} : vector<16x16xbf16>, vector<16x128xbf16>, vector<16x128xf32> -> vector<16x128xf32>
    %31 = arith.addf %26, %30 : vector<16x128xf32>
    %c0_14 = arith.constant 0 : index
    %c0_15 = arith.constant 0 : index
    %32 = vector.load %arg9[%c0_14, %c0_15] : memref<16x128xf32, #tpu.memory_space<vmem>>, vector<16x128xf32>
    tpu.vector_store %arg9[%c0_14, %c0_15], %31 {strides = array<i32>} : memref<16x128xf32, #tpu.memory_space<vmem>>, vector<16x128xf32>,
    %c0_i32_16 = arith.constant 0 : i32
    %33 = arith.cmpi eq, %arg1, %c0_i32_16 : i32
    %34 = arith.extui %33 : i1 to i32
    %c0_i32_17 = arith.constant 0 : i32
    %35 = arith.cmpi ne, %34, %c0_i32_17 : i32
    scf.if %35 {
      %c0_18 = arith.constant 0 : index
      %c0_19 = arith.constant 0 : index
      %36 = vector.load %arg9[%c0_18, %c0_19] : memref<16x128xf32, #tpu.memory_space<vmem>>, vector<16x128xf32>
      %c0_20 = arith.constant 0 : index
      %c0_21 = arith.constant 0 : index
      %37 = vector.load %arg6[%c0_20, %c0_21] : memref<128x128xf32, #tpu.memory_space<vmem>>, vector<128x128xf32>
      %cst_22 = arith.constant dense<0.000000e+00> : vector<16x128xf32>
      %38 = tpu.matmul %36, %37, %cst_22 {dimension_numbers = #tpu.dot_dimension_numbers<[1], [0], [0], [1], [0, 0, 1, 1], [], []>} : vector<16x128xf32>, vector<128x128xf32>, vector<16x128xf32> -> vector<16x128xf32>
      %c0_23 = arith.constant 0 : index
      %c0_24 = arith.constant 0 : index
      %39 = vector.load %arg7[%c0_23, %c0_24] : memref<1x128xf32, #tpu.memory_space<vmem>>, vector<1x128xf32>
      %40 = vector.broadcast %39 : vector<1x128xf32> to vector<16x128xf32>
      %41 = arith.addf %38, %40 : vector<16x128xf32>
      %cst_25 = arith.constant 0.000000e+00 : f32
      %42 = vector.broadcast %cst_25 : f32 to vector<16x128xf32>
      %43 = arith.maximumf %41, %42 : vector<16x128xf32>
      %c0_26 = arith.constant 0 : index
      %c0_27 = arith.constant 0 : index
      %44 = vector.load %arg8[%c0_26, %c0_27] : memref<16x128xf32, #tpu.memory_space<vmem>>, vector<16x128xf32>
      tpu.vector_store %arg8[%c0_26, %c0_27], %43 {strides = array<i32>} : memref<16x128xf32, #tpu.memory_space<vmem>>, vector<16x128xf32>,
    } else {
    }
    return
  }
  func.func @transform_0(%arg0: i32, %arg1: i32) -> (i32, i32) {
    %c0_i32 = arith.constant 0 : i32
    return %arg0, %arg1 : i32, i32
  }
  func.func @transform_1(%arg0: i32, %arg1: i32) -> (i32, i32) {
    %c0_i32 = arith.constant 0 : i32
    %c0_i32_0 = arith.constant 0 : i32
    return %arg0, %c0_i32 : i32, i32
  }
  func.func @transform_2(%arg0: i32, %arg1: i32) -> (i32, i32) {
    %c0_i32 = arith.constant 0 : i32
    %c0_i32_0 = arith.constant 0 : i32
    return %c0_i32, %arg1 : i32, i32
  }
  func.func @transform_3(%arg0: i32, %arg1: i32) -> (i32, i32) {
    %c0_i32 = arith.constant 0 : i32
    %c0_i32_0 = arith.constant 0 : i32
    return %arg1, %c0_i32 : i32, i32
  }
  func.func @transform_4(%arg0: i32, %arg1: i32) -> (i32, i32) {
    %c0_i32 = arith.constant 0 : i32
    %c0_i32_0 = arith.constant 0 : i32
    %c0_i32_1 = arith.constant 0 : i32
    return %c0_i32, %c0_i32_0 : i32, i32
  }
  func.func @transform_5(%arg0: i32, %arg1: i32) -> (i32, i32) {
    %c0_i32 = arith.constant 0 : i32
    %c0_i32_0 = arith.constant 0 : i32
    %c0_i32_1 = arith.constant 0 : i32
    return %c0_i32, %c0_i32_0 : i32, i32
  }
  func.func @transform_6(%arg0: i32, %arg1: i32) -> (i32, i32) {
    %c0_i32 = arith.constant 0 : i32
    %c0_i32_0 = arith.constant 0 : i32
    return %arg0, %c0_i32 : i32, i32
  }
}

module attributes {stable_mosaic.version = 11 : i64} {
  func.func @_info_kernel(%arg0: i32, %arg1: i32, %arg2: memref<16x16xf32, #tpu.memory_space<vmem>>, %arg3: memref<16x1xf32, #tpu.memory_space<vmem>>, %arg4: memref<1x16xf32, #tpu.memory_space<vmem>>, %arg5: memref<16x128xf32, #tpu.memory_space<vmem>>, %arg6: memref<16x128xf32, #tpu.memory_space<vmem>>, %arg7: memref<16x128xf32, #tpu.memory_space<vmem>>, %arg8: memref<16x128xf32, #tpu.memory_space<vmem>>) attributes {dimension_semantics = [#tpu.dimension_semantics<parallel>, #tpu.dimension_semantics<arbitrary>], iteration_bounds = array<i64: 1, 1>, scalar_prefetch = 0 : i64, scratch_operands = 1 : i64, tpu.core_type = #tpu.core_type<tc>, window_params = [{transform_indices = @transform_0, window_bounds = array<i64: 16, 16>}, {transform_indices = @transform_1, window_bounds = array<i64: 16, 1>}, {transform_indices = @transform_2, window_bounds = array<i64: 1, 16>}, {transform_indices = @transform_3, window_bounds = array<i64: 16, 128>}, {transform_indices = @transform_4, window_bounds = array<i64: 16, 128>}, {transform_indices = @transform_5, window_bounds = array<i64: 16, 128>}]} {
    %c0_i32 = arith.constant 0 : i32
    %0 = arith.cmpi eq, %arg1, %c0_i32 : i32
    %1 = arith.extui %0 : i1 to i32
    %c0_i32_0 = arith.constant 0 : i32
    %2 = arith.cmpi ne, %1, %c0_i32_0 : i32
    scf.if %2 {
      %cst_16 = arith.constant 0.000000e+00 : f32
      %31 = vector.broadcast %cst_16 : f32 to vector<16x128xf32>
      %c0_17 = arith.constant 0 : index
      %c0_18 = arith.constant 0 : index
      %32 = vector.load %arg8[%c0_17, %c0_18] : memref<16x128xf32, #tpu.memory_space<vmem>>, vector<16x128xf32>
      tpu.vector_store %arg8[%c0_17, %c0_18], %31 {strides = array<i32>} : memref<16x128xf32, #tpu.memory_space<vmem>>, vector<16x128xf32>,
    } else {
    }
    %c16_i32 = arith.constant 16 : i32
    %3 = arith.muli %arg0, %c16_i32 : i32
    %4 = tpu.iota {dimensions = array<i32: 0>} : vector<16x16xi32>
    %5 = vector.broadcast %3 : i32 to vector<16x16xi32>
    %6 = arith.addi %5, %4 : vector<16x16xi32>
    %c16_i32_1 = arith.constant 16 : i32
    %7 = arith.muli %arg1, %c16_i32_1 : i32
    %8 = tpu.iota {dimensions = array<i32: 1>} : vector<16x16xi32>
    %9 = vector.broadcast %7 : i32 to vector<16x16xi32>
    %10 = arith.addi %9, %8 : vector<16x16xi32>
    %11 = arith.cmpi eq, %6, %10 : vector<16x16xi32>
    %c0 = arith.constant 0 : index
    %c0_2 = arith.constant 0 : index
    %12 = vector.load %arg2[%c0, %c0_2] : memref<16x16xf32, #tpu.memory_space<vmem>>, vector<16x16xf32>
    %cst = arith.constant 0.000000e+00 : f32
    %13 = vector.broadcast %cst : f32 to vector<16x16xf32>
    %14 = arith.select %11, %13, %12 : vector<16x16xi1>, vector<16x16xf32>
    %c0_3 = arith.constant 0 : index
    %c0_4 = arith.constant 0 : index
    %15 = vector.load %arg3[%c0_3, %c0_4] : memref<16x1xf32, #tpu.memory_space<vmem>>, vector<16x1xf32>
    %16 = vector.broadcast %15 : vector<16x1xf32> to vector<16x16xf32>
    %17 = arith.mulf %14, %16 : vector<16x16xf32>
    %c0_5 = arith.constant 0 : index
    %c0_6 = arith.constant 0 : index
    %18 = vector.load %arg4[%c0_5, %c0_6] : memref<1x16xf32, #tpu.memory_space<vmem>>, vector<1x16xf32>
    %19 = vector.broadcast %18 : vector<1x16xf32> to vector<16x16xf32>
    %20 = arith.mulf %17, %19 : vector<16x16xf32>
    %c0_7 = arith.constant 0 : index
    %c0_8 = arith.constant 0 : index
    %21 = vector.load %arg8[%c0_7, %c0_8] : memref<16x128xf32, #tpu.memory_space<vmem>>, vector<16x128xf32>
    %22 = arith.truncf %20 : vector<16x16xf32> to vector<16x16xbf16>
    %c0_9 = arith.constant 0 : index
    %c0_10 = arith.constant 0 : index
    %23 = vector.load %arg5[%c0_9, %c0_10] : memref<16x128xf32, #tpu.memory_space<vmem>>, vector<16x128xf32>
    %24 = arith.truncf %23 : vector<16x128xf32> to vector<16x128xbf16>
    %cst_11 = arith.constant dense<0.000000e+00> : vector<16x128xf32>
    %25 = tpu.matmul %22, %24, %cst_11 {dimension_numbers = #tpu.dot_dimension_numbers<[1], [0], [0], [1], [0, 0, 1, 1], [], []>} : vector<16x16xbf16>, vector<16x128xbf16>, vector<16x128xf32> -> vector<16x128xf32>
    %26 = arith.addf %21, %25 : vector<16x128xf32>
    %c0_12 = arith.constant 0 : index
    %c0_13 = arith.constant 0 : index
    %27 = vector.load %arg8[%c0_12, %c0_13] : memref<16x128xf32, #tpu.memory_space<vmem>>, vector<16x128xf32>
    tpu.vector_store %arg8[%c0_12, %c0_13], %26 {strides = array<i32>} : memref<16x128xf32, #tpu.memory_space<vmem>>, vector<16x128xf32>,
    %c0_i32_14 = arith.constant 0 : i32
    %28 = arith.cmpi eq, %arg1, %c0_i32_14 : i32
    %29 = arith.extui %28 : i1 to i32
    %c0_i32_15 = arith.constant 0 : i32
    %30 = arith.cmpi ne, %29, %c0_i32_15 : i32
    scf.if %30 {
      %c0_16 = arith.constant 0 : index
      %c0_17 = arith.constant 0 : index
      %31 = vector.load %arg8[%c0_16, %c0_17] : memref<16x128xf32, #tpu.memory_space<vmem>>, vector<16x128xf32>
      %c0_18 = arith.constant 0 : index
      %c0_19 = arith.constant 0 : index
      %32 = vector.load %arg6[%c0_18, %c0_19] : memref<16x128xf32, #tpu.memory_space<vmem>>, vector<16x128xf32>
      %33 = arith.subf %31, %32 : vector<16x128xf32>
      %34 = math.absf %33 : vector<16x128xf32>
      %cst_20 = arith.constant dense<0.000000e+00> : vector<16xf32>
      %35 = vector.multi_reduction <add>, %34, %cst_20 [1] : vector<16x128xf32> to vector<16xf32>
      %36 = vector.shape_cast %35 : vector<16xf32> to vector<16x1xf32>
      %37 = vector.shape_cast %36 : vector<16x1xf32> to vector<16x1xf32>
      %38 = vector.broadcast %37 : vector<16x1xf32> to vector<16x128xf32>
      %c0_21 = arith.constant 0 : index
      %c0_22 = arith.constant 0 : index
      %39 = vector.load %arg7[%c0_21, %c0_22] : memref<16x128xf32, #tpu.memory_space<vmem>>, vector<16x128xf32>
      tpu.vector_store %arg7[%c0_21, %c0_22], %38 {strides = array<i32>} : memref<16x128xf32, #tpu.memory_space<vmem>>, vector<16x128xf32>,
    } else {
    }
    return
  }
  func.func @transform_0(%arg0: i32, %arg1: i32) -> (i32, i32) {
    %c0_i32 = arith.constant 0 : i32
    return %arg0, %arg1 : i32, i32
  }
  func.func @transform_1(%arg0: i32, %arg1: i32) -> (i32, i32) {
    %c0_i32 = arith.constant 0 : i32
    %c0_i32_0 = arith.constant 0 : i32
    return %arg0, %c0_i32 : i32, i32
  }
  func.func @transform_2(%arg0: i32, %arg1: i32) -> (i32, i32) {
    %c0_i32 = arith.constant 0 : i32
    %c0_i32_0 = arith.constant 0 : i32
    return %c0_i32, %arg1 : i32, i32
  }
  func.func @transform_3(%arg0: i32, %arg1: i32) -> (i32, i32) {
    %c0_i32 = arith.constant 0 : i32
    %c0_i32_0 = arith.constant 0 : i32
    return %arg1, %c0_i32 : i32, i32
  }
  func.func @transform_4(%arg0: i32, %arg1: i32) -> (i32, i32) {
    %c0_i32 = arith.constant 0 : i32
    %c0_i32_0 = arith.constant 0 : i32
    return %arg0, %c0_i32 : i32, i32
  }
  func.func @transform_5(%arg0: i32, %arg1: i32) -> (i32, i32) {
    %c0_i32 = arith.constant 0 : i32
    %c0_i32_0 = arith.constant 0 : i32
    return %arg0, %c0_i32 : i32, i32
  }
}

module attributes {stable_mosaic.version = 11 : i64} {
  func.func @_attn_kernel(%arg0: memref<8x128xf32, #tpu.memory_space<vmem>>, %arg1: memref<128x1xf32, #tpu.memory_space<vmem>>, %arg2: memref<1x128xf32, #tpu.memory_space<vmem>>, %arg3: memref<8x8xf32, #tpu.memory_space<vmem>>, %arg4: memref<8x1xf32, #tpu.memory_space<vmem>>, %arg5: memref<1x8xf32, #tpu.memory_space<vmem>>, %arg6: memref<8x8xf32, #tpu.memory_space<vmem>>) attributes {dimension_semantics = [], scalar_prefetch = 0 : i64, scratch_operands = 0 : i64, tpu.core_type = #tpu.core_type<tc>} {
    %c0 = arith.constant 0 : index
    %c0_0 = arith.constant 0 : index
    %0 = vector.load %arg0[%c0, %c0_0] : memref<8x128xf32, #tpu.memory_space<vmem>>, vector<8x128xf32>
    %c0_1 = arith.constant 0 : index
    %c0_2 = arith.constant 0 : index
    %1 = vector.load %arg1[%c0_1, %c0_2] : memref<128x1xf32, #tpu.memory_space<vmem>>, vector<128x1xf32>
    %cst = arith.constant dense<0.000000e+00> : vector<8x1xf32>
    %2 = tpu.matmul %0, %1, %cst {dimension_numbers = #tpu.dot_dimension_numbers<[1], [0], [0], [1], [0, 0, 1, 1], [], []>} : vector<8x128xf32>, vector<128x1xf32>, vector<8x1xf32> -> vector<8x1xf32>
    %c0_3 = arith.constant 0 : index
    %c0_4 = arith.constant 0 : index
    %3 = vector.load %arg2[%c0_3, %c0_4] : memref<1x128xf32, #tpu.memory_space<vmem>>, vector<1x128xf32>
    %c0_5 = arith.constant 0 : index
    %c0_6 = arith.constant 0 : index
    %4 = vector.load %arg0[%c0_5, %c0_6] : memref<8x128xf32, #tpu.memory_space<vmem>>, vector<8x128xf32>
    "tpu.trace_start"() <{level = 10 : i32, message = "od,kd->ok"}> : () -> ()
    %cst_7 = arith.constant dense<0.000000e+00> : vector<1x8xf32>
    %5 = tpu.matmul %3, %4, %cst_7 {dimension_numbers = #tpu.dot_dimension_numbers<[1], [1], [0], [0], [0, 0, 1, 0], [], []>} : vector<1x128xf32>, vector<8x128xf32>, vector<1x8xf32> -> vector<1x8xf32>
    "tpu.trace_stop"() : () -> ()
    %6 = vector.broadcast %2 : vector<8x1xf32> to vector<8x8xf32>
    %7 = vector.broadcast %5 : vector<1x8xf32> to vector<8x8xf32>
    %8 = arith.addf %6, %7 : vector<8x8xf32>
    %cst_8 = arith.constant 0.000000e+00 : f32
    %9 = vector.broadcast %cst_8 : f32 to vector<8x8xf32>
    %10 = arith.cmpf ogt, %8, %9 : vector<8x8xf32>
    %cst_9 = arith.constant 2.000000e-01 : f32
    %11 = vector.broadcast %cst_9 : f32 to vector<8x8xf32>
    %12 = arith.mulf %11, %8 : vector<8x8xf32>
    %13 = arith.select %10, %8, %12 : vector<8x8xi1>, vector<8x8xf32>
    %c0_10 = arith.constant 0 : index
    %c0_11 = arith.constant 0 : index
    %14 = vector.load %arg3[%c0_10, %c0_11] : memref<8x8xf32, #tpu.memory_space<vmem>>, vector<8x8xf32>
    %cst_12 = arith.constant 1.000000e+00 : f32
    %15 = vector.broadcast %cst_12 : f32 to vector<8x8xf32>
    %16 = arith.mulf %15, %14 : vector<8x8xf32>
    %17 = arith.addf %13, %16 : vector<8x8xf32>
    %c0_13 = arith.constant 0 : index
    %c0_14 = arith.constant 0 : index
    %18 = vector.load %arg4[%c0_13, %c0_14] : memref<8x1xf32, #tpu.memory_space<vmem>>, vector<8x1xf32>
    %c0_15 = arith.constant 0 : index
    %c0_16 = arith.constant 0 : index
    %19 = vector.load %arg5[%c0_15, %c0_16] : memref<1x8xf32, #tpu.memory_space<vmem>>, vector<1x8xf32>
    %20 = vector.broadcast %18 : vector<8x1xf32> to vector<8x8xf32>
    %21 = vector.broadcast %19 : vector<1x8xf32> to vector<8x8xf32>
    %22 = arith.cmpf oeq, %20, %21 : vector<8x8xf32>
    %cst_17 = arith.constant -1.000000e+09 : f32
    %23 = vector.broadcast %cst_17 : f32 to vector<8x8xf32>
    %24 = arith.select %22, %17, %23 : vector<8x8xi1>, vector<8x8xf32>
    %c0_18 = arith.constant 0 : index
    %c0_19 = arith.constant 0 : index
    %25 = vector.load %arg6[%c0_18, %c0_19] : memref<8x8xf32, #tpu.memory_space<vmem>>, vector<8x8xf32>
    tpu.vector_store %arg6[%c0_18, %c0_19], %24 {strides = array<i32>} : memref<8x8xf32, #tpu.memory_space<vmem>>, vector<8x8xf32>,
    return
  }
}

module attributes {stable_mosaic.version = 11 : i64} {
  func.func @_info_kernel(%arg0: i32, %arg1: i32, %arg2: memref<8x8xf32, #tpu.memory_space<vmem>>, %arg3: memref<8x1xf32, #tpu.memory_space<vmem>>, %arg4: memref<1x8xf32, #tpu.memory_space<vmem>>, %arg5: memref<8x128xf32, #tpu.memory_space<vmem>>, %arg6: memref<8x128xf32, #tpu.memory_space<vmem>>, %arg7: memref<8x128xf32, #tpu.memory_space<vmem>>, %arg8: memref<8x128xf32, #tpu.memory_space<vmem>>) attributes {dimension_semantics = [#tpu.dimension_semantics<parallel>, #tpu.dimension_semantics<arbitrary>], iteration_bounds = array<i64: 1, 1>, scalar_prefetch = 0 : i64, scratch_operands = 1 : i64, tpu.core_type = #tpu.core_type<tc>, window_params = [{transform_indices = @transform_0, window_bounds = array<i64: 8, 8>}, {transform_indices = @transform_1, window_bounds = array<i64: 8, 1>}, {transform_indices = @transform_2, window_bounds = array<i64: 1, 8>}, {transform_indices = @transform_3, window_bounds = array<i64: 8, 128>}, {transform_indices = @transform_4, window_bounds = array<i64: 8, 128>}, {transform_indices = @transform_5, window_bounds = array<i64: 8, 128>}]} {
    %c0_i32 = arith.constant 0 : i32
    %0 = arith.cmpi eq, %arg1, %c0_i32 : i32
    %1 = arith.extui %0 : i1 to i32
    %c0_i32_0 = arith.constant 0 : i32
    %2 = arith.cmpi ne, %1, %c0_i32_0 : i32
    scf.if %2 {
      %cst_16 = arith.constant 0.000000e+00 : f32
      %31 = vector.broadcast %cst_16 : f32 to vector<8x128xf32>
      %c0_17 = arith.constant 0 : index
      %c0_18 = arith.constant 0 : index
      %32 = vector.load %arg8[%c0_17, %c0_18] : memref<8x128xf32, #tpu.memory_space<vmem>>, vector<8x128xf32>
      tpu.vector_store %arg8[%c0_17, %c0_18], %31 {strides = array<i32>} : memref<8x128xf32, #tpu.memory_space<vmem>>, vector<8x128xf32>,
    } else {
    }
    %c8_i32 = arith.constant 8 : i32
    %3 = arith.muli %arg0, %c8_i32 : i32
    %4 = tpu.iota {dimensions = array<i32: 0>} : vector<8x8xi32>
    %5 = vector.broadcast %3 : i32 to vector<8x8xi32>
    %6 = arith.addi %5, %4 : vector<8x8xi32>
    %c8_i32_1 = arith.constant 8 : i32
    %7 = arith.muli %arg1, %c8_i32_1 : i32
    %8 = tpu.iota {dimensions = array<i32: 1>} : vector<8x8xi32>
    %9 = vector.broadcast %7 : i32 to vector<8x8xi32>
    %10 = arith.addi %9, %8 : vector<8x8xi32>
    %11 = arith.cmpi eq, %6, %10 : vector<8x8xi32>
    %c0 = arith.constant 0 : index
    %c0_2 = arith.constant 0 : index
    %12 = vector.load %arg2[%c0, %c0_2] : memref<8x8xf32, #tpu.memory_space<vmem>>, vector<8x8xf32>
    %cst = arith.constant 0.000000e+00 : f32
    %13 = vector.broadcast %cst : f32 to vector<8x8xf32>
    %14 = arith.select %11, %13, %12 : vector<8x8xi1>, vector<8x8xf32>
    %c0_3 = arith.constant 0 : index
    %c0_4 = arith.constant 0 : index
    %15 = vector.load %arg3[%c0_3, %c0_4] : memref<8x1xf32, #tpu.memory_space<vmem>>, vector<8x1xf32>
    %16 = vector.broadcast %15 : vector<8x1xf32> to vector<8x8xf32>
    %17 = arith.mulf %14, %16 : vector<8x8xf32>
    %c0_5 = arith.constant 0 : index
    %c0_6 = arith.constant 0 : index
    %18 = vector.load %arg4[%c0_5, %c0_6] : memref<1x8xf32, #tpu.memory_space<vmem>>, vector<1x8xf32>
    %19 = vector.broadcast %18 : vector<1x8xf32> to vector<8x8xf32>
    %20 = arith.mulf %17, %19 : vector<8x8xf32>
    %c0_7 = arith.constant 0 : index
    %c0_8 = arith.constant 0 : index
    %21 = vector.load %arg8[%c0_7, %c0_8] : memref<8x128xf32, #tpu.memory_space<vmem>>, vector<8x128xf32>
    %22 = arith.truncf %20 : vector<8x8xf32> to vector<8x8xbf16>
    %c0_9 = arith.constant 0 : index
    %c0_10 = arith.constant 0 : index
    %23 = vector.load %arg5[%c0_9, %c0_10] : memref<8x128xf32, #tpu.memory_space<vmem>>, vector<8x128xf32>
    %24 = arith.truncf %23 : vector<8x128xf32> to vector<8x128xbf16>
    %cst_11 = arith.constant dense<0.000000e+00> : vector<8x128xf32>
    %25 = tpu.matmul %22, %24, %cst_11 {dimension_numbers = #tpu.dot_dimension_numbers<[1], [0], [0], [1], [0, 0, 1, 1], [], []>} : vector<8x8xbf16>, vector<8x128xbf16>, vector<8x128xf32> -> vector<8x128xf32>
    %26 = arith.addf %21, %25 : vector<8x128xf32>
    %c0_12 = arith.constant 0 : index
    %c0_13 = arith.constant 0 : index
    %27 = vector.load %arg8[%c0_12, %c0_13] : memref<8x128xf32, #tpu.memory_space<vmem>>, vector<8x128xf32>
    tpu.vector_store %arg8[%c0_12, %c0_13], %26 {strides = array<i32>} : memref<8x128xf32, #tpu.memory_space<vmem>>, vector<8x128xf32>,
    %c0_i32_14 = arith.constant 0 : i32
    %28 = arith.cmpi eq, %arg1, %c0_i32_14 : i32
    %29 = arith.extui %28 : i1 to i32
    %c0_i32_15 = arith.constant 0 : i32
    %30 = arith.cmpi ne, %29, %c0_i32_15 : i32
    scf.if %30 {
      %c0_16 = arith.constant 0 : index
      %c0_17 = arith.constant 0 : index
      %31 = vector.load %arg8[%c0_16, %c0_17] : memref<8x128xf32, #tpu.memory_space<vmem>>, vector<8x128xf32>
      %c0_18 = arith.constant 0 : index
      %c0_19 = arith.constant 0 : index
      %32 = vector.load %arg6[%c0_18, %c0_19] : memref<8x128xf32, #tpu.memory_space<vmem>>, vector<8x128xf32>
      %33 = arith.subf %31, %32 : vector<8x128xf32>
      %34 = math.absf %33 : vector<8x128xf32>
      %cst_20 = arith.constant dense<0.000000e+00> : vector<8xf32>
      %35 = vector.multi_reduction <add>, %34, %cst_20 [1] : vector<8x128xf32> to vector<8xf32>
      %36 = vector.shape_cast %35 : vector<8xf32> to vector<8x1xf32>
      %37 = vector.shape_cast %36 : vector<8x1xf32> to vector<8x1xf32>
      %38 = vector.broadcast %37 : vector<8x1xf32> to vector<8x128xf32>
      %c0_21 = arith.constant 0 : index
      %c0_22 = arith.constant 0 : index
      %39 = vector.load %arg7[%c0_21, %c0_22] : memref<8x128xf32, #tpu.memory_space<vmem>>, vector<8x128xf32>
      tpu.vector_store %arg7[%c0_21, %c0_22], %38 {strides = array<i32>} : memref<8x128xf32, #tpu.memory_space<vmem>>, vector<8x128xf32>,
    } else {
    }
    return
  }
  func.func @transform_0(%arg0: i32, %arg1: i32) -> (i32, i32) {
    %c0_i32 = arith.constant 0 : i32
    return %arg0, %arg1 : i32, i32
  }
  func.func @transform_1(%arg0: i32, %arg1: i32) -> (i32, i32) {
    %c0_i32 = arith.constant 0 : i32
    %c0_i32_0 = arith.constant 0 : i32
    return %arg0, %c0_i32 : i32, i32
  }
  func.func @transform_2(%arg0: i32, %arg1: i32) -> (i32, i32) {
    %c0_i32 = arith.constant 0 : i32
    %c0_i32_0 = arith.constant 0 : i32
    return %c0_i32, %arg1 : i32, i32
  }
  func.func @transform_3(%arg0: i32, %arg1: i32) -> (i32, i32) {
    %c0_i32 = arith.constant 0 : i32
    %c0_i32_0 = arith.constant 0 : i32
    return %arg1, %c0_i32 : i32, i32
  }
  func.func @transform_4(%arg0: i32, %arg1: i32) -> (i32, i32) {
    %c0_i32 = arith.constant 0 : i32
    %c0_i32_0 = arith.constant 0 : i32
    return %arg0, %c0_i32 : i32, i32
  }
  func.func @transform_5(%arg0: i32, %arg1: i32) -> (i32, i32) {
    %c0_i32 = arith.constant 0 : i32
    %c0_i32_0 = arith.constant 0 : i32
    return %arg0, %c0_i32 : i32, i32
  }
}

module attributes {stable_mosaic.version = 11 : i64} {
  func.func @_gcn_kernel(%arg0: i32, %arg1: i32, %arg2: memref<8x8xf32, #tpu.memory_space<vmem>>, %arg3: memref<8x1xf32, #tpu.memory_space<vmem>>, %arg4: memref<1x8xf32, #tpu.memory_space<vmem>>, %arg5: memref<8x128xf32, #tpu.memory_space<vmem>>, %arg6: memref<128x128xf32, #tpu.memory_space<vmem>>, %arg7: memref<1x128xf32, #tpu.memory_space<vmem>>, %arg8: memref<8x128xf32, #tpu.memory_space<vmem>>, %arg9: memref<8x128xf32, #tpu.memory_space<vmem>>) attributes {dimension_semantics = [#tpu.dimension_semantics<parallel>, #tpu.dimension_semantics<arbitrary>], iteration_bounds = array<i64: 1, 1>, scalar_prefetch = 0 : i64, scratch_operands = 1 : i64, tpu.core_type = #tpu.core_type<tc>, window_params = [{transform_indices = @transform_0, window_bounds = array<i64: 8, 8>}, {transform_indices = @transform_1, window_bounds = array<i64: 8, 1>}, {transform_indices = @transform_2, window_bounds = array<i64: 1, 8>}, {transform_indices = @transform_3, window_bounds = array<i64: 8, 128>}, {pipeline_mode = #tpu.pipeline_mode<synchronous>, transform_indices = @transform_4, window_bounds = array<i64: 128, 128>}, {pipeline_mode = #tpu.pipeline_mode<synchronous>, transform_indices = @transform_5, window_bounds = array<i64: 1, 128>}, {transform_indices = @transform_6, window_bounds = array<i64: 8, 128>}]} {
    %c0_i32 = arith.constant 0 : i32
    %0 = arith.cmpi eq, %arg1, %c0_i32 : i32
    %1 = arith.extui %0 : i1 to i32
    %c0_i32_0 = arith.constant 0 : i32
    %2 = arith.cmpi ne, %1, %c0_i32_0 : i32
    scf.if %2 {
      %cst_18 = arith.constant 0.000000e+00 : f32
      %36 = vector.broadcast %cst_18 : f32 to vector<8x128xf32>
      %c0_19 = arith.constant 0 : index
      %c0_20 = arith.constant 0 : index
      %37 = vector.load %arg9[%c0_19, %c0_20] : memref<8x128xf32, #tpu.memory_space<vmem>>, vector<8x128xf32>
      tpu.vector_store %arg9[%c0_19, %c0_20], %36 {strides = array<i32>} : memref<8x128xf32, #tpu.memory_space<vmem>>, vector<8x128xf32>,
    } else {
    }
    %c8_i32 = arith.constant 8 : i32
    %3 = arith.muli %arg0, %c8_i32 : i32
    %4 = tpu.iota {dimensions = array<i32: 0>} : vector<8x8xi32>
    %5 = vector.broadcast %3 : i32 to vector<8x8xi32>
    %6 = arith.addi %5, %4 : vector<8x8xi32>
    %c8_i32_1 = arith.constant 8 : i32
    %7 = arith.muli %arg1, %c8_i32_1 : i32
    %8 = tpu.iota {dimensions = array<i32: 1>} : vector<8x8xi32>
    %9 = vector.broadcast %7 : i32 to vector<8x8xi32>
    %10 = arith.addi %9, %8 : vector<8x8xi32>
    %c0 = arith.constant 0 : index
    %c0_2 = arith.constant 0 : index
    %11 = vector.load %arg2[%c0, %c0_2] : memref<8x8xf32, #tpu.memory_space<vmem>>, vector<8x8xf32>
    %12 = arith.cmpi eq, %6, %10 : vector<8x8xi32>
    %cst = arith.constant 0.000000e+00 : f32
    %13 = vector.broadcast %cst : f32 to vector<8x8xf32>
    %14 = arith.cmpf oeq, %11, %13 : vector<8x8xf32>
    %15 = arith.andi %12, %14 : vector<8x8xi1>
    %cst_3 = arith.constant 1.000000e+00 : f32
    %cst_4 = arith.constant 0.000000e+00 : f32
    %16 = vector.broadcast %cst_3 : f32 to vector<8x8xf32>
    %17 = vector.broadcast %cst_4 : f32 to vector<8x8xf32>
    %18 = arith.select %15, %16, %17 : vector<8x8xi1>, vector<8x8xf32>
    %19 = arith.addf %11, %18 : vector<8x8xf32>
    %c0_5 = arith.constant 0 : index
    %c0_6 = arith.constant 0 : index
    %20 = vector.load %arg3[%c0_5, %c0_6] : memref<8x1xf32, #tpu.memory_space<vmem>>, vector<8x1xf32>
    %21 = vector.broadcast %20 : vector<8x1xf32> to vector<8x8xf32>
    %22 = arith.mulf %19, %21 : vector<8x8xf32>
    %c0_7 = arith.constant 0 : index
    %c0_8 = arith.constant 0 : index
    %23 = vector.load %arg4[%c0_7, %c0_8] : memref<1x8xf32, #tpu.memory_space<vmem>>, vector<1x8xf32>
    %24 = vector.broadcast %23 : vector<1x8xf32> to vector<8x8xf32>
    %25 = arith.mulf %22, %24 : vector<8x8xf32>
    %c0_9 = arith.constant 0 : index
    %c0_10 = arith.constant 0 : index
    %26 = vector.load %arg9[%c0_9, %c0_10] : memref<8x128xf32, #tpu.memory_space<vmem>>, vector<8x128xf32>
    %27 = arith.truncf %25 : vector<8x8xf32> to vector<8x8xbf16>
    %c0_11 = arith.constant 0 : index
    %c0_12 = arith.constant 0 : index
    %28 = vector.load %arg5[%c0_11, %c0_12] : memref<8x128xf32, #tpu.memory_space<vmem>>, vector<8x128xf32>
    %29 = arith.truncf %28 : vector<8x128xf32> to vector<8x128xbf16>
    %cst_13 = arith.constant dense<0.000000e+00> : vector<8x128xf32>
    %30 = tpu.matmul %27, %29, %cst_13 {dimension_numbers = #tpu.dot_dimension_numbers<[1], [0], [0], [1], [0, 0, 1, 1], [], []>} : vector<8x8xbf16>, vector<8x128xbf16>, vector<8x128xf32> -> vector<8x128xf32>
    %31 = arith.addf %26, %30 : vector<8x128xf32>
    %c0_14 = arith.constant 0 : index
    %c0_15 = arith.constant 0 : index
    %32 = vector.load %arg9[%c0_14, %c0_15] : memref<8x128xf32, #tpu.memory_space<vmem>>, vector<8x128xf32>
    tpu.vector_store %arg9[%c0_14, %c0_15], %31 {strides = array<i32>} : memref<8x128xf32, #tpu.memory_space<vmem>>, vector<8x128xf32>,
    %c0_i32_16 = arith.constant 0 : i32
    %33 = arith.cmpi eq, %arg1, %c0_i32_16 : i32
    %34 = arith.extui %33 : i1 to i32
    %c0_i32_17 = arith.constant 0 : i32
    %35 = arith.cmpi ne, %34, %c0_i32_17 : i32
    scf.if %35 {
      %c0_18 = arith.constant 0 : index
      %c0_19 = arith.constant 0 : index
      %36 = vector.load %arg9[%c0_18, %c0_19] : memref<8x128xf32, #tpu.memory_space<vmem>>, vector<8x128xf32>
      %c0_20 = arith.constant 0 : index
      %c0_21 = arith.constant 0 : index
      %37 = vector.load %arg6[%c0_20, %c0_21] : memref<128x128xf32, #tpu.memory_space<vmem>>, vector<128x128xf32>
      %cst_22 = arith.constant dense<0.000000e+00> : vector<8x128xf32>
      %38 = tpu.matmul %36, %37, %cst_22 {dimension_numbers = #tpu.dot_dimension_numbers<[1], [0], [0], [1], [0, 0, 1, 1], [], []>} : vector<8x128xf32>, vector<128x128xf32>, vector<8x128xf32> -> vector<8x128xf32>
      %c0_23 = arith.constant 0 : index
      %c0_24 = arith.constant 0 : index
      %39 = vector.load %arg7[%c0_23, %c0_24] : memref<1x128xf32, #tpu.memory_space<vmem>>, vector<1x128xf32>
      %40 = vector.broadcast %39 : vector<1x128xf32> to vector<8x128xf32>
      %41 = arith.addf %38, %40 : vector<8x128xf32>
      %cst_25 = arith.constant 0.000000e+00 : f32
      %42 = vector.broadcast %cst_25 : f32 to vector<8x128xf32>
      %43 = arith.maximumf %41, %42 : vector<8x128xf32>
      %c0_26 = arith.constant 0 : index
      %c0_27 = arith.constant 0 : index
      %44 = vector.load %arg8[%c0_26, %c0_27] : memref<8x128xf32, #tpu.memory_space<vmem>>, vector<8x128xf32>
      tpu.vector_store %arg8[%c0_26, %c0_27], %43 {strides = array<i32>} : memref<8x128xf32, #tpu.memory_space<vmem>>, vector<8x128xf32>,
    } else {
    }
    return
  }
  func.func @transform_0(%arg0: i32, %arg1: i32) -> (i32, i32) {
    %c0_i32 = arith.constant 0 : i32
    return %arg0, %arg1 : i32, i32
  }
  func.func @transform_1(%arg0: i32, %arg1: i32) -> (i32, i32) {
    %c0_i32 = arith.constant 0 : i32
    %c0_i32_0 = arith.constant 0 : i32
    return %arg0, %c0_i32 : i32, i32
  }
  func.func @transform_2(%arg0: i32, %arg1: i32) -> (i32, i32) {
    %c0_i32 = arith.constant 0 : i32
    %c0_i32_0 = arith.constant 0 : i32
    return %c0_i32, %arg1 : i32, i32
  }
  func.func @transform_3(%arg0: i32, %arg1: i32) -> (i32, i32) {
    %c0_i32 = arith.constant 0 : i32
    %c0_i32_0 = arith.constant 0 : i32
    return %arg1, %c0_i32 : i32, i32
  }
  func.func @transform_4(%arg0: i32, %arg1: i32) -> (i32, i32) {
    %c0_i32 = arith.constant 0 : i32
    %c0_i32_0 = arith.constant 0 : i32
    %c0_i32_1 = arith.constant 0 : i32
    return %c0_i32, %c0_i32_0 : i32, i32
  }
  func.func @transform_5(%arg0: i32, %arg1: i32) -> (i32, i32) {
    %c0_i32 = arith.constant 0 : i32
    %c0_i32_0 = arith.constant 0 : i32
    %c0_i32_1 = arith.constant 0 : i32
    return %c0_i32, %c0_i32_0 : i32, i32
  }
  func.func @transform_6(%arg0: i32, %arg1: i32) -> (i32, i32) {
    %c0_i32 = arith.constant 0 : i32
    %c0_i32_0 = arith.constant 0 : i32
    return %arg0, %c0_i32 : i32, i32
  }
}

module attributes {stable_mosaic.version = 11 : i64} {
  func.func @_attn_kernel(%arg0: memref<4x128xf32, #tpu.memory_space<vmem>>, %arg1: memref<128x1xf32, #tpu.memory_space<vmem>>, %arg2: memref<1x128xf32, #tpu.memory_space<vmem>>, %arg3: memref<4x4xf32, #tpu.memory_space<vmem>>, %arg4: memref<4x1xf32, #tpu.memory_space<vmem>>, %arg5: memref<1x4xf32, #tpu.memory_space<vmem>>, %arg6: memref<4x4xf32, #tpu.memory_space<vmem>>) attributes {dimension_semantics = [], scalar_prefetch = 0 : i64, scratch_operands = 0 : i64, tpu.core_type = #tpu.core_type<tc>} {
    %c0 = arith.constant 0 : index
    %c0_0 = arith.constant 0 : index
    %0 = vector.load %arg0[%c0, %c0_0] : memref<4x128xf32, #tpu.memory_space<vmem>>, vector<4x128xf32>
    %c0_1 = arith.constant 0 : index
    %c0_2 = arith.constant 0 : index
    %1 = vector.load %arg1[%c0_1, %c0_2] : memref<128x1xf32, #tpu.memory_space<vmem>>, vector<128x1xf32>
    %cst = arith.constant dense<0.000000e+00> : vector<4x1xf32>
    %2 = tpu.matmul %0, %1, %cst {dimension_numbers = #tpu.dot_dimension_numbers<[1], [0], [0], [1], [0, 0, 1, 1], [], []>} : vector<4x128xf32>, vector<128x1xf32>, vector<4x1xf32> -> vector<4x1xf32>
    %c0_3 = arith.constant 0 : index
    %c0_4 = arith.constant 0 : index
    %3 = vector.load %arg2[%c0_3, %c0_4] : memref<1x128xf32, #tpu.memory_space<vmem>>, vector<1x128xf32>
    %c0_5 = arith.constant 0 : index
    %c0_6 = arith.constant 0 : index
    %4 = vector.load %arg0[%c0_5, %c0_6] : memref<4x128xf32, #tpu.memory_space<vmem>>, vector<4x128xf32>
    "tpu.trace_start"() <{level = 10 : i32, message = "od,kd->ok"}> : () -> ()
    %cst_7 = arith.constant dense<0.000000e+00> : vector<1x4xf32>
    %5 = tpu.matmul %3, %4, %cst_7 {dimension_numbers = #tpu.dot_dimension_numbers<[1], [1], [0], [0], [0, 0, 1, 0], [], []>} : vector<1x128xf32>, vector<4x128xf32>, vector<1x4xf32> -> vector<1x4xf32>
    "tpu.trace_stop"() : () -> ()
    %6 = vector.broadcast %2 : vector<4x1xf32> to vector<4x4xf32>
    %7 = vector.broadcast %5 : vector<1x4xf32> to vector<4x4xf32>
    %8 = arith.addf %6, %7 : vector<4x4xf32>
    %cst_8 = arith.constant 0.000000e+00 : f32
    %9 = vector.broadcast %cst_8 : f32 to vector<4x4xf32>
    %10 = arith.cmpf ogt, %8, %9 : vector<4x4xf32>
    %cst_9 = arith.constant 2.000000e-01 : f32
    %11 = vector.broadcast %cst_9 : f32 to vector<4x4xf32>
    %12 = arith.mulf %11, %8 : vector<4x4xf32>
    %13 = arith.select %10, %8, %12 : vector<4x4xi1>, vector<4x4xf32>
    %c0_10 = arith.constant 0 : index
    %c0_11 = arith.constant 0 : index
    %14 = vector.load %arg3[%c0_10, %c0_11] : memref<4x4xf32, #tpu.memory_space<vmem>>, vector<4x4xf32>
    %cst_12 = arith.constant 1.000000e+00 : f32
    %15 = vector.broadcast %cst_12 : f32 to vector<4x4xf32>
    %16 = arith.mulf %15, %14 : vector<4x4xf32>
    %17 = arith.addf %13, %16 : vector<4x4xf32>
    %c0_13 = arith.constant 0 : index
    %c0_14 = arith.constant 0 : index
    %18 = vector.load %arg4[%c0_13, %c0_14] : memref<4x1xf32, #tpu.memory_space<vmem>>, vector<4x1xf32>
    %c0_15 = arith.constant 0 : index
    %c0_16 = arith.constant 0 : index
    %19 = vector.load %arg5[%c0_15, %c0_16] : memref<1x4xf32, #tpu.memory_space<vmem>>, vector<1x4xf32>
    %20 = vector.broadcast %18 : vector<4x1xf32> to vector<4x4xf32>
    %21 = vector.broadcast %19 : vector<1x4xf32> to vector<4x4xf32>
    %22 = arith.cmpf oeq, %20, %21 : vector<4x4xf32>
    %cst_17 = arith.constant -1.000000e+09 : f32
    %23 = vector.broadcast %cst_17 : f32 to vector<4x4xf32>
    %24 = arith.select %22, %17, %23 : vector<4x4xi1>, vector<4x4xf32>
    %c0_18 = arith.constant 0 : index
    %c0_19 = arith.constant 0 : index
    %25 = vector.load %arg6[%c0_18, %c0_19] : memref<4x4xf32, #tpu.memory_space<vmem>>, vector<4x4xf32>
    tpu.vector_store %arg6[%c0_18, %c0_19], %24 {strides = array<i32>} : memref<4x4xf32, #tpu.memory_space<vmem>>, vector<4x4xf32>,
    return
  }
}

module attributes {stable_mosaic.version = 11 : i64} {
  func.func @_gcn_kernel(%arg0: i32, %arg1: i32, %arg2: memref<4x4xf32, #tpu.memory_space<vmem>>, %arg3: memref<4x1xf32, #tpu.memory_space<vmem>>, %arg4: memref<1x4xf32, #tpu.memory_space<vmem>>, %arg5: memref<4x128xf32, #tpu.memory_space<vmem>>, %arg6: memref<128x128xf32, #tpu.memory_space<vmem>>, %arg7: memref<1x128xf32, #tpu.memory_space<vmem>>, %arg8: memref<4x128xf32, #tpu.memory_space<vmem>>, %arg9: memref<4x128xf32, #tpu.memory_space<vmem>>) attributes {dimension_semantics = [#tpu.dimension_semantics<parallel>, #tpu.dimension_semantics<arbitrary>], iteration_bounds = array<i64: 1, 1>, scalar_prefetch = 0 : i64, scratch_operands = 1 : i64, tpu.core_type = #tpu.core_type<tc>, window_params = [{transform_indices = @transform_0, window_bounds = array<i64: 4, 4>}, {transform_indices = @transform_1, window_bounds = array<i64: 4, 1>}, {transform_indices = @transform_2, window_bounds = array<i64: 1, 4>}, {transform_indices = @transform_3, window_bounds = array<i64: 4, 128>}, {pipeline_mode = #tpu.pipeline_mode<synchronous>, transform_indices = @transform_4, window_bounds = array<i64: 128, 128>}, {pipeline_mode = #tpu.pipeline_mode<synchronous>, transform_indices = @transform_5, window_bounds = array<i64: 1, 128>}, {transform_indices = @transform_6, window_bounds = array<i64: 4, 128>}]} {
    %c0_i32 = arith.constant 0 : i32
    %0 = arith.cmpi eq, %arg1, %c0_i32 : i32
    %1 = arith.extui %0 : i1 to i32
    %c0_i32_0 = arith.constant 0 : i32
    %2 = arith.cmpi ne, %1, %c0_i32_0 : i32
    scf.if %2 {
      %cst_18 = arith.constant 0.000000e+00 : f32
      %36 = vector.broadcast %cst_18 : f32 to vector<4x128xf32>
      %c0_19 = arith.constant 0 : index
      %c0_20 = arith.constant 0 : index
      %37 = vector.load %arg9[%c0_19, %c0_20] : memref<4x128xf32, #tpu.memory_space<vmem>>, vector<4x128xf32>
      tpu.vector_store %arg9[%c0_19, %c0_20], %36 {strides = array<i32>} : memref<4x128xf32, #tpu.memory_space<vmem>>, vector<4x128xf32>,
    } else {
    }
    %c4_i32 = arith.constant 4 : i32
    %3 = arith.muli %arg0, %c4_i32 : i32
    %4 = tpu.iota {dimensions = array<i32: 0>} : vector<4x4xi32>
    %5 = vector.broadcast %3 : i32 to vector<4x4xi32>
    %6 = arith.addi %5, %4 : vector<4x4xi32>
    %c4_i32_1 = arith.constant 4 : i32
    %7 = arith.muli %arg1, %c4_i32_1 : i32
    %8 = tpu.iota {dimensions = array<i32: 1>} : vector<4x4xi32>
    %9 = vector.broadcast %7 : i32 to vector<4x4xi32>
    %10 = arith.addi %9, %8 : vector<4x4xi32>
    %c0 = arith.constant 0 : index
    %c0_2 = arith.constant 0 : index
    %11 = vector.load %arg2[%c0, %c0_2] : memref<4x4xf32, #tpu.memory_space<vmem>>, vector<4x4xf32>
    %12 = arith.cmpi eq, %6, %10 : vector<4x4xi32>
    %cst = arith.constant 0.000000e+00 : f32
    %13 = vector.broadcast %cst : f32 to vector<4x4xf32>
    %14 = arith.cmpf oeq, %11, %13 : vector<4x4xf32>
    %15 = arith.andi %12, %14 : vector<4x4xi1>
    %cst_3 = arith.constant 1.000000e+00 : f32
    %cst_4 = arith.constant 0.000000e+00 : f32
    %16 = vector.broadcast %cst_3 : f32 to vector<4x4xf32>
    %17 = vector.broadcast %cst_4 : f32 to vector<4x4xf32>
    %18 = arith.select %15, %16, %17 : vector<4x4xi1>, vector<4x4xf32>
    %19 = arith.addf %11, %18 : vector<4x4xf32>
    %c0_5 = arith.constant 0 : index
    %c0_6 = arith.constant 0 : index
    %20 = vector.load %arg3[%c0_5, %c0_6] : memref<4x1xf32, #tpu.memory_space<vmem>>, vector<4x1xf32>
    %21 = vector.broadcast %20 : vector<4x1xf32> to vector<4x4xf32>
    %22 = arith.mulf %19, %21 : vector<4x4xf32>
    %c0_7 = arith.constant 0 : index
    %c0_8 = arith.constant 0 : index
    %23 = vector.load %arg4[%c0_7, %c0_8] : memref<1x4xf32, #tpu.memory_space<vmem>>, vector<1x4xf32>
    %24 = vector.broadcast %23 : vector<1x4xf32> to vector<4x4xf32>
    %25 = arith.mulf %22, %24 : vector<4x4xf32>
    %c0_9 = arith.constant 0 : index
    %c0_10 = arith.constant 0 : index
    %26 = vector.load %arg9[%c0_9, %c0_10] : memref<4x128xf32, #tpu.memory_space<vmem>>, vector<4x128xf32>
    %27 = arith.truncf %25 : vector<4x4xf32> to vector<4x4xbf16>
    %c0_11 = arith.constant 0 : index
    %c0_12 = arith.constant 0 : index
    %28 = vector.load %arg5[%c0_11, %c0_12] : memref<4x128xf32, #tpu.memory_space<vmem>>, vector<4x128xf32>
    %29 = arith.truncf %28 : vector<4x128xf32> to vector<4x128xbf16>
    %cst_13 = arith.constant dense<0.000000e+00> : vector<4x128xf32>
    %30 = tpu.matmul %27, %29, %cst_13 {dimension_numbers = #tpu.dot_dimension_numbers<[1], [0], [0], [1], [0, 0, 1, 1], [], []>} : vector<4x4xbf16>, vector<4x128xbf16>, vector<4x128xf32> -> vector<4x128xf32>
    %31 = arith.addf %26, %30 : vector<4x128xf32>
    %c0_14 = arith.constant 0 : index
    %c0_15 = arith.constant 0 : index
    %32 = vector.load %arg9[%c0_14, %c0_15] : memref<4x128xf32, #tpu.memory_space<vmem>>, vector<4x128xf32>
    tpu.vector_store %arg9[%c0_14, %c0_15], %31 {strides = array<i32>} : memref<4x128xf32, #tpu.memory_space<vmem>>, vector<4x128xf32>,
    %c0_i32_16 = arith.constant 0 : i32
    %33 = arith.cmpi eq, %arg1, %c0_i32_16 : i32
    %34 = arith.extui %33 : i1 to i32
    %c0_i32_17 = arith.constant 0 : i32
    %35 = arith.cmpi ne, %34, %c0_i32_17 : i32
    scf.if %35 {
      %c0_18 = arith.constant 0 : index
      %c0_19 = arith.constant 0 : index
      %36 = vector.load %arg9[%c0_18, %c0_19] : memref<4x128xf32, #tpu.memory_space<vmem>>, vector<4x128xf32>
      %c0_20 = arith.constant 0 : index
      %c0_21 = arith.constant 0 : index
      %37 = vector.load %arg6[%c0_20, %c0_21] : memref<128x128xf32, #tpu.memory_space<vmem>>, vector<128x128xf32>
      %cst_22 = arith.constant dense<0.000000e+00> : vector<4x128xf32>
      %38 = tpu.matmul %36, %37, %cst_22 {dimension_numbers = #tpu.dot_dimension_numbers<[1], [0], [0], [1], [0, 0, 1, 1], [], []>} : vector<4x128xf32>, vector<128x128xf32>, vector<4x128xf32> -> vector<4x128xf32>
      %c0_23 = arith.constant 0 : index
      %c0_24 = arith.constant 0 : index
      %39 = vector.load %arg7[%c0_23, %c0_24] : memref<1x128xf32, #tpu.memory_space<vmem>>, vector<1x128xf32>
      %40 = vector.broadcast %39 : vector<1x128xf32> to vector<4x128xf32>
      %41 = arith.addf %38, %40 : vector<4x128xf32>
      %cst_25 = arith.constant 0.000000e+00 : f32
      %42 = vector.broadcast %cst_25 : f32 to vector<4x128xf32>
      %43 = arith.maximumf %41, %42 : vector<4x128xf32>
      %c0_26 = arith.constant 0 : index
      %c0_27 = arith.constant 0 : index
      %44 = vector.load %arg8[%c0_26, %c0_27] : memref<4x128xf32, #tpu.memory_space<vmem>>, vector<4x128xf32>
      tpu.vector_store %arg8[%c0_26, %c0_27], %43 {strides = array<i32>} : memref<4x128xf32, #tpu.memory_space<vmem>>, vector<4x128xf32>,
    } else {
    }
    return
  }
  func.func @transform_0(%arg0: i32, %arg1: i32) -> (i32, i32) {
    %c0_i32 = arith.constant 0 : i32
    return %arg0, %arg1 : i32, i32
  }
  func.func @transform_1(%arg0: i32, %arg1: i32) -> (i32, i32) {
    %c0_i32 = arith.constant 0 : i32
    %c0_i32_0 = arith.constant 0 : i32
    return %arg0, %c0_i32 : i32, i32
  }
  func.func @transform_2(%arg0: i32, %arg1: i32) -> (i32, i32) {
    %c0_i32 = arith.constant 0 : i32
    %c0_i32_0 = arith.constant 0 : i32
    return %c0_i32, %arg1 : i32, i32
  }
  func.func @transform_3(%arg0: i32, %arg1: i32) -> (i32, i32) {
    %c0_i32 = arith.constant 0 : i32
    %c0_i32_0 = arith.constant 0 : i32
    return %arg1, %c0_i32 : i32, i32
  }
  func.func @transform_4(%arg0: i32, %arg1: i32) -> (i32, i32) {
    %c0_i32 = arith.constant 0 : i32
    %c0_i32_0 = arith.constant 0 : i32
    %c0_i32_1 = arith.constant 0 : i32
    return %c0_i32, %c0_i32_0 : i32, i32
  }
  func.func @transform_5(%arg0: i32, %arg1: i32) -> (i32, i32) {
    %c0_i32 = arith.constant 0 : i32
    %c0_i32_0 = arith.constant 0 : i32
    %c0_i32_1 = arith.constant 0 : i32
    return %c0_i32, %c0_i32_0 : i32, i32
  }
  func.func @transform_6(%arg0: i32, %arg1: i32) -> (i32, i32) {
    %c0_i32 = arith.constant 0 : i32
    %c0_i32_0 = arith.constant 0 : i32
    return %arg0, %c0_i32 : i32, i32
  }
}

module attributes {stable_mosaic.version = 11 : i64} {
  func.func @_readout_kernel(%arg0: memref<2x4x128xf32, #tpu.memory_space<vmem>>, %arg1: memref<2x256xf32, #tpu.memory_space<vmem>>) attributes {dimension_semantics = [], scalar_prefetch = 0 : i64, scratch_operands = 0 : i64, tpu.core_type = #tpu.core_type<tc>} {
    %c0 = arith.constant 0 : index
    %c0_0 = arith.constant 0 : index
    %c0_1 = arith.constant 0 : index
    %0 = vector.load %arg0[%c0, %c0_0, %c0_1] : memref<2x4x128xf32, #tpu.memory_space<vmem>>, vector<2x4x128xf32>
    %cst = arith.constant dense<0xFF800000> : vector<2x128xf32>
    %1 = vector.multi_reduction <maximumf>, %0, %cst [1] : vector<2x4x128xf32> to vector<2x128xf32>
    %cst_2 = arith.constant dense<0.000000e+00> : vector<2x128xf32>
    %2 = vector.multi_reduction <add>, %0, %cst_2 [1] : vector<2x4x128xf32> to vector<2x128xf32>
    %cst_3 = arith.constant 2.500000e-01 : f32
    %3 = vector.broadcast %cst_3 : f32 to vector<2x128xf32>
    %4 = arith.mulf %2, %3 : vector<2x128xf32>
    %5 = tpu.concatenate %1, %4 in 1 : vector<2x128xf32>, vector<2x128xf32> -> vector<2x256xf32>
    %c0_4 = arith.constant 0 : index
    %c0_5 = arith.constant 0 : index
    %6 = vector.load %arg1[%c0_4, %c0_5] : memref<2x256xf32, #tpu.memory_space<vmem>>, vector<2x256xf32>
    tpu.vector_store %arg1[%c0_4, %c0_5], %5 {strides = array<i32>} : memref<2x256xf32, #tpu.memory_space<vmem>>, vector<2x256xf32>,
    return
  }
}

module attributes {stable_mosaic.version = 11 : i64} {
  func.func @_readout_kernel(%arg0: memref<2x2x128xf32, #tpu.memory_space<vmem>>, %arg1: memref<2x256xf32, #tpu.memory_space<vmem>>) attributes {dimension_semantics = [], scalar_prefetch = 0 : i64, scratch_operands = 0 : i64, tpu.core_type = #tpu.core_type<tc>} {
    %c0 = arith.constant 0 : index
    %c0_0 = arith.constant 0 : index
    %c0_1 = arith.constant 0 : index
    %0 = vector.load %arg0[%c0, %c0_0, %c0_1] : memref<2x2x128xf32, #tpu.memory_space<vmem>>, vector<2x2x128xf32>
    %cst = arith.constant dense<0xFF800000> : vector<2x128xf32>
    %1 = vector.multi_reduction <maximumf>, %0, %cst [1] : vector<2x2x128xf32> to vector<2x128xf32>
    %cst_2 = arith.constant dense<0.000000e+00> : vector<2x128xf32>
    %2 = vector.multi_reduction <add>, %0, %cst_2 [1] : vector<2x2x128xf32> to vector<2x128xf32>
    %cst_3 = arith.constant 5.000000e-01 : f32
    %3 = vector.broadcast %cst_3 : f32 to vector<2x128xf32>
    %4 = arith.mulf %2, %3 : vector<2x128xf32>
    %5 = tpu.concatenate %1, %4 in 1 : vector<2x128xf32>, vector<2x128xf32> -> vector<2x256xf32>
    %c0_4 = arith.constant 0 : index
    %c0_5 = arith.constant 0 : index
    %6 = vector.load %arg1[%c0_4, %c0_5] : memref<2x256xf32, #tpu.memory_space<vmem>>, vector<2x256xf32>
    tpu.vector_store %arg1[%c0_4, %c0_5], %5 {strides = array<i32>} : memref<2x256xf32, #tpu.memory_space<vmem>>, vector<2x256xf32>,
    return
  }
}

module attributes {stable_mosaic.version = 11 : i64} {
  func.func @_head_kernel(%arg0: memref<2x256xf32, #tpu.memory_space<vmem>>, %arg1: memref<2x256xf32, #tpu.memory_space<vmem>>, %arg2: memref<2x256xf32, #tpu.memory_space<vmem>>, %arg3: memref<256x128xf32, #tpu.memory_space<vmem>>, %arg4: memref<1x128xf32, #tpu.memory_space<vmem>>, %arg5: memref<128x128xf32, #tpu.memory_space<vmem>>, %arg6: memref<1x128xf32, #tpu.memory_space<vmem>>, %arg7: memref<128x128xf32, #tpu.memory_space<vmem>>, %arg8: memref<1x128xf32, #tpu.memory_space<vmem>>, %arg9: memref<2x128xf32, #tpu.memory_space<vmem>>) attributes {dimension_semantics = [], scalar_prefetch = 0 : i64, scratch_operands = 0 : i64, tpu.core_type = #tpu.core_type<tc>} {
    %c0 = arith.constant 0 : index
    %c0_0 = arith.constant 0 : index
    %0 = vector.load %arg0[%c0, %c0_0] : memref<2x256xf32, #tpu.memory_space<vmem>>, vector<2x256xf32>
    %cst = arith.constant 0.000000e+00 : f32
    %1 = vector.broadcast %cst : f32 to vector<2x256xf32>
    %2 = arith.maximumf %0, %1 : vector<2x256xf32>
    %c0_1 = arith.constant 0 : index
    %c0_2 = arith.constant 0 : index
    %3 = vector.load %arg1[%c0_1, %c0_2] : memref<2x256xf32, #tpu.memory_space<vmem>>, vector<2x256xf32>
    %cst_3 = arith.constant 0.000000e+00 : f32
    %4 = vector.broadcast %cst_3 : f32 to vector<2x256xf32>
    %5 = arith.maximumf %3, %4 : vector<2x256xf32>
    %6 = arith.addf %2, %5 : vector<2x256xf32>
    %c0_4 = arith.constant 0 : index
    %c0_5 = arith.constant 0 : index
    %7 = vector.load %arg2[%c0_4, %c0_5] : memref<2x256xf32, #tpu.memory_space<vmem>>, vector<2x256xf32>
    %cst_6 = arith.constant 0.000000e+00 : f32
    %8 = vector.broadcast %cst_6 : f32 to vector<2x256xf32>
    %9 = arith.maximumf %7, %8 : vector<2x256xf32>
    %10 = arith.addf %6, %9 : vector<2x256xf32>
    %c0_7 = arith.constant 0 : index
    %c0_8 = arith.constant 0 : index
    %11 = vector.load %arg3[%c0_7, %c0_8] : memref<256x128xf32, #tpu.memory_space<vmem>>, vector<256x128xf32>
    %cst_9 = arith.constant dense<0.000000e+00> : vector<2x128xf32>
    %12 = tpu.matmul %10, %11, %cst_9 {dimension_numbers = #tpu.dot_dimension_numbers<[1], [0], [0], [1], [0, 0, 1, 1], [], []>} : vector<2x256xf32>, vector<256x128xf32>, vector<2x128xf32> -> vector<2x128xf32>
    %c0_10 = arith.constant 0 : index
    %c0_11 = arith.constant 0 : index
    %13 = vector.load %arg4[%c0_10, %c0_11] : memref<1x128xf32, #tpu.memory_space<vmem>>, vector<1x128xf32>
    %14 = vector.broadcast %13 : vector<1x128xf32> to vector<2x128xf32>
    %15 = arith.addf %12, %14 : vector<2x128xf32>
    %cst_12 = arith.constant 0.000000e+00 : f32
    %16 = vector.broadcast %cst_12 : f32 to vector<2x128xf32>
    %17 = arith.maximumf %15, %16 : vector<2x128xf32>
    %c0_13 = arith.constant 0 : index
    %c0_14 = arith.constant 0 : index
    %18 = vector.load %arg5[%c0_13, %c0_14] : memref<128x128xf32, #tpu.memory_space<vmem>>, vector<128x128xf32>
    %cst_15 = arith.constant dense<0.000000e+00> : vector<2x128xf32>
    %19 = tpu.matmul %17, %18, %cst_15 {dimension_numbers = #tpu.dot_dimension_numbers<[1], [0], [0], [1], [0, 0, 1, 1], [], []>} : vector<2x128xf32>, vector<128x128xf32>, vector<2x128xf32> -> vector<2x128xf32>
    %c0_16 = arith.constant 0 : index
    %c0_17 = arith.constant 0 : index
    %20 = vector.load %arg6[%c0_16, %c0_17] : memref<1x128xf32, #tpu.memory_space<vmem>>, vector<1x128xf32>
    %21 = vector.broadcast %20 : vector<1x128xf32> to vector<2x128xf32>
    %22 = arith.addf %19, %21 : vector<2x128xf32>
    %cst_18 = arith.constant 0.000000e+00 : f32
    %23 = vector.broadcast %cst_18 : f32 to vector<2x128xf32>
    %24 = arith.maximumf %22, %23 : vector<2x128xf32>
    %c0_19 = arith.constant 0 : index
    %c0_20 = arith.constant 0 : index
    %25 = vector.load %arg7[%c0_19, %c0_20] : memref<128x128xf32, #tpu.memory_space<vmem>>, vector<128x128xf32>
    %cst_21 = arith.constant dense<0.000000e+00> : vector<2x128xf32>
    %26 = tpu.matmul %24, %25, %cst_21 {dimension_numbers = #tpu.dot_dimension_numbers<[1], [0], [0], [1], [0, 0, 1, 1], [], []>} : vector<2x128xf32>, vector<128x128xf32>, vector<2x128xf32> -> vector<2x128xf32>
    %c0_22 = arith.constant 0 : index
    %c0_23 = arith.constant 0 : index
    %27 = vector.load %arg8[%c0_22, %c0_23] : memref<1x128xf32, #tpu.memory_space<vmem>>, vector<1x128xf32>
    %28 = vector.broadcast %27 : vector<1x128xf32> to vector<2x128xf32>
    %29 = arith.addf %26, %28 : vector<2x128xf32>
    %30 = tpu.iota {dimensions = array<i32: 1>} : vector<2x128xi32>
    %c4_i32 = arith.constant 4 : i32
    %31 = vector.broadcast %c4_i32 : i32 to vector<2x128xi32>
    %32 = arith.cmpi slt, %30, %31 : vector<2x128xi32>
    %cst_24 = arith.constant -1.000000e+30 : f32
    %33 = vector.broadcast %cst_24 : f32 to vector<2x128xf32>
    %34 = arith.select %32, %29, %33 : vector<2x128xi1>, vector<2x128xf32>
    %cst_25 = arith.constant dense<0xFF800000> : vector<2xf32>
    %35 = vector.multi_reduction <maximumf>, %34, %cst_25 [1] : vector<2x128xf32> to vector<2xf32>
    %36 = vector.shape_cast %35 : vector<2xf32> to vector<2x1xf32>
    %37 = vector.broadcast %36 : vector<2x1xf32> to vector<2x128xf32>
    %38 = arith.subf %34, %37 : vector<2x128xf32>
    %39 = math.exp %38 : vector<2x128xf32>
    %cst_26 = arith.constant 0.000000e+00 : f32
    %40 = vector.broadcast %cst_26 : f32 to vector<2x128xf32>
    %41 = arith.select %32, %39, %40 : vector<2x128xi1>, vector<2x128xf32>
    %cst_27 = arith.constant dense<0.000000e+00> : vector<2xf32>
    %42 = vector.multi_reduction <add>, %41, %cst_27 [1] : vector<2x128xf32> to vector<2xf32>
    %43 = vector.shape_cast %42 : vector<2xf32> to vector<2x1xf32>
    %44 = math.log %43 : vector<2x1xf32>
    %45 = vector.broadcast %44 : vector<2x1xf32> to vector<2x128xf32>
    %46 = arith.subf %38, %45 : vector<2x128xf32>
    %c0_28 = arith.constant 0 : index
    %c0_29 = arith.constant 0 : index
    %47 = vector.load %arg9[%c0_28, %c0_29] : memref<2x128xf32, #tpu.memory_space<vmem>>, vector<2x128xf32>
    tpu.vector_store %arg9[%c0_28, %c0_29], %46 {strides = array<i32>} : memref<2x128xf32, #tpu.memory_space<vmem>>, vector<2x128xf32>,
    return
  }
}

</mosaic_0001>

<llo_original>
// kernel: squeeze.2
$region0: #{squeeze.2}
  %s0 = inlined_call_operand.vmem [shape: f32[16], index: 0, kind: input, shape index: {}]
  %s1 = inlined_call_operand.vmem [shape: f32[2,8], index: 1, kind: output, shape index: {}]
  $region1: #{squeeze.2} parent=0
    #allocation0 [shape = 'u8[4096]{0}', space=vmem, size = 0x1000, scoped, tag = 'scoped mem for output reshape']
    #allocation1 [shape = 'u8[4096]{0}', space=vmem, size = 0x1000, scoped, tag = 'scoped mem for input reshape']
    %s3 = sshll.u32 1, 1
    %s4 = ssub.s32 %s3, 1
    %v5 = vld [vmem:[%s0] sm:%s4]
    %6 = vst [vmem:[#allocation1] sm:%s4] %v5
    %v7 = vld [vmem:[#allocation1] sm:$0x1]
    %vm8 = vcmask 64512
    %9 = vst.msk [vmem:[#allocation0] sm:$0x1] %vm8, %v7
    %v10 = vld [vmem:[#allocation1] sm:$0x1]
    %11 = vrot.lane.b32.xlu0 %v10, 120
    %v12 = vpop.permute.xlu0 %11
    %vm13 = vcmask 64512
    %s14 = scalar_lea.vmem [#allocation0], 1
    %15 = vst.msk [vmem:[%s14] sm:$0x1] %vm13, %v12
    %s17 = sshll.u32 1, 2
    %s18 = ssub.s32 %s17, 1
    %v20 = vld [vmem:[#allocation0] sm:%s18]
    %s21 = sshll.u32 1, 2
    %s22 = ssub.s32 %s21, 1
    %23 = vst [vmem:[%s1] sm:%s22] %v20

// kernel: neg.4
$region0: #{neg.4}
  #allocation0 [shape = 's32[1]{0}', space=sflag, size = 0x4, scoped, tag = 'scoped memory for neg.4']
  %s0 = inlined_call_operand.vmem [shape: f32[8,8], index: 0, kind: input, shape index: {}]
  %s1 = inlined_call_operand.vmem [shape: f32[8,8], index: 1, kind: output, shape index: {}]
  %v2 = vld [vmem:[%s0] sm:$0xff]
  %3 = xla_tuple %v2
  %4 = xla_tuple %3
  %v5 = vxor.u32 %v2, 2147483648
  %6 = xla_tuple %v5
  %7 = vst [vmem:[%s1] sm:$0xff] %v5

// kernel: hgp_sl_forward.12
$region0: #{hgp_sl_forward.12}
  #allocation0 [shape = 'u32[]', space=smem, size = 0x4, offset = 0x4, fixed_abs, tag = 'smem constant byte address 0x4 - core index']
  #allocation1 [shape = 'u32[144,128]{1,0:T(1,128)}', space=vmem, size = 0x12000, scoped, tag = 'internal scratch']
  #allocation2 [shape = 'f32[16,128]{1,0:T(8,128)}', space=vmem, size = 0x2000, scoped, tag = 'scratch operand']
  %s0 = inlined_call_operand.vmem [shape: f32[16,16], index: 0, kind: input, shape index: {}]
  %s1 = inlined_call_operand.vmem [shape: f32[16,1], index: 1, kind: input, shape index: {}]
  %s2 = inlined_call_operand.vmem [shape: f32[1,16], index: 2, kind: input, shape index: {}]
  %s3 = inlined_call_operand.vmem [shape: f32[16,128], index: 3, kind: input, shape index: {}, may-alias: {3,4}]
  %s4 = inlined_call_operand.vmem [shape: f32[16,128], index: 4, kind: input, shape index: {}, may-alias: {3,4}]
  %s5 = inlined_call_operand.vmem [shape: f32[16,128], index: 5, kind: output, shape index: {}]
  %s6 = sld [smem:[#allocation0]]
  $region38: #{hgp_sl_forward.12} parent=0
    _
  %s8 = ssub.s32 1, %s6
  %s9 = scalar_select 0, %s8, %s6
  // Predicated region
  $region2: #{hgp_sl_forward.12} parent=0 // pred_check
    _
  $region3: #{hgp_sl_forward.12} parent=0 // pred_check_branch
    %11 = sbr.rel (0) target = $region5
  $region4: #{hgp_sl_forward.12} parent=0 // pred_region
    _
  $region5: #{hgp_sl_forward.12} parent=0 // pred_fallthru
    _
  // Predicated region
  $region6: #{hgp_sl_forward.12} parent=0 // pred_check
    _
  $region7: #{hgp_sl_forward.12} parent=0 // pred_check_branch
    %13 = sbr.rel (0) target = $region9
  $region8: #{hgp_sl_forward.12} parent=0 // pred_region
    _
  $region9: #{hgp_sl_forward.12} parent=0 // pred_fallthru
    _
  // Predicated region
  $region10: #{hgp_sl_forward.12} parent=0 // pred_check
    _
  $region11: #{hgp_sl_forward.12} parent=0 // pred_check_branch
    %15 = sbr.rel (0) target = $region13
  $region12: #{hgp_sl_forward.12} parent=0 // pred_region
    _
  $region13: #{hgp_sl_forward.12} parent=0 // pred_fallthru
    _
  // Predicated region
  $region14: #{hgp_sl_forward.12} parent=0 // pred_check
    _
  $region15: #{hgp_sl_forward.12} parent=0 // pred_check_branch
    %17 = sbr.rel (0) target = $region17
  $region16: #{hgp_sl_forward.12} parent=0 // pred_region
    _
  $region17: #{hgp_sl_forward.12} parent=0 // pred_fallthru
    _
  // Predicated region
  $region18: #{hgp_sl_forward.12} parent=0 // pred_check
    _
  $region19: #{hgp_sl_forward.12} parent=0 // pred_check_branch
    %19 = sbr.rel (0) target = $region21
  $region20: #{hgp_sl_forward.12} parent=0 // pred_region
    _
  $region21: #{hgp_sl_forward.12} parent=0 // pred_fallthru
    _
  %p21 = scmp.eq.s32.totalorder 0, 0
  // Predicated region
  $region22: #{hgp_sl_forward.12} parent=0 // pred_check
    %p22 = pneg %p21
  $region23: #{hgp_sl_forward.12} parent=0 // pred_check_branch
    %24 = sbr.rel (%p22) target = $region25
  $region24: #{hgp_sl_forward.12} parent=0 // pred_region
    %25 = vst [vmem:[#allocation2] sm:$0xff] 0.0
    %26 = vst [vmem:[#allocation2 + $0x8] sm:$0xff] 0.0
  $region25: #{hgp_sl_forward.12} parent=0 // pred_fallthru
    _
  %s27 = smul.u32 0, 16
  %v28 = vlaneseq
  %v29 = vshrl.u32 %v28, 7
  %v30 = vadd.s32 %v29, 8
  %v31 = vstv %s27
  %v32 = vadd.s32 %v31, %v29
  %v33 = vadd.s32 %v31, %v30
  %s34 = smul.u32 0, 16
  %v35 = vlaneseq
  %v36 = vand.u32 %v35, 127
  %v37 = vstv %s34
  %v38 = vadd.s32 %v37, %v36
  %vm39 = vcmp.eq.s32.totalorder %v32, %v38
  %vm40 = vcmp.eq.s32.totalorder %v33, %v38
  %v41 = vld [vmem:[%s0] sm:$0xff]
  %v42 = vld [vmem:[%s0 + $0x8] sm:$0xff]
  %v43 = vsel %vm39, 0.0, %v41
  %v44 = vsel %vm40, 0.0, %v42
  %v45 = vld [vmem:[%s1] sm:$0xff]
  %v46 = vld [vmem:[%s1 + $0x8] sm:$0xff]
  %48 = vset.pattern.permute.xlu0 0
  %49 = vperm.xlu0 %48, %v45
  %v50 = vpop.permute.xlu0 %49
  %53 = vset.pattern.permute.xlu0 0
  %54 = vperm.xlu0 %53, %v46
  %v55 = vpop.permute.xlu0 %54
  %v57 = vmul.f32 %v43, %v50
  %v58 = vmul.f32 %v44, %v55
  %v59 = vld [vmem:[%s2] sm:$0x1]
  %v61 = vlaneseq
  %v62 = vshrl.u32 %v61, 7
  %v63 = vsub.s32 0, %v62
  %v64 = vrot.slane %v59, %v63
  %v66 = vmul.f32 %v57, %v64
  %v67 = vmul.f32 %v58, %v64
  %v68 = vld [vmem:[#allocation2] sm:$0xff]
  %v69 = vld [vmem:[#allocation2 + $0x8] sm:$0xff]
  %v70 = vpack.c.bf16 %v67, %v66
  %v71 = vld [vmem:[%s3] sm:$0xff]
  %v72 = vld [vmem:[%s3 + $0x8] sm:$0xff]
  %v73 = vpack.c.bf16 %v72, %v71
  %vm74 = vcmask 130048
  %v76 = vsel %vm74, %v70, 0
  %78 = vmatprep.subr.bf16.mxu0 0
  %79 = vmatpush1.bf16.msra.mxu0 0
  %80 = vmatprep.subr.bf16.mxu0 0
  %81 = vmatpush1.bf16.msra.mxu0 0
  %82 = vmatprep.subr.bf16.mxu0 0
  %83 = vmatpush1.bf16.msra.mxu0 0
  %84 = vmatprep.subr.bf16.mxu0 0
  %85 = vmatpush1.bf16.msra.mxu0 0
  %86 = vmatprep.subr.bf16.mxu0 0
  %87 = vmatpush1.bf16.msra.mxu0 0
  %88 = vmatprep.subr.bf16.mxu0 0
  %89 = vmatpush1.bf16.msra.mxu0 0
  %90 = vmatprep.subr.bf16.mxu0 0
  %91 = vmatpush1.bf16.msra.mxu0 0
  %92 = vmatprep.subr.bf16.mxu0 0
  %93 = vmatpush1.bf16.msra.mxu0 %v73
  %94 = vmatprep.subr.bf16.mxu0 0
  %95 = vmatpush2.bf16.msra.mxu0 0
  %96 = vmatprep.subr.bf16.mxu0 0
  %97 = vmatpush2.bf16.msra.mxu0 0
  %98 = vmatprep.subr.bf16.mxu0 0
  %99 = vmatpush2.bf16.msra.mxu0 0
  %100 = vmatprep.subr.bf16.mxu0 0
  %101 = vmatpush2.bf16.msra.mxu0 0
  %102 = vmatprep.subr.bf16.mxu0 0
  %103 = vmatpush2.bf16.msra.mxu0 0
  %104 = vmatprep.subr.bf16.mxu0 0
  %105 = vmatpush2.bf16.msra.mxu0 0
  %106 = vmatprep.subr.bf16.mxu0 0
  %107 = vmatpush2.bf16.msra.mxu0 0
  %108 = vmatprep.subr.bf16.mxu0 0
  %109 = vmatpush2.bf16.msra.mxu0 0
  %110 = vmatprep.mubr.bf16.mxu0 0
  %111 = vmatmul.mubr.bf16.gmra.mxu0 %v76
  %v112 = vpop.f32.mrf.mxu0
  %v113 = vadd.f32 0.0, %v112
  %v114 = vpop.f32.mrf.mxu0
  %v115 = vpop.f32.mrf.mxu0
  %v116 = vadd.f32 0.0, %v115
  %v117 = vpop.f32.mrf.mxu0
  %118 = vdwg.mxu0
  %v119 = vadd.f32 %v68, %v113
  %v120 = vadd.f32 %v69, %v116
  %121 = vst [vmem:[#allocation2] sm:$0xff] %v119
  %122 = vst [vmem:[#allocation2 + $0x8] sm:$0xff] %v120
  // Predicated region
  $region26: #{hgp_sl_forward.12} parent=0 // pred_check
    %p123 = pneg %p21
  $region27: #{hgp_sl_forward.12} parent=0 // pred_check_branch
    %125 = sbr.rel (%p123) target = $region29
  $region28: #{hgp_sl_forward.12} parent=0 // pred_region
    %v126 = vld [vmem:[#allocation2] sm:$0xff]
    %v127 = vld [vmem:[#allocation2 + $0x8] sm:$0xff]
    %v128 = vld [vmem:[%s4] sm:$0xff]
    %v129 = vld [vmem:[%s4 + $0x8] sm:$0xff]
    %v130 = vsub.f32 %v126, %v128
    %v131 = vsub.f32 %v127, %v129
    %v132 = vand.u32 2147483647, %v130
    %v133 = vand.u32 2147483647, %v131
    %134 = vadd.xlane.f32.xlu0 %v132
    %v135 = vpop.xlane.xlu0 %134
    %136 = vadd.xlane.f32.xlu0 %v133
    %v137 = vpop.xlane.xlu0 %136
    %138 = vst [vmem:[%s5] sm:$0xff] %v135
    %139 = vst [vmem:[%s5 + $0x8] sm:$0xff] %v137
  $region29: #{hgp_sl_forward.12} parent=0 // pred_fallthru
    _
  // Predicated region
  $region30: #{hgp_sl_forward.12} parent=0 // pred_check
    _
  $region31: #{hgp_sl_forward.12} parent=0 // pred_check_branch
    %141 = sbr.rel (0) target = $region33
  $region32: #{hgp_sl_forward.12} parent=0 // pred_region
    _
  $region33: #{hgp_sl_forward.12} parent=0 // pred_fallthru
    _
  // Predicated region
  $region34: #{hgp_sl_forward.12} parent=0 // pred_check
    _
  $region35: #{hgp_sl_forward.12} parent=0 // pred_check_branch
    %143 = sbr.rel (0) target = $region37
  $region36: #{hgp_sl_forward.12} parent=0 // pred_region
    _
  $region37: #{hgp_sl_forward.12} parent=0 // pred_fallthru
    _

// kernel: hgp_sl_forward.11
$region0: #{hgp_sl_forward.11}
  #allocation0 [shape = 'u32[]', space=smem, size = 0x4, offset = 0x4, fixed_abs, tag = 'smem constant byte address 0x4 - core index']
  #allocation1 [shape = 'u32[144,128]{1,0:T(1,128)}', space=vmem, size = 0x12000, scoped, tag = 'internal scratch']
  #allocation2 [shape = 'f32[16,128]{1,0:T(8,128)}', space=vmem, size = 0x2000, scoped, tag = 'scratch operand']
  %s0 = inlined_call_operand.vmem [shape: f32[16,16], index: 0, kind: input, shape index: {}]
  %s1 = inlined_call_operand.vmem [shape: f32[16,1], index: 1, kind: input, shape index: {}]
  %s2 = inlined_call_operand.vmem [shape: f32[1,16], index: 2, kind: input, shape index: {}]
  %s3 = inlined_call_operand.vmem [shape: f32[16,128], index: 3, kind: input, shape index: {}]
  %s4 = inlined_call_operand.vmem [shape: f32[128,128], index: 4, kind: input, shape index: {}]
  %s5 = inlined_call_operand.vmem [shape: f32[1,128], index: 5, kind: input, shape index: {}]
  %s6 = inlined_call_operand.vmem [shape: f32[16,128], index: 6, kind: output, shape index: {}]
  %s7 = sld [smem:[#allocation0]]
  $region42: #{hgp_sl_forward.11} parent=0
    _
  %s9 = ssub.s32 1, %s7
  %s10 = scalar_select 0, %s9, %s7
  // Predicated region
  $region2: #{hgp_sl_forward.11} parent=0 // pred_check
    _
  $region3: #{hgp_sl_forward.11} parent=0 // pred_check_branch
    %12 = sbr.rel (0) target = $region5
  $region4: #{hgp_sl_forward.11} parent=0 // pred_region
    _
  $region5: #{hgp_sl_forward.11} parent=0 // pred_fallthru
    _
  // Predicated region
  $region6: #{hgp_sl_forward.11} parent=0 // pred_check
    _
  $region7: #{hgp_sl_forward.11} parent=0 // pred_check_branch
    %14 = sbr.rel (0) target = $region9
  $region8: #{hgp_sl_forward.11} parent=0 // pred_region
    _
  $region9: #{hgp_sl_forward.11} parent=0 // pred_fallthru
    _
  // Predicated region
  $region10: #{hgp_sl_forward.11} parent=0 // pred_check
    _
  $region11: #{hgp_sl_forward.11} parent=0 // pred_check_branch
    %16 = sbr.rel (0) target = $region13
  $region12: #{hgp_sl_forward.11} parent=0 // pred_region
    _
  $region13: #{hgp_sl_forward.11} parent=0 // pred_fallthru
    _
  // Predicated region
  $region14: #{hgp_sl_forward.11} parent=0 // pred_check
    _
  $region15: #{hgp_sl_forward.11} parent=0 // pred_check_branch
    %18 = sbr.rel (0) target = $region17
  $region16: #{hgp_sl_forward.11} parent=0 // pred_region
    _
  $region17: #{hgp_sl_forward.11} parent=0 // pred_fallthru
    _
  // Predicated region
  $region18: #{hgp_sl_forward.11} parent=0 // pred_check
    _
  $region19: #{hgp_sl_forward.11} parent=0 // pred_check_branch
    %20 = sbr.rel (0) target = $region21
  $region20: #{hgp_sl_forward.11} parent=0 // pred_region
    _
  $region21: #{hgp_sl_forward.11} parent=0 // pred_fallthru
    _
  // Predicated region
  $region22: #{hgp_sl_forward.11} parent=0 // pred_check
    _
  $region23: #{hgp_sl_forward.11} parent=0 // pred_check_branch
    %22 = sbr.rel (0) target = $region25
  $region24: #{hgp_sl_forward.11} parent=0 // pred_region
    _
  $region25: #{hgp_sl_forward.11} parent=0 // pred_fallthru
    _
  %p24 = scmp.eq.s32.totalorder 0, 0
  // Predicated region
  $region26: #{hgp_sl_forward.11} parent=0 // pred_check
    %p25 = pneg %p24
  $region27: #{hgp_sl_forward.11} parent=0 // pred_check_branch
    %27 = sbr.rel (%p25) target = $region29
  $region28: #{hgp_sl_forward.11} parent=0 // pred_region
    %28 = vst [vmem:[#allocation2] sm:$0xff] 0.0
    %29 = vst [vmem:[#allocation2 + $0x8] sm:$0xff] 0.0
  $region29: #{hgp_sl_forward.11} parent=0 // pred_fallthru
    _
  %s30 = smul.u32 0, 16
  %v31 = vlaneseq
  %v32 = vshrl.u32 %v31, 7
  %v33 = vadd.s32 %v32, 8
  %v34 = vstv %s30
  %v35 = vadd.s32 %v34, %v32
  %v36 = vadd.s32 %v34, %v33
  %s37 = smul.u32 0, 16
  %v38 = vlaneseq
  %v39 = vand.u32 %v38, 127
  %v40 = vstv %s37
  %v41 = vadd.s32 %v40, %v39
  %v42 = vld [vmem:[%s0] sm:$0xff]
  %v43 = vld [vmem:[%s0 + $0x8] sm:$0xff]
  %vm44 = vcmp.eq.s32.totalorder %v35, %v41
  %vm45 = vcmp.eq.s32.totalorder %v36, %v41
  %vm46 = vcmp.eq.f32.partialorder %v42, 0.0
  %vm47 = vcmp.eq.f32.partialorder %v43, 0.0
  %vm48 = vmand %vm44, %vm46
  %vm49 = vmand %vm45, %vm47
  %v50 = vsel %vm48, 1.0, 0.0
  %v51 = vsel %vm49, 1.0, 0.0
  %v52 = vadd.f32 %v42, %v50
  %v53 = vadd.f32 %v43, %v51
  %v54 = vld [vmem:[%s1] sm:$0xff]
  %v55 = vld [vmem:[%s1 + $0x8] sm:$0xff]
  %57 = vset.pattern.permute.xlu0 0
  %58 = vperm.xlu0 %57, %v54
  %v59 = vpop.permute.xlu0 %58
  %62 = vset.pattern.permute.xlu0 0
  %63 = vperm.xlu0 %62, %v55
  %v64 = vpop.permute.xlu0 %63
  %v66 = vmul.f32 %v52, %v59
  %v67 = vmul.f32 %v53, %v64
  %v68 = vld [vmem:[%s2] sm:$0x1]
  %v70 = vlaneseq
  %v71 = vshrl.u32 %v70, 7
  %v72 = vsub.s32 0, %v71
  %v73 = vrot.slane %v68, %v72
  %v75 = vmul.f32 %v66, %v73
  %v76 = vmul.f32 %v67, %v73
  %v77 = vld [vmem:[#allocation2] sm:$0xff]
  %v78 = vld [vmem:[#allocation2 + $0x8] sm:$0xff]
  %v79 = vpack.c.bf16 %v76, %v75
  %v80 = vld [vmem:[%s3] sm:$0xff]
  %v81 = vld [vmem:[%s3 + $0x8] sm:$0xff]
  %v82 = vpack.c.bf16 %v81, %v80
  %vm83 = vcmask 130048
  %v85 = vsel %vm83, %v79, 0
  %87 = vmatprep.subr.bf16.mxu0 0
  %88 = vmatpush1.bf16.msra.mxu0 0
  %89 = vmatprep.subr.bf16.mxu0 0
  %90 = vmatpush1.bf16.msra.mxu0 0
  %91 = vmatprep.subr.bf16.mxu0 0
  %92 = vmatpush1.bf16.msra.mxu0 0
  %93 = vmatprep.subr.bf16.mxu0 0
  %94 = vmatpush1.bf16.msra.mxu0 0
  %95 = vmatprep.subr.bf16.mxu0 0
  %96 = vmatpush1.bf16.msra.mxu0 0
  %97 = vmatprep.subr.bf16.mxu0 0
  %98 = vmatpush1.bf16.msra.mxu0 0
  %99 = vmatprep.subr.bf16.mxu0 0
  %100 = vmatpush1.bf16.msra.mxu0 0
  %101 = vmatprep.subr.bf16.mxu0 0
  %102 = vmatpush1.bf16.msra.mxu0 %v82
  %103 = vmatprep.subr.bf16.mxu0 0
  %104 = vmatpush2.bf16.msra.mxu0 0
  %105 = vmatprep.subr.bf16.mxu0 0
  %106 = vmatpush2.bf16.msra.mxu0 0
  %107 = vmatprep.subr.bf16.mxu0 0
  %108 = vmatpush2.bf16.msra.mxu0 0
  %109 = vmatprep.subr.bf16.mxu0 0
  %110 = vmatpush2.bf16.msra.mxu0 0
  %111 = vmatprep.subr.bf16.mxu0 0
  %112 = vmatpush2.bf16.msra.mxu0 0
  %113 = vmatprep.subr.bf16.mxu0 0
  %114 = vmatpush2.bf16.msra.mxu0 0
  %115 = vmatprep.subr.bf16.mxu0 0
  %116 = vmatpush2.bf16.msra.mxu0 0
  %117 = vmatprep.subr.bf16.mxu0 0
  %118 = vmatpush2.bf16.msra.mxu0 0
  %119 = vmatprep.mubr.bf16.mxu0 0
  %120 = vmatmul.mubr.bf16.gmra.mxu0 %v85
  %v121 = vpop.f32.mrf.mxu0
  %v122 = vadd.f32 0.0, %v121
  %v123 = vpop.f32.mrf.mxu0
  %v124 = vpop.f32.mrf.mxu0
  %v125 = vadd.f32 0.0, %v124
  %v126 = vpop.f32.mrf.mxu0
  %127 = vdwg.mxu0
  %v128 = vadd.f32 %v77, %v122
  %v129 = vadd.f32 %v78, %v125
  %130 = vst [vmem:[#allocation2] sm:$0xff] %v128
  %131 = vst [vmem:[#allocation2 + $0x8] sm:$0xff] %v129
  // Predicated region
  $region30: #{hgp_sl_forward.11} parent=0 // pred_check
    %p132 = pneg %p24
  $region31: #{hgp_sl_forward.11} parent=0 // pred_check_branch
    %134 = sbr.rel (%p132) target = $region33
  $region32: #{hgp_sl_forward.11} parent=0 // pred_region
    %v135 = vld [vmem:[#allocation2] sm:$0xff]
    %v136 = vld [vmem:[#allocation2 + $0x8] sm:$0xff]
    %v137 = vld [vmem:[%s4] sm:$0xff]
    %v138 = vld [vmem:[%s4 + $0x8] sm:$0xff]
    %v139 = vld [vmem:[%s4 + $0x10] sm:$0xff]
    %v140 = vld [vmem:[%s4 + $0x18] sm:$0xff]
    %v141 = vld [vmem:[%s4 + $0x20] sm:$0xff]
    %v142 = vld [vmem:[%s4 + $0x28] sm:$0xff]
    %v143 = vld [vmem:[%s4 + $0x30] sm:$0xff]
    %v144 = vld [vmem:[%s4 + $0x38] sm:$0xff]
    %v145 = vld [vmem:[%s4 + $0x40] sm:$0xff]
    %v146 = vld [vmem:[%s4 + $0x48] sm:$0xff]
    %v147 = vld [vmem:[%s4 + $0x50] sm:$0xff]
    %v148 = vld [vmem:[%s4 + $0x58] sm:$0xff]
    %v149 = vld [vmem:[%s4 + $0x60] sm:$0xff]
    %v150 = vld [vmem:[%s4 + $0x68] sm:$0xff]
    %v151 = vld [vmem:[%s4 + $0x70] sm:$0xff]
    %v152 = vld [vmem:[%s4 + $0x78] sm:$0xff]
    %v153 = vld [vmem:[%s5] sm:$0x1]
    %v155 = vlaneseq
    %v156 = vshrl.u32 %v155, 7
    %v157 = vsub.s32 0, %v156
    %v158 = vrot.slane %v153, %v157
    %160 = vmatprep.subr.mxu0 0.0
    %161 = vmatpush1.msra.mxu0 %v152
    %162 = vmatprep.subr.mxu0 0.0
    %163 = vmatpush1.msra.mxu0 %v151
    %164 = vmatprep.subr.mxu0 0.0
    %165 = vmatpush1.msra.mxu0 %v150
    %166 = vmatprep.subr.mxu0 0.0
    %167 = vmatpush1.msra.mxu0 %v149
    %168 = vmatprep.subr.mxu0 0.0
    %169 = vmatpush1.msra.mxu0 %v148
    %170 = vmatprep.subr.mxu0 0.0
    %171 = vmatpush1.msra.mxu0 %v147
    %172 = vmatprep.subr.mxu0 0.0
    %173 = vmatpush1.msra.mxu0 %v146
    %174 = vmatprep.subr.mxu0 0.0
    %175 = vmatpush1.msra.mxu0 %v145
    %176 = vmatprep.subr.mxu0 0.0
    %177 = vmatpush1.msra.mxu0 %v144
    %178 = vmatprep.subr.mxu0 0.0
    %179 = vmatpush1.msra.mxu0 %v143
    %180 = vmatprep.subr.mxu0 0.0
    %181 = vmatpush1.msra.mxu0 %v142
    %182 = vmatprep.subr.mxu0 0.0
    %183 = vmatpush1.msra.mxu0 %v141
    %184 = vmatprep.subr.mxu0 0.0
    %185 = vmatpush1.msra.mxu0 %v140
    %186 = vmatprep.subr.mxu0 0.0
    %187 = vmatpush1.msra.mxu0 %v139
    %188 = vmatprep.subr.mxu0 0.0
    %189 = vmatpush1.msra.mxu0 %v138
    %190 = vmatprep.subr.mxu0 0.0
    %191 = vmatpush1.msra.mxu0 %v137
    %192 = vmatprep.subr.mxu0 0.0
    %193 = vmatpush2.msra.mxu0 0.0
    %194 = vmatprep.subr.mxu0 0.0
    %195 = vmatpush2.msra.mxu0 0.0
    %196 = vmatprep.subr.mxu0 0.0
    %197 = vmatpush2.msra.mxu0 0.0
    %198 = vmatprep.subr.mxu0 0.0
    %199 = vmatpush2.msra.mxu0 0.0
    %200 = vmatprep.subr.mxu0 0.0
    %201 = vmatpush2.msra.mxu0 0.0
    %202 = vmatprep.subr.mxu0 0.0
    %203 = vmatpush2.msra.mxu0 0.0
    %204 = vmatprep.subr.mxu0 0.0
    %205 = vmatpush2.msra.mxu0 0.0
    %206 = vmatprep.subr.mxu0 0.0
    %207 = vmatpush2.msra.mxu0 0.0
    %208 = vmatprep.subr.mxu0 0.0
    %209 = vmatpush2.msra.mxu0 0.0
    %210 = vmatprep.subr.mxu0 0.0
    %211 = vmatpush2.msra.mxu0 0.0
    %212 = vmatprep.subr.mxu0 0.0
    %213 = vmatpush2.msra.mxu0 0.0
    %214 = vmatprep.subr.mxu0 0.0
    %215 = vmatpush2.msra.mxu0 0.0
    %216 = vmatprep.subr.mxu0 0.0
    %217 = vmatpush2.msra.mxu0 0.0
    %218 = vmatprep.subr.mxu0 0.0
    %219 = vmatpush2.msra.mxu0 0.0
    %220 = vmatprep.subr.mxu0 0.0
    %221 = vmatpush2.msra.mxu0 0.0
    %222 = vmatprep.subr.mxu0 0.0
    %223 = vmatpush2.msra.mxu0 0.0
    %224 = vmatprep.mubr.f32.mxu0 0.0
    %225 = vmatmul.mubr.f32.gmra.mxu0 %v135
    %v226 = vpop.f32.mrf.mxu0
    %v227 = vadd.f32 %v158, %v226
    %v228 = vpop.f32.mrf.mxu0
    %229 = vmatprep.mubr.f32.mxu0 0.0
    %230 = vmatmul.mubr.f32.gmra.mxu0 %v136
    %v231 = vpop.f32.mrf.mxu0
    %v232 = vadd.f32 %v158, %v231
    %v233 = vpop.f32.mrf.mxu0
    %234 = vdwg.mxu0
    %v235 = vmax.f32 %v227, 0.0
    %v236 = vmax.f32 %v232, 0.0
    %237 = vst [vmem:[%s6] sm:$0xff] %v235
    %238 = vst [vmem:[%s6 + $0x8] sm:$0xff] %v236
  $region33: #{hgp_sl_forward.11} parent=0 // pred_fallthru
    _
  // Predicated region
  $region34: #{hgp_sl_forward.11} parent=0 // pred_check
    _
  $region35: #{hgp_sl_forward.11} parent=0 // pred_check_branch
    %240 = sbr.rel (0) target = $region37
  $region36: #{hgp_sl_forward.11} parent=0 // pred_region
    _
  $region37: #{hgp_sl_forward.11} parent=0 // pred_fallthru
    _
  // Predicated region
  $region38: #{hgp_sl_forward.11} parent=0 // pred_check
    _
  $region39: #{hgp_sl_forward.11} parent=0 // pred_check_branch
    %242 = sbr.rel (0) target = $region41
  $region40: #{hgp_sl_forward.11} parent=0 // pred_region
    _
  $region41: #{hgp_sl_forward.11} parent=0 // pred_fallthru
    _

// kernel: squeeze.3
$region0: #{squeeze.3}
  %s0 = inlined_call_operand.vmem [shape: f32[8], index: 0, kind: input, shape index: {}]
  %s1 = inlined_call_operand.vmem [shape: f32[2,4], index: 1, kind: output, shape index: {}]
  $region1: #{squeeze.3} parent=0
    #allocation0 [shape = 'u8[4096]{0}', space=vmem, size = 0x1000, scoped, tag = 'scoped mem for output reshape']
    #allocation1 [shape = 'u8[4096]{0}', space=vmem, size = 0x1000, scoped, tag = 'scoped mem for input reshape']
    %s3 = sshll.u32 1, 1
    %s4 = ssub.s32 %s3, 1
    %v5 = vld [vmem:[%s0] sm:%s4]
    %6 = vst [vmem:[#allocation1] sm:%s4] %v5
    %v7 = vld [vmem:[#allocation1] sm:$0x1]
    %vm8 = vcmask 31744
    %9 = vst.msk [vmem:[#allocation0] sm:$0x1] %vm8, %v7
    %v10 = vld [vmem:[#allocation1] sm:$0x1]
    %11 = vrot.lane.b32.xlu0 %v10, 124
    %v12 = vpop.permute.xlu0 %11
    %vm13 = vcmask 31744
    %s14 = scalar_lea.vmem [#allocation0], 1
    %15 = vst.msk [vmem:[%s14] sm:$0x1] %vm13, %v12
    %s17 = sshll.u32 1, 2
    %s18 = ssub.s32 %s17, 1
    %v20 = vld [vmem:[#allocation0] sm:%s18]
    %s21 = sshll.u32 1, 2
    %s22 = ssub.s32 %s21, 1
    %23 = vst [vmem:[%s1] sm:%s22] %v20

// kernel: hgp_sl_forward.13
$region0: #{hgp_sl_forward.13}
  #allocation0 [shape = 'u32[]', space=smem, size = 0x4, offset = 0x4, fixed_abs, tag = 'smem constant byte address 0x4 - core index']
  #allocation1 [shape = 'u32[144,128]{1,0:T(1,128)}', space=vmem, size = 0x12000, scoped, tag = 'internal scratch']
  %s0 = inlined_call_operand.vmem [shape: f32[8,128], index: 0, kind: input, shape index: {}]
  %s1 = inlined_call_operand.vmem [shape: f32[128,1], index: 1, kind: input, shape index: {}]
  %s2 = inlined_call_operand.vmem [shape: f32[1,128], index: 2, kind: input, shape index: {}]
  %s3 = inlined_call_operand.vmem [shape: f32[8,8], index: 3, kind: input, shape index: {}]
  %s4 = inlined_call_operand.vmem [shape: f32[8,1], index: 4, kind: input, shape index: {}]
  %s5 = inlined_call_operand.vmem [shape: f32[1,8], index: 5, kind: input, shape index: {}]
  %s6 = inlined_call_operand.vmem [shape: f32[8,8], index: 6, kind: output, shape index: {}]
  %s7 = sld [smem:[#allocation0]]
  $region34: #{hgp_sl_forward.13} parent=0
    _
  %s9 = ssub.s32 1, %s7
  %s10 = scalar_select 0, %s9, %s7
  // Predicated region
  $region2: #{hgp_sl_forward.13} parent=0 // pred_check
    _
  $region3: #{hgp_sl_forward.13} parent=0 // pred_check_branch
    %12 = sbr.rel (0) target = $region5
  $region4: #{hgp_sl_forward.13} parent=0 // pred_region
    _
  $region5: #{hgp_sl_forward.13} parent=0 // pred_fallthru
    _
  // Predicated region
  $region6: #{hgp_sl_forward.13} parent=0 // pred_check
    _
  $region7: #{hgp_sl_forward.13} parent=0 // pred_check_branch
    %14 = sbr.rel (0) target = $region9
  $region8: #{hgp_sl_forward.13} parent=0 // pred_region
    _
  $region9: #{hgp_sl_forward.13} parent=0 // pred_fallthru
    _
  // Predicated region
  $region10: #{hgp_sl_forward.13} parent=0 // pred_check
    _
  $region11: #{hgp_sl_forward.13} parent=0 // pred_check_branch
    %16 = sbr.rel (0) target = $region13
  $region12: #{hgp_sl_forward.13} parent=0 // pred_region
    _
  $region13: #{hgp_sl_forward.13} parent=0 // pred_fallthru
    _
  // Predicated region
  $region14: #{hgp_sl_forward.13} parent=0 // pred_check
    _
  $region15: #{hgp_sl_forward.13} parent=0 // pred_check_branch
    %18 = sbr.rel (0) target = $region17
  $region16: #{hgp_sl_forward.13} parent=0 // pred_region
    _
  $region17: #{hgp_sl_forward.13} parent=0 // pred_fallthru
    _
  // Predicated region
  $region18: #{hgp_sl_forward.13} parent=0 // pred_check
    _
  $region19: #{hgp_sl_forward.13} parent=0 // pred_check_branch
    %20 = sbr.rel (0) target = $region21
  $region20: #{hgp_sl_forward.13} parent=0 // pred_region
    _
  $region21: #{hgp_sl_forward.13} parent=0 // pred_fallthru
    _
  // Predicated region
  $region22: #{hgp_sl_forward.13} parent=0 // pred_check
    _
  $region23: #{hgp_sl_forward.13} parent=0 // pred_check_branch
    %22 = sbr.rel (0) target = $region25
  $region24: #{hgp_sl_forward.13} parent=0 // pred_region
    _
  $region25: #{hgp_sl_forward.13} parent=0 // pred_fallthru
    _
  %v23 = vld [vmem:[%s0] sm:$0xff]
  %v24 = vld [vmem:[%s1] sm:$0xff]
  %v25 = vld [vmem:[%s1 + $0x8] sm:$0xff]
  %v26 = vld [vmem:[%s1 + $0x10] sm:$0xff]
  %v27 = vld [vmem:[%s1 + $0x18] sm:$0xff]
  %v28 = vld [vmem:[%s1 + $0x20] sm:$0xff]
  %v29 = vld [vmem:[%s1 + $0x28] sm:$0xff]
  %v30 = vld [vmem:[%s1 + $0x30] sm:$0xff]
  %v31 = vld [vmem:[%s1 + $0x38] sm:$0xff]
  %v32 = vld [vmem:[%s1 + $0x40] sm:$0xff]
  %v33 = vld [vmem:[%s1 + $0x48] sm:$0xff]
  %v34 = vld [vmem:[%s1 + $0x50] sm:$0xff]
  %v35 = vld [vmem:[%s1 + $0x58] sm:$0xff]
  %v36 = vld [vmem:[%s1 + $0x60] sm:$0xff]
  %v37 = vld [vmem:[%s1 + $0x68] sm:$0xff]
  %v38 = vld [vmem:[%s1 + $0x70] sm:$0xff]
  %v39 = vld [vmem:[%s1 + $0x78] sm:$0xff]
  %40 = vmatprep.subr.mxu0 0.0
  %41 = vmatpush1.msra.mxu0 %v39
  %42 = vmatprep.subr.mxu0 0.0
  %43 = vmatpush1.msra.mxu0 %v38
  %44 = vmatprep.subr.mxu0 0.0
  %45 = vmatpush1.msra.mxu0 %v37
  %46 = vmatprep.subr.mxu0 0.0
  %47 = vmatpush1.msra.mxu0 %v36
  %48 = vmatprep.subr.mxu0 0.0
  %49 = vmatpush1.msra.mxu0 %v35
  %50 = vmatprep.subr.mxu0 0.0
  %51 = vmatpush1.msra.mxu0 %v34
  %52 = vmatprep.subr.mxu0 0.0
  %53 = vmatpush1.msra.mxu0 %v33
  %54 = vmatprep.subr.mxu0 0.0
  %55 = vmatpush1.msra.mxu0 %v32
  %56 = vmatprep.subr.mxu0 0.0
  %57 = vmatpush1.msra.mxu0 %v31
  %58 = vmatprep.subr.mxu0 0.0
  %59 = vmatpush1.msra.mxu0 %v30
  %60 = vmatprep.subr.mxu0 0.0
  %61 = vmatpush1.msra.mxu0 %v29
  %62 = vmatprep.subr.mxu0 0.0
  %63 = vmatpush1.msra.mxu0 %v28
  %64 = vmatprep.subr.mxu0 0.0
  %65 = vmatpush1.msra.mxu0 %v27
  %66 = vmatprep.subr.mxu0 0.0
  %67 = vmatpush1.msra.mxu0 %v26
  %68 = vmatprep.subr.mxu0 0.0
  %69 = vmatpush1.msra.mxu0 %v25
  %70 = vmatprep.subr.mxu0 0.0
  %71 = vmatpush1.msra.mxu0 %v24
  %72 = vmatprep.subr.mxu0 0.0
  %73 = vmatpush2.msra.mxu0 0.0
  %74 = vmatprep.subr.mxu0 0.0
  %75 = vmatpush2.msra.mxu0 0.0
  %76 = vmatprep.subr.mxu0 0.0
  %77 = vmatpush2.msra.mxu0 0.0
  %78 = vmatprep.subr.mxu0 0.0
  %79 = vmatpush2.msra.mxu0 0.0
  %80 = vmatprep.subr.mxu0 0.0
  %81 = vmatpush2.msra.mxu0 0.0
  %82 = vmatprep.subr.mxu0 0.0
  %83 = vmatpush2.msra.mxu0 0.0
  %84 = vmatprep.subr.mxu0 0.0
  %85 = vmatpush2.msra.mxu0 0.0
  %86 = vmatprep.subr.mxu0 0.0
  %87 = vmatpush2.msra.mxu0 0.0
  %88 = vmatprep.subr.mxu0 0.0
  %89 = vmatpush2.msra.mxu0 0.0
  %90 = vmatprep.subr.mxu0 0.0
  %91 = vmatpush2.msra.mxu0 0.0
  %92 = vmatprep.subr.mxu0 0.0
  %93 = vmatpush2.msra.mxu0 0.0
  %94 = vmatprep.subr.mxu0 0.0
  %95 = vmatpush2.msra.mxu0 0.0
  %96 = vmatprep.subr.mxu0 0.0
  %97 = vmatpush2.msra.mxu0 0.0
  %98 = vmatprep.subr.mxu0 0.0
  %99 = vmatpush2.msra.mxu0 0.0
  %100 = vmatprep.subr.mxu0 0.0
  %101 = vmatpush2.msra.mxu0 0.0
  %102 = vmatprep.subr.mxu0 0.0
  %103 = vmatpush2.msra.mxu0 0.0
  %104 = vmatprep.mubr.f32.mxu0 0.0
  %105 = vmatmul.mubr.f32.gmra.mxu0 %v23
  %v106 = vpop.f32.mrf.mxu0
  %v107 = vadd.f32 0.0, %v106
  %v108 = vpop.f32.mrf.mxu0
  %109 = vdwg.mxu0
  %v110 = vld [vmem:[%s2] sm:$0x1]
  %111 = vmatprep.subr.mxu0 0.0
  %112 = vmatpush1.xpose.msra.mxu0 0.0
  %113 = vmatprep.subr.mxu0 0.0
  %114 = vmatpush1.xpose.msra.mxu0 0.0
  %115 = vmatprep.subr.mxu0 0.0
  %116 = vmatpush1.xpose.msra.mxu0 0.0
  %117 = vmatprep.subr.mxu0 0.0
  %118 = vmatpush1.xpose.msra.mxu0 0.0
  %119 = vmatprep.subr.mxu0 0.0
  %120 = vmatpush1.xpose.msra.mxu0 0.0
  %121 = vmatprep.subr.mxu0 0.0
  %122 = vmatpush1.xpose.msra.mxu0 0.0
  %123 = vmatprep.subr.mxu0 0.0
  %124 = vmatpush1.xpose.msra.mxu0 0.0
  %125 = vmatprep.subr.mxu0 0.0
  %126 = vmatpush1.xpose.msra.mxu0 0.0
  %127 = vmatprep.subr.mxu0 0.0
  %128 = vmatpush1.xpose.msra.mxu0 0.0
  %129 = vmatprep.subr.mxu0 0.0
  %130 = vmatpush1.xpose.msra.mxu0 0.0
  %131 = vmatprep.subr.mxu0 0.0
  %132 = vmatpush1.xpose.msra.mxu0 0.0
  %133 = vmatprep.subr.mxu0 0.0
  %134 = vmatpush1.xpose.msra.mxu0 0.0
  %135 = vmatprep.subr.mxu0 0.0
  %136 = vmatpush1.xpose.msra.mxu0 0.0
  %137 = vmatprep.subr.mxu0 0.0
  %138 = vmatpush1.xpose.msra.mxu0 0.0
  %139 = vmatprep.subr.mxu0 0.0
  %140 = vmatpush1.xpose.msra.mxu0 0.0
  %141 = vmatprep.subr.mxu0 0.0
  %142 = vmatpush1.xpose.msra.mxu0 %v23
  %143 = vmatprep.subr.mxu0 0.0
  %144 = vmatpush2.xpose.msra.mxu0 0.0
  %145 = vmatprep.subr.mxu0 0.0
  %146 = vmatpush2.xpose.msra.mxu0 0.0
  %147 = vmatprep.subr.mxu0 0.0
  %148 = vmatpush2.xpose.msra.mxu0 0.0
  %149 = vmatprep.subr.mxu0 0.0
  %150 = vmatpush2.xpose.msra.mxu0 0.0
  %151 = vmatprep.subr.mxu0 0.0
  %152 = vmatpush2.xpose.msra.mxu0 0.0
  %153 = vmatprep.subr.mxu0 0.0
  %154 = vmatpush2.xpose.msra.mxu0 0.0
  %155 = vmatprep.subr.mxu0 0.0
  %156 = vmatpush2.xpose.msra.mxu0 0.0
  %157 = vmatprep.subr.mxu0 0.0
  %158 = vmatpush2.xpose.msra.mxu0 0.0
  %159 = vmatprep.subr.mxu0 0.0
  %160 = vmatpush2.xpose.msra.mxu0 0.0
  %161 = vmatprep.subr.mxu0 0.0
  %162 = vmatpush2.xpose.msra.mxu0 0.0
  %163 = vmatprep.subr.mxu0 0.0
  %164 = vmatpush2.xpose.msra.mxu0 0.0
  %165 = vmatprep.subr.mxu0 0.0
  %166 = vmatpush2.xpose.msra.mxu0 0.0
  %167 = vmatprep.subr.mxu0 0.0
  %168 = vmatpush2.xpose.msra.mxu0 0.0
  %169 = vmatprep.subr.mxu0 0.0
  %170 = vmatpush2.xpose.msra.mxu0 0.0
  %171 = vmatprep.subr.mxu0 0.0
  %172 = vmatpush2.xpose.msra.mxu0 0.0
  %173 = vmatprep.subr.mxu0 0.0
  %174 = vmatpush2.xpose.msra.mxu0 0.0
  %175 = vmatprep.mubr.f32.mxu0 0.0
  %176 = vmatmul.mubr.f32.gmra.mxu0 %v110
  %v177 = vpop.f32.mrf.mxu0
  %v178 = vadd.f32 0.0, %v177
  %v179 = vpop.f32.mrf.mxu0
  %180 = vdwg.mxu0
  %182 = vset.pattern.permute.xlu0 0
  %183 = vperm.xlu0 %182, %v107
  %v184 = vpop.permute.xlu0 %183
  %v186 = vlaneseq
  %v187 = vshrl.u32 %v186, 7
  %v188 = vsub.s32 0, %v187
  %v189 = vrot.slane %v178, %v188
  %v190 = vadd.f32 %v184, %v189
  %vm191 = vcmp.gt.f32.partialorder %v190, 0.0
  %v192 = vmul.f32 %v190, 0.2
  %v193 = vsel %vm191, %v190, %v192
  %v194 = vld [vmem:[%s3] sm:$0xff]
  %v195 = vadd.f32 %v193, %v194
  %v196 = vld [vmem:[%s4] sm:$0xff]
  %v197 = vld [vmem:[%s5] sm:$0x1]
  %199 = vset.pattern.permute.xlu0 0
  %200 = vperm.xlu0 %199, %v196
  %v201 = vpop.permute.xlu0 %200
  %v204 = vlaneseq
  %v205 = vshrl.u32 %v204, 7
  %v206 = vsub.s32 0, %v205
  %v207 = vrot.slane %v197, %v206
  %vm209 = vcmp.eq.f32.partialorder %v201, %v207
  %v210 = vsel %vm209, %v195, -1e+09
  %vm211 = vcmask 64512
  %212 = vst.msk [vmem:[%s6] sm:$0xff] %vm211, %v210
  // Predicated region
  $region26: #{hgp_sl_forward.13} parent=0 // pred_check
    _
  $region27: #{hgp_sl_forward.13} parent=0 // pred_check_branch
    %214 = sbr.rel (0) target = $region29
  $region28: #{hgp_sl_forward.13} parent=0 // pred_region
    _
  $region29: #{hgp_sl_forward.13} parent=0 // pred_fallthru
    _
  // Predicated region
  $region30: #{hgp_sl_forward.13} parent=0 // pred_check
    _
  $region31: #{hgp_sl_forward.13} parent=0 // pred_check_branch
    %216 = sbr.rel (0) target = $region33
  $region32: #{hgp_sl_forward.13} parent=0 // pred_region
    _
  $region33: #{hgp_sl_forward.13} parent=0 // pred_fallthru
    _

// kernel: hgp_sl_forward.16
$region0: #{hgp_sl_forward.16}
  #allocation0 [shape = 'u32[]', space=smem, size = 0x4, offset = 0x4, fixed_abs, tag = 'smem constant byte address 0x4 - core index']
  #allocation1 [shape = 'u32[144,128]{1,0:T(1,128)}', space=vmem, size = 0x12000, scoped, tag = 'internal scratch']
  #allocation2 [shape = 'f32[8,128]{1,0:T(8,128)}', space=vmem, size = 0x1000, scoped, tag = 'scratch operand']
  %s0 = inlined_call_operand.vmem [shape: f32[8,8], index: 0, kind: input, shape index: {}]
  %s1 = inlined_call_operand.vmem [shape: f32[8,1], index: 1, kind: input, shape index: {}]
  %s2 = inlined_call_operand.vmem [shape: f32[1,8], index: 2, kind: input, shape index: {}]
  %s3 = inlined_call_operand.vmem [shape: f32[8,128], index: 3, kind: input, shape index: {}, may-alias: {3,4}]
  %s4 = inlined_call_operand.vmem [shape: f32[8,128], index: 4, kind: input, shape index: {}, may-alias: {3,4}]
  %s5 = inlined_call_operand.vmem [shape: f32[8,128], index: 5, kind: output, shape index: {}]
  %s6 = sld [smem:[#allocation0]]
  $region38: #{hgp_sl_forward.16} parent=0
    _
  %s8 = ssub.s32 1, %s6
  %s9 = scalar_select 0, %s8, %s6
  // Predicated region
  $region2: #{hgp_sl_forward.16} parent=0 // pred_check
    _
  $region3: #{hgp_sl_forward.16} parent=0 // pred_check_branch
    %11 = sbr.rel (0) target = $region5
  $region4: #{hgp_sl_forward.16} parent=0 // pred_region
    _
  $region5: #{hgp_sl_forward.16} parent=0 // pred_fallthru
    _
  // Predicated region
  $region6: #{hgp_sl_forward.16} parent=0 // pred_check
    _
  $region7: #{hgp_sl_forward.16} parent=0 // pred_check_branch
    %13 = sbr.rel (0) target = $region9
  $region8: #{hgp_sl_forward.16} parent=0 // pred_region
    _
  $region9: #{hgp_sl_forward.16} parent=0 // pred_fallthru
    _
  // Predicated region
  $region10: #{hgp_sl_forward.16} parent=0 // pred_check
    _
  $region11: #{hgp_sl_forward.16} parent=0 // pred_check_branch
    %15 = sbr.rel (0) target = $region13
  $region12: #{hgp_sl_forward.16} parent=0 // pred_region
    _
  $region13: #{hgp_sl_forward.16} parent=0 // pred_fallthru
    _
  // Predicated region
  $region14: #{hgp_sl_forward.16} parent=0 // pred_check
    _
  $region15: #{hgp_sl_forward.16} parent=0 // pred_check_branch
    %17 = sbr.rel (0) target = $region17
  $region16: #{hgp_sl_forward.16} parent=0 // pred_region
    _
  $region17: #{hgp_sl_forward.16} parent=0 // pred_fallthru
    _
  // Predicated region
  $region18: #{hgp_sl_forward.16} parent=0 // pred_check
    _
  $region19: #{hgp_sl_forward.16} parent=0 // pred_check_branch
    %19 = sbr.rel (0) target = $region21
  $region20: #{hgp_sl_forward.16} parent=0 // pred_region
    _
  $region21: #{hgp_sl_forward.16} parent=0 // pred_fallthru
    _
  %p21 = scmp.eq.s32.totalorder 0, 0
  // Predicated region
  $region22: #{hgp_sl_forward.16} parent=0 // pred_check
    %p22 = pneg %p21
  $region23: #{hgp_sl_forward.16} parent=0 // pred_check_branch
    %24 = sbr.rel (%p22) target = $region25
  $region24: #{hgp_sl_forward.16} parent=0 // pred_region
    %25 = vst [vmem:[#allocation2] sm:$0xff] 0.0
  $region25: #{hgp_sl_forward.16} parent=0 // pred_fallthru
    _
  %s26 = smul.u32 0, 8
  %v27 = vlaneseq
  %v28 = vshrl.u32 %v27, 7
  %v29 = vstv %s26
  %v30 = vadd.s32 %v29, %v28
  %s31 = smul.u32 0, 8
  %v32 = vlaneseq
  %v33 = vand.u32 %v32, 127
  %v34 = vstv %s31
  %v35 = vadd.s32 %v34, %v33
  %vm36 = vcmp.eq.s32.totalorder %v30, %v35
  %v37 = vld [vmem:[%s0] sm:$0xff]
  %v38 = vsel %vm36, 0.0, %v37
  %v39 = vld [vmem:[%s1] sm:$0xff]
  %41 = vset.pattern.permute.xlu0 0
  %42 = vperm.xlu0 %41, %v39
  %v43 = vpop.permute.xlu0 %42
  %v45 = vmul.f32 %v38, %v43
  %v46 = vld [vmem:[%s2] sm:$0x1]
  %v48 = vlaneseq
  %v49 = vshrl.u32 %v48, 7
  %v50 = vsub.s32 0, %v49
  %v51 = vrot.slane %v46, %v50
  %v53 = vmul.f32 %v45, %v51
  %v54 = vld [vmem:[#allocation2] sm:$0xff]
  %v55 = vpack.c.bf16 %v53, %v53
  %v56 = vld [vmem:[%s3] sm:$0xff]
  %v57 = vpack.c.bf16 %v56, %v56
  %vm58 = vcmask 64512
  %v60 = vsel %vm58, %v55, 0
  %vm62 = vcmask 1043456
  %v64 = vsel %vm62, %v57, 0
  %66 = vmatprep.subr.bf16.mxu0 0
  %67 = vmatpush1.bf16.msra.mxu0 0
  %68 = vmatprep.subr.bf16.mxu0 0
  %69 = vmatpush1.bf16.msra.mxu0 0
  %70 = vmatprep.subr.bf16.mxu0 0
  %71 = vmatpush1.bf16.msra.mxu0 0
  %72 = vmatprep.subr.bf16.mxu0 0
  %73 = vmatpush1.bf16.msra.mxu0 0
  %74 = vmatprep.subr.bf16.mxu0 0
  %75 = vmatpush1.bf16.msra.mxu0 0
  %76 = vmatprep.subr.bf16.mxu0 0
  %77 = vmatpush1.bf16.msra.mxu0 0
  %78 = vmatprep.subr.bf16.mxu0 0
  %79 = vmatpush1.bf16.msra.mxu0 0
  %80 = vmatprep.subr.bf16.mxu0 0
  %81 = vmatpush1.bf16.msra.mxu0 %v64
  %82 = vmatprep.subr.bf16.mxu0 0
  %83 = vmatpush2.bf16.msra.mxu0 0
  %84 = vmatprep.subr.bf16.mxu0 0
  %85 = vmatpush2.bf16.msra.mxu0 0
  %86 = vmatprep.subr.bf16.mxu0 0
  %87 = vmatpush2.bf16.msra.mxu0 0
  %88 = vmatprep.subr.bf16.mxu0 0
  %89 = vmatpush2.bf16.msra.mxu0 0
  %90 = vmatprep.subr.bf16.mxu0 0
  %91 = vmatpush2.bf16.msra.mxu0 0
  %92 = vmatprep.subr.bf16.mxu0 0
  %93 = vmatpush2.bf16.msra.mxu0 0
  %94 = vmatprep.subr.bf16.mxu0 0
  %95 = vmatpush2.bf16.msra.mxu0 0
  %96 = vmatprep.subr.bf16.mxu0 0
  %97 = vmatpush2.bf16.msra.mxu0 0
  %98 = vmatprep.mubr.bf16.mxu0 0
  %99 = vmatmul.mubr.bf16.gmra.mxu0 %v60
  %v100 = vpop.f32.mrf.mxu0
  %v101 = vadd.f32 0.0, %v100
  %v102 = vpop.f32.mrf.mxu0
  %v103 = vpop.f32.mrf.mxu0
  %v104 = vpop.f32.mrf.mxu0
  %105 = vdwg.mxu0
  %v106 = vadd.f32 %v54, %v101
  %107 = vst [vmem:[#allocation2] sm:$0xff] %v106
  // Predicated region
  $region26: #{hgp_sl_forward.16} parent=0 // pred_check
    %p108 = pneg %p21
  $region27: #{hgp_sl_forward.16} parent=0 // pred_check_branch
    %110 = sbr.rel (%p108) target = $region29
  $region28: #{hgp_sl_forward.16} parent=0 // pred_region
    %v111 = vld [vmem:[#allocation2] sm:$0xff]
    %v112 = vld [vmem:[%s4] sm:$0xff]
    %v113 = vsub.f32 %v111, %v112
    %v114 = vand.u32 2147483647, %v113
    %115 = vadd.xlane.f32.xlu0 %v114
    %v116 = vpop.xlane.xlu0 %115
    %117 = vst [vmem:[%s5] sm:$0xff] %v116
  $region29: #{hgp_sl_forward.16} parent=0 // pred_fallthru
    _
  // Predicated region
  $region30: #{hgp_sl_forward.16} parent=0 // pred_check
    _
  $region31: #{hgp_sl_forward.16} parent=0 // pred_check_branch
    %119 = sbr.rel (0) target = $region33
  $region32: #{hgp_sl_forward.16} parent=0 // pred_region
    _
  $region33: #{hgp_sl_forward.16} parent=0 // pred_fallthru
    _
  // Predicated region
  $region34: #{hgp_sl_forward.16} parent=0 // pred_check
    _
  $region35: #{hgp_sl_forward.16} parent=0 // pred_check_branch
    %121 = sbr.rel (0) target = $region37
  $region36: #{hgp_sl_forward.16} parent=0 // pred_region
    _
  $region37: #{hgp_sl_forward.16} parent=0 // pred_fallthru
    _

// kernel: hgp_sl_forward.15
$region0: #{hgp_sl_forward.15}
  #allocation0 [shape = 'u32[]', space=smem, size = 0x4, offset = 0x4, fixed_abs, tag = 'smem constant byte address 0x4 - core index']
  #allocation1 [shape = 'u32[144,128]{1,0:T(1,128)}', space=vmem, size = 0x12000, scoped, tag = 'internal scratch']
  #allocation2 [shape = 'f32[8,128]{1,0:T(8,128)}', space=vmem, size = 0x1000, scoped, tag = 'scratch operand']
  %s0 = inlined_call_operand.vmem [shape: f32[8,8], index: 0, kind: input, shape index: {}]
  %s1 = inlined_call_operand.vmem [shape: f32[8,1], index: 1, kind: input, shape index: {}]
  %s2 = inlined_call_operand.vmem [shape: f32[1,8], index: 2, kind: input, shape index: {}]
  %s3 = inlined_call_operand.vmem [shape: f32[8,128], index: 3, kind: input, shape index: {}]
  %s4 = inlined_call_operand.vmem [shape: f32[128,128], index: 4, kind: input, shape index: {}]
  %s5 = inlined_call_operand.vmem [shape: f32[1,128], index: 5, kind: input, shape index: {}]
  %s6 = inlined_call_operand.vmem [shape: f32[8,128], index: 6, kind: output, shape index: {}]
  %s7 = sld [smem:[#allocation0]]
  $region42: #{hgp_sl_forward.15} parent=0
    _
  %s9 = ssub.s32 1, %s7
  %s10 = scalar_select 0, %s9, %s7
  // Predicated region
  $region2: #{hgp_sl_forward.15} parent=0 // pred_check
    _
  $region3: #{hgp_sl_forward.15} parent=0 // pred_check_branch
    %12 = sbr.rel (0) target = $region5
  $region4: #{hgp_sl_forward.15} parent=0 // pred_region
    _
  $region5: #{hgp_sl_forward.15} parent=0 // pred_fallthru
    _
  // Predicated region
  $region6: #{hgp_sl_forward.15} parent=0 // pred_check
    _
  $region7: #{hgp_sl_forward.15} parent=0 // pred_check_branch
    %14 = sbr.rel (0) target = $region9
  $region8: #{hgp_sl_forward.15} parent=0 // pred_region
    _
  $region9: #{hgp_sl_forward.15} parent=0 // pred_fallthru
    _
  // Predicated region
  $region10: #{hgp_sl_forward.15} parent=0 // pred_check
    _
  $region11: #{hgp_sl_forward.15} parent=0 // pred_check_branch
    %16 = sbr.rel (0) target = $region13
  $region12: #{hgp_sl_forward.15} parent=0 // pred_region
    _
  $region13: #{hgp_sl_forward.15} parent=0 // pred_fallthru
    _
  // Predicated region
  $region14: #{hgp_sl_forward.15} parent=0 // pred_check
    _
  $region15: #{hgp_sl_forward.15} parent=0 // pred_check_branch
    %18 = sbr.rel (0) target = $region17
  $region16: #{hgp_sl_forward.15} parent=0 // pred_region
    _
  $region17: #{hgp_sl_forward.15} parent=0 // pred_fallthru
    _
  // Predicated region
  $region18: #{hgp_sl_forward.15} parent=0 // pred_check
    _
  $region19: #{hgp_sl_forward.15} parent=0 // pred_check_branch
    %20 = sbr.rel (0) target = $region21
  $region20: #{hgp_sl_forward.15} parent=0 // pred_region
    _
  $region21: #{hgp_sl_forward.15} parent=0 // pred_fallthru
    _
  // Predicated region
  $region22: #{hgp_sl_forward.15} parent=0 // pred_check
    _
  $region23: #{hgp_sl_forward.15} parent=0 // pred_check_branch
    %22 = sbr.rel (0) target = $region25
  $region24: #{hgp_sl_forward.15} parent=0 // pred_region
    _
  $region25: #{hgp_sl_forward.15} parent=0 // pred_fallthru
    _
  %p24 = scmp.eq.s32.totalorder 0, 0
  // Predicated region
  $region26: #{hgp_sl_forward.15} parent=0 // pred_check
    %p25 = pneg %p24
  $region27: #{hgp_sl_forward.15} parent=0 // pred_check_branch
    %27 = sbr.rel (%p25) target = $region29
  $region28: #{hgp_sl_forward.15} parent=0 // pred_region
    %28 = vst [vmem:[#allocation2] sm:$0xff] 0.0
  $region29: #{hgp_sl_forward.15} parent=0 // pred_fallthru
    _
  %s29 = smul.u32 0, 8
  %v30 = vlaneseq
  %v31 = vshrl.u32 %v30, 7
  %v32 = vstv %s29
  %v33 = vadd.s32 %v32, %v31
  %s34 = smul.u32 0, 8
  %v35 = vlaneseq
  %v36 = vand.u32 %v35, 127
  %v37 = vstv %s34
  %v38 = vadd.s32 %v37, %v36
  %v39 = vld [vmem:[%s0] sm:$0xff]
  %vm40 = vcmp.eq.s32.totalorder %v33, %v38
  %vm41 = vcmp.eq.f32.partialorder %v39, 0.0
  %vm42 = vmand %vm40, %vm41
  %v43 = vsel %vm42, 1.0, 0.0
  %v44 = vadd.f32 %v39, %v43
  %v45 = vld [vmem:[%s1] sm:$0xff]
  %47 = vset.pattern.permute.xlu0 0
  %48 = vperm.xlu0 %47, %v45
  %v49 = vpop.permute.xlu0 %48
  %v51 = vmul.f32 %v44, %v49
  %v52 = vld [vmem:[%s2] sm:$0x1]
  %v54 = vlaneseq
  %v55 = vshrl.u32 %v54, 7
  %v56 = vsub.s32 0, %v55
  %v57 = vrot.slane %v52, %v56
  %v59 = vmul.f32 %v51, %v57
  %v60 = vld [vmem:[#allocation2] sm:$0xff]
  %v61 = vpack.c.bf16 %v59, %v59
  %v62 = vld [vmem:[%s3] sm:$0xff]
  %v63 = vpack.c.bf16 %v62, %v62
  %vm64 = vcmask 64512
  %v66 = vsel %vm64, %v61, 0
  %vm68 = vcmask 1043456
  %v70 = vsel %vm68, %v63, 0
  %72 = vmatprep.subr.bf16.mxu0 0
  %73 = vmatpush1.bf16.msra.mxu0 0
  %74 = vmatprep.subr.bf16.mxu0 0
  %75 = vmatpush1.bf16.msra.mxu0 0
  %76 = vmatprep.subr.bf16.mxu0 0
  %77 = vmatpush1.bf16.msra.mxu0 0
  %78 = vmatprep.subr.bf16.mxu0 0
  %79 = vmatpush1.bf16.msra.mxu0 0
  %80 = vmatprep.subr.bf16.mxu0 0
  %81 = vmatpush1.bf16.msra.mxu0 0
  %82 = vmatprep.subr.bf16.mxu0 0
  %83 = vmatpush1.bf16.msra.mxu0 0
  %84 = vmatprep.subr.bf16.mxu0 0
  %85 = vmatpush1.bf16.msra.mxu0 0
  %86 = vmatprep.subr.bf16.mxu0 0
  %87 = vmatpush1.bf16.msra.mxu0 %v70
  %88 = vmatprep.subr.bf16.mxu0 0
  %89 = vmatpush2.bf16.msra.mxu0 0
  %90 = vmatprep.subr.bf16.mxu0 0
  %91 = vmatpush2.bf16.msra.mxu0 0
  %92 = vmatprep.subr.bf16.mxu0 0
  %93 = vmatpush2.bf16.msra.mxu0 0
  %94 = vmatprep.subr.bf16.mxu0 0
  %95 = vmatpush2.bf16.msra.mxu0 0
  %96 = vmatprep.subr.bf16.mxu0 0
  %97 = vmatpush2.bf16.msra.mxu0 0
  %98 = vmatprep.subr.bf16.mxu0 0
  %99 = vmatpush2.bf16.msra.mxu0 0
  %100 = vmatprep.subr.bf16.mxu0 0
  %101 = vmatpush2.bf16.msra.mxu0 0
  %102 = vmatprep.subr.bf16.mxu0 0
  %103 = vmatpush2.bf16.msra.mxu0 0
  %104 = vmatprep.mubr.bf16.mxu0 0
  %105 = vmatmul.mubr.bf16.gmra.mxu0 %v66
  %v106 = vpop.f32.mrf.mxu0
  %v107 = vadd.f32 0.0, %v106
  %v108 = vpop.f32.mrf.mxu0
  %v109 = vpop.f32.mrf.mxu0
  %v110 = vpop.f32.mrf.mxu0
  %111 = vdwg.mxu0
  %v112 = vadd.f32 %v60, %v107
  %113 = vst [vmem:[#allocation2] sm:$0xff] %v112
  // Predicated region
  $region30: #{hgp_sl_forward.15} parent=0 // pred_check
    %p114 = pneg %p24
  $region31: #{hgp_sl_forward.15} parent=0 // pred_check_branch
    %116 = sbr.rel (%p114) target = $region33
  $region32: #{hgp_sl_forward.15} parent=0 // pred_region
    %v117 = vld [vmem:[#allocation2] sm:$0xff]
    %v118 = vld [vmem:[%s4] sm:$0xff]
    %v119 = vld [vmem:[%s4 + $0x8] sm:$0xff]
    %v120 = vld [vmem:[%s4 + $0x10] sm:$0xff]
    %v121 = vld [vmem:[%s4 + $0x18] sm:$0xff]
    %v122 = vld [vmem:[%s4 + $0x20] sm:$0xff]
    %v123 = vld [vmem:[%s4 + $0x28] sm:$0xff]
    %v124 = vld [vmem:[%s4 + $0x30] sm:$0xff]
    %v125 = vld [vmem:[%s4 + $0x38] sm:$0xff]
    %v126 = vld [vmem:[%s4 + $0x40] sm:$0xff]
    %v127 = vld [vmem:[%s4 + $0x48] sm:$0xff]
    %v128 = vld [vmem:[%s4 + $0x50] sm:$0xff]
    %v129 = vld [vmem:[%s4 + $0x58] sm:$0xff]
    %v130 = vld [vmem:[%s4 + $0x60] sm:$0xff]
    %v131 = vld [vmem:[%s4 + $0x68] sm:$0xff]
    %v132 = vld [vmem:[%s4 + $0x70] sm:$0xff]
    %v133 = vld [vmem:[%s4 + $0x78] sm:$0xff]
    %v134 = vld [vmem:[%s5] sm:$0x1]
    %v136 = vlaneseq
    %v137 = vshrl.u32 %v136, 7
    %v138 = vsub.s32 0, %v137
    %v139 = vrot.slane %v134, %v138
    %141 = vmatprep.subr.mxu0 0.0
    %142 = vmatpush1.msra.mxu0 %v133
    %143 = vmatprep.subr.mxu0 0.0
    %144 = vmatpush1.msra.mxu0 %v132
    %145 = vmatprep.subr.mxu0 0.0
    %146 = vmatpush1.msra.mxu0 %v131
    %147 = vmatprep.subr.mxu0 0.0
    %148 = vmatpush1.msra.mxu0 %v130
    %149 = vmatprep.subr.mxu0 0.0
    %150 = vmatpush1.msra.mxu0 %v129
    %151 = vmatprep.subr.mxu0 0.0
    %152 = vmatpush1.msra.mxu0 %v128
    %153 = vmatprep.subr.mxu0 0.0
    %154 = vmatpush1.msra.mxu0 %v127
    %155 = vmatprep.subr.mxu0 0.0
    %156 = vmatpush1.msra.mxu0 %v126
    %157 = vmatprep.subr.mxu0 0.0
    %158 = vmatpush1.msra.mxu0 %v125
    %159 = vmatprep.subr.mxu0 0.0
    %160 = vmatpush1.msra.mxu0 %v124
    %161 = vmatprep.subr.mxu0 0.0
    %162 = vmatpush1.msra.mxu0 %v123
    %163 = vmatprep.subr.mxu0 0.0
    %164 = vmatpush1.msra.mxu0 %v122
    %165 = vmatprep.subr.mxu0 0.0
    %166 = vmatpush1.msra.mxu0 %v121
    %167 = vmatprep.subr.mxu0 0.0
    %168 = vmatpush1.msra.mxu0 %v120
    %169 = vmatprep.subr.mxu0 0.0
    %170 = vmatpush1.msra.mxu0 %v119
    %171 = vmatprep.subr.mxu0 0.0
    %172 = vmatpush1.msra.mxu0 %v118
    %173 = vmatprep.subr.mxu0 0.0
    %174 = vmatpush2.msra.mxu0 0.0
    %175 = vmatprep.subr.mxu0 0.0
    %176 = vmatpush2.msra.mxu0 0.0
    %177 = vmatprep.subr.mxu0 0.0
    %178 = vmatpush2.msra.mxu0 0.0
    %179 = vmatprep.subr.mxu0 0.0
    %180 = vmatpush2.msra.mxu0 0.0
    %181 = vmatprep.subr.mxu0 0.0
    %182 = vmatpush2.msra.mxu0 0.0
    %183 = vmatprep.subr.mxu0 0.0
    %184 = vmatpush2.msra.mxu0 0.0
    %185 = vmatprep.subr.mxu0 0.0
    %186 = vmatpush2.msra.mxu0 0.0
    %187 = vmatprep.subr.mxu0 0.0
    %188 = vmatpush2.msra.mxu0 0.0
    %189 = vmatprep.subr.mxu0 0.0
    %190 = vmatpush2.msra.mxu0 0.0
    %191 = vmatprep.subr.mxu0 0.0
    %192 = vmatpush2.msra.mxu0 0.0
    %193 = vmatprep.subr.mxu0 0.0
    %194 = vmatpush2.msra.mxu0 0.0
    %195 = vmatprep.subr.mxu0 0.0
    %196 = vmatpush2.msra.mxu0 0.0
    %197 = vmatprep.subr.mxu0 0.0
    %198 = vmatpush2.msra.mxu0 0.0
    %199 = vmatprep.subr.mxu0 0.0
    %200 = vmatpush2.msra.mxu0 0.0
    %201 = vmatprep.subr.mxu0 0.0
    %202 = vmatpush2.msra.mxu0 0.0
    %203 = vmatprep.subr.mxu0 0.0
    %204 = vmatpush2.msra.mxu0 0.0
    %205 = vmatprep.mubr.f32.mxu0 0.0
    %206 = vmatmul.mubr.f32.gmra.mxu0 %v117
    %v207 = vpop.f32.mrf.mxu0
    %v208 = vadd.f32 %v139, %v207
    %v209 = vpop.f32.mrf.mxu0
    %210 = vdwg.mxu0
    %v211 = vmax.f32 %v208, 0.0
    %212 = vst [vmem:[%s6] sm:$0xff] %v211
  $region33: #{hgp_sl_forward.15} parent=0 // pred_fallthru
    _
  // Predicated region
  $region34: #{hgp_sl_forward.15} parent=0 // pred_check
    _
  $region35: #{hgp_sl_forward.15} parent=0 // pred_check_branch
    %214 = sbr.rel (0) target = $region37
  $region36: #{hgp_sl_forward.15} parent=0 // pred_region
    _
  $region37: #{hgp_sl_forward.15} parent=0 // pred_fallthru
    _
  // Predicated region
  $region38: #{hgp_sl_forward.15} parent=0 // pred_check
    _
  $region39: #{hgp_sl_forward.15} parent=0 // pred_check_branch
    %216 = sbr.rel (0) target = $region41
  $region40: #{hgp_sl_forward.15} parent=0 // pred_region
    _
  $region41: #{hgp_sl_forward.15} parent=0 // pred_fallthru
    _

// kernel: neg.6
$region0: #{neg.6}
  #allocation0 [shape = 's32[1]{0}', space=sflag, size = 0x4, scoped, tag = 'scoped memory for neg.6']
  %s0 = inlined_call_operand.vmem [shape: f32[4,4], index: 0, kind: input, shape index: {}]
  %s1 = inlined_call_operand.vmem [shape: f32[4,4], index: 1, kind: output, shape index: {}]
  %v2 = vld [vmem:[%s0] sm:$0xf]
  %3 = xla_tuple %v2
  %4 = xla_tuple %3
  %v5 = vxor.u32 %v2, 2147483648
  %6 = xla_tuple %v5
  %7 = vst [vmem:[%s1] sm:$0xf] %v5

// kernel: hgp_sl_forward.17
$region0: #{hgp_sl_forward.17}
  #allocation0 [shape = 'u32[]', space=smem, size = 0x4, offset = 0x4, fixed_abs, tag = 'smem constant byte address 0x4 - core index']
  #allocation1 [shape = 'u32[144,128]{1,0:T(1,128)}', space=vmem, size = 0x12000, scoped, tag = 'internal scratch']
  %s0 = inlined_call_operand.vmem [shape: f32[4,128], index: 0, kind: input, shape index: {}]
  %s1 = inlined_call_operand.vmem [shape: f32[128,1], index: 1, kind: input, shape index: {}]
  %s2 = inlined_call_operand.vmem [shape: f32[1,128], index: 2, kind: input, shape index: {}]
  %s3 = inlined_call_operand.vmem [shape: f32[4,4], index: 3, kind: input, shape index: {}]
  %s4 = inlined_call_operand.vmem [shape: f32[4,1], index: 4, kind: input, shape index: {}]
  %s5 = inlined_call_operand.vmem [shape: f32[1,4], index: 5, kind: input, shape index: {}]
  %s6 = inlined_call_operand.vmem [shape: f32[4,4], index: 6, kind: output, shape index: {}]
  %s7 = sld [smem:[#allocation0]]
  $region34: #{hgp_sl_forward.17} parent=0
    _
  %s9 = ssub.s32 1, %s7
  %s10 = scalar_select 0, %s9, %s7
  // Predicated region
  $region2: #{hgp_sl_forward.17} parent=0 // pred_check
    _
  $region3: #{hgp_sl_forward.17} parent=0 // pred_check_branch
    %12 = sbr.rel (0) target = $region5
  $region4: #{hgp_sl_forward.17} parent=0 // pred_region
    _
  $region5: #{hgp_sl_forward.17} parent=0 // pred_fallthru
    _
  // Predicated region
  $region6: #{hgp_sl_forward.17} parent=0 // pred_check
    _
  $region7: #{hgp_sl_forward.17} parent=0 // pred_check_branch
    %14 = sbr.rel (0) target = $region9
  $region8: #{hgp_sl_forward.17} parent=0 // pred_region
    _
  $region9: #{hgp_sl_forward.17} parent=0 // pred_fallthru
    _
  // Predicated region
  $region10: #{hgp_sl_forward.17} parent=0 // pred_check
    _
  $region11: #{hgp_sl_forward.17} parent=0 // pred_check_branch
    %16 = sbr.rel (0) target = $region13
  $region12: #{hgp_sl_forward.17} parent=0 // pred_region
    _
  $region13: #{hgp_sl_forward.17} parent=0 // pred_fallthru
    _
  // Predicated region
  $region14: #{hgp_sl_forward.17} parent=0 // pred_check
    _
  $region15: #{hgp_sl_forward.17} parent=0 // pred_check_branch
    %18 = sbr.rel (0) target = $region17
  $region16: #{hgp_sl_forward.17} parent=0 // pred_region
    _
  $region17: #{hgp_sl_forward.17} parent=0 // pred_fallthru
    _
  // Predicated region
  $region18: #{hgp_sl_forward.17} parent=0 // pred_check
    _
  $region19: #{hgp_sl_forward.17} parent=0 // pred_check_branch
    %20 = sbr.rel (0) target = $region21
  $region20: #{hgp_sl_forward.17} parent=0 // pred_region
    _
  $region21: #{hgp_sl_forward.17} parent=0 // pred_fallthru
    _
  // Predicated region
  $region22: #{hgp_sl_forward.17} parent=0 // pred_check
    _
  $region23: #{hgp_sl_forward.17} parent=0 // pred_check_branch
    %22 = sbr.rel (0) target = $region25
  $region24: #{hgp_sl_forward.17} parent=0 // pred_region
    _
  $region25: #{hgp_sl_forward.17} parent=0 // pred_fallthru
    _
  %v23 = vld [vmem:[%s0] sm:$0xf]
  %v24 = vld [vmem:[%s1] sm:$0xff]
  %v25 = vld [vmem:[%s1 + $0x8] sm:$0xff]
  %v26 = vld [vmem:[%s1 + $0x10] sm:$0xff]
  %v27 = vld [vmem:[%s1 + $0x18] sm:$0xff]
  %v28 = vld [vmem:[%s1 + $0x20] sm:$0xff]
  %v29 = vld [vmem:[%s1 + $0x28] sm:$0xff]
  %v30 = vld [vmem:[%s1 + $0x30] sm:$0xff]
  %v31 = vld [vmem:[%s1 + $0x38] sm:$0xff]
  %v32 = vld [vmem:[%s1 + $0x40] sm:$0xff]
  %v33 = vld [vmem:[%s1 + $0x48] sm:$0xff]
  %v34 = vld [vmem:[%s1 + $0x50] sm:$0xff]
  %v35 = vld [vmem:[%s1 + $0x58] sm:$0xff]
  %v36 = vld [vmem:[%s1 + $0x60] sm:$0xff]
  %v37 = vld [vmem:[%s1 + $0x68] sm:$0xff]
  %v38 = vld [vmem:[%s1 + $0x70] sm:$0xff]
  %v39 = vld [vmem:[%s1 + $0x78] sm:$0xff]
  %40 = vmatprep.subr.mxu0 0.0
  %41 = vmatpush1.msra.mxu0 %v39
  %42 = vmatprep.subr.mxu0 0.0
  %43 = vmatpush1.msra.mxu0 %v38
  %44 = vmatprep.subr.mxu0 0.0
  %45 = vmatpush1.msra.mxu0 %v37
  %46 = vmatprep.subr.mxu0 0.0
  %47 = vmatpush1.msra.mxu0 %v36
  %48 = vmatprep.subr.mxu0 0.0
  %49 = vmatpush1.msra.mxu0 %v35
  %50 = vmatprep.subr.mxu0 0.0
  %51 = vmatpush1.msra.mxu0 %v34
  %52 = vmatprep.subr.mxu0 0.0
  %53 = vmatpush1.msra.mxu0 %v33
  %54 = vmatprep.subr.mxu0 0.0
  %55 = vmatpush1.msra.mxu0 %v32
  %56 = vmatprep.subr.mxu0 0.0
  %57 = vmatpush1.msra.mxu0 %v31
  %58 = vmatprep.subr.mxu0 0.0
  %59 = vmatpush1.msra.mxu0 %v30
  %60 = vmatprep.subr.mxu0 0.0
  %61 = vmatpush1.msra.mxu0 %v29
  %62 = vmatprep.subr.mxu0 0.0
  %63 = vmatpush1.msra.mxu0 %v28
  %64 = vmatprep.subr.mxu0 0.0
  %65 = vmatpush1.msra.mxu0 %v27
  %66 = vmatprep.subr.mxu0 0.0
  %67 = vmatpush1.msra.mxu0 %v26
  %68 = vmatprep.subr.mxu0 0.0
  %69 = vmatpush1.msra.mxu0 %v25
  %70 = vmatprep.subr.mxu0 0.0
  %71 = vmatpush1.msra.mxu0 %v24
  %72 = vmatprep.subr.mxu0 0.0
  %73 = vmatpush2.msra.mxu0 0.0
  %74 = vmatprep.subr.mxu0 0.0
  %75 = vmatpush2.msra.mxu0 0.0
  %76 = vmatprep.subr.mxu0 0.0
  %77 = vmatpush2.msra.mxu0 0.0
  %78 = vmatprep.subr.mxu0 0.0
  %79 = vmatpush2.msra.mxu0 0.0
  %80 = vmatprep.subr.mxu0 0.0
  %81 = vmatpush2.msra.mxu0 0.0
  %82 = vmatprep.subr.mxu0 0.0
  %83 = vmatpush2.msra.mxu0 0.0
  %84 = vmatprep.subr.mxu0 0.0
  %85 = vmatpush2.msra.mxu0 0.0
  %86 = vmatprep.subr.mxu0 0.0
  %87 = vmatpush2.msra.mxu0 0.0
  %88 = vmatprep.subr.mxu0 0.0
  %89 = vmatpush2.msra.mxu0 0.0
  %90 = vmatprep.subr.mxu0 0.0
  %91 = vmatpush2.msra.mxu0 0.0
  %92 = vmatprep.subr.mxu0 0.0
  %93 = vmatpush2.msra.mxu0 0.0
  %94 = vmatprep.subr.mxu0 0.0
  %95 = vmatpush2.msra.mxu0 0.0
  %96 = vmatprep.subr.mxu0 0.0
  %97 = vmatpush2.msra.mxu0 0.0
  %98 = vmatprep.subr.mxu0 0.0
  %99 = vmatpush2.msra.mxu0 0.0
  %100 = vmatprep.subr.mxu0 0.0
  %101 = vmatpush2.msra.mxu0 0.0
  %102 = vmatprep.subr.mxu0 0.0
  %103 = vmatpush2.msra.mxu0 0.0
  %104 = vmatprep.mubr.f32.mxu0 0.0
  %105 = vmatmul.mubr.f32.gmra.mxu0 %v23
  %v106 = vpop.f32.mrf.mxu0
  %v107 = vadd.f32 0.0, %v106
  %v108 = vpop.f32.mrf.mxu0
  %109 = vdwg.mxu0
  %v110 = vld [vmem:[%s2] sm:$0x1]
  %111 = vmatprep.subr.mxu0 0.0
  %112 = vmatpush1.xpose.msra.mxu0 0.0
  %113 = vmatprep.subr.mxu0 0.0
  %114 = vmatpush1.xpose.msra.mxu0 0.0
  %115 = vmatprep.subr.mxu0 0.0
  %116 = vmatpush1.xpose.msra.mxu0 0.0
  %117 = vmatprep.subr.mxu0 0.0
  %118 = vmatpush1.xpose.msra.mxu0 0.0
  %119 = vmatprep.subr.mxu0 0.0
  %120 = vmatpush1.xpose.msra.mxu0 0.0
  %121 = vmatprep.subr.mxu0 0.0
  %122 = vmatpush1.xpose.msra.mxu0 0.0
  %123 = vmatprep.subr.mxu0 0.0
  %124 = vmatpush1.xpose.msra.mxu0 0.0
  %125 = vmatprep.subr.mxu0 0.0
  %126 = vmatpush1.xpose.msra.mxu0 0.0
  %127 = vmatprep.subr.mxu0 0.0
  %128 = vmatpush1.xpose.msra.mxu0 0.0
  %129 = vmatprep.subr.mxu0 0.0
  %130 = vmatpush1.xpose.msra.mxu0 0.0
  %131 = vmatprep.subr.mxu0 0.0
  %132 = vmatpush1.xpose.msra.mxu0 0.0
  %133 = vmatprep.subr.mxu0 0.0
  %134 = vmatpush1.xpose.msra.mxu0 0.0
  %135 = vmatprep.subr.mxu0 0.0
  %136 = vmatpush1.xpose.msra.mxu0 0.0
  %137 = vmatprep.subr.mxu0 0.0
  %138 = vmatpush1.xpose.msra.mxu0 0.0
  %139 = vmatprep.subr.mxu0 0.0
  %140 = vmatpush1.xpose.msra.mxu0 0.0
  %141 = vmatprep.subr.mxu0 0.0
  %142 = vmatpush1.xpose.msra.mxu0 %v23
  %143 = vmatprep.subr.mxu0 0.0
  %144 = vmatpush2.xpose.msra.mxu0 0.0
  %145 = vmatprep.subr.mxu0 0.0
  %146 = vmatpush2.xpose.msra.mxu0 0.0
  %147 = vmatprep.subr.mxu0 0.0
  %148 = vmatpush2.xpose.msra.mxu0 0.0
  %149 = vmatprep.subr.mxu0 0.0
  %150 = vmatpush2.xpose.msra.mxu0 0.0
  %151 = vmatprep.subr.mxu0 0.0
  %152 = vmatpush2.xpose.msra.mxu0 0.0
  %153 = vmatprep.subr.mxu0 0.0
  %154 = vmatpush2.xpose.msra.mxu0 0.0
  %155 = vmatprep.subr.mxu0 0.0
  %156 = vmatpush2.xpose.msra.mxu0 0.0
  %157 = vmatprep.subr.mxu0 0.0
  %158 = vmatpush2.xpose.msra.mxu0 0.0
  %159 = vmatprep.subr.mxu0 0.0
  %160 = vmatpush2.xpose.msra.mxu0 0.0
  %161 = vmatprep.subr.mxu0 0.0
  %162 = vmatpush2.xpose.msra.mxu0 0.0
  %163 = vmatprep.subr.mxu0 0.0
  %164 = vmatpush2.xpose.msra.mxu0 0.0
  %165 = vmatprep.subr.mxu0 0.0
  %166 = vmatpush2.xpose.msra.mxu0 0.0
  %167 = vmatprep.subr.mxu0 0.0
  %168 = vmatpush2.xpose.msra.mxu0 0.0
  %169 = vmatprep.subr.mxu0 0.0
  %170 = vmatpush2.xpose.msra.mxu0 0.0
  %171 = vmatprep.subr.mxu0 0.0
  %172 = vmatpush2.xpose.msra.mxu0 0.0
  %173 = vmatprep.subr.mxu0 0.0
  %174 = vmatpush2.xpose.msra.mxu0 0.0
  %175 = vmatprep.mubr.f32.mxu0 0.0
  %176 = vmatmul.mubr.f32.gmra.mxu0 %v110
  %v177 = vpop.f32.mrf.mxu0
  %v178 = vadd.f32 0.0, %v177
  %v179 = vpop.f32.mrf.mxu0
  %180 = vdwg.mxu0
  %182 = vset.pattern.permute.xlu0 0
  %183 = vperm.xlu0 %182, %v107
  %v184 = vpop.permute.xlu0 %183
  %v186 = vlaneseq
  %v187 = vshrl.u32 %v186, 7
  %v188 = vsub.s32 0, %v187
  %v189 = vrot.slane %v178, %v188
  %v190 = vadd.f32 %v184, %v189
  %vm191 = vcmp.gt.f32.partialorder %v190, 0.0
  %v192 = vmul.f32 %v190, 0.2
  %v193 = vsel %vm191, %v190, %v192
  %v194 = vld [vmem:[%s3] sm:$0xf]
  %v195 = vadd.f32 %v193, %v194
  %v196 = vld [vmem:[%s4] sm:$0xf]
  %v197 = vld [vmem:[%s5] sm:$0x1]
  %199 = vset.pattern.permute.xlu0 0
  %200 = vperm.xlu0 %199, %v196
  %v201 = vpop.permute.xlu0 %200
  %v204 = vlaneseq
  %v205 = vshrl.u32 %v204, 7
  %v206 = vsub.s32 0, %v205
  %v207 = vrot.slane %v197, %v206
  %vm209 = vcmp.eq.f32.partialorder %v201, %v207
  %v210 = vsel %vm209, %v195, -1e+09
  %vm211 = vcmask 27648
  %212 = vst.msk [vmem:[%s6] sm:$0xf] %vm211, %v210
  // Predicated region
  $region26: #{hgp_sl_forward.17} parent=0 // pred_check
    _
  $region27: #{hgp_sl_forward.17} parent=0 // pred_check_branch
    %214 = sbr.rel (0) target = $region29
  $region28: #{hgp_sl_forward.17} parent=0 // pred_region
    _
  $region29: #{hgp_sl_forward.17} parent=0 // pred_fallthru
    _
  // Predicated region
  $region30: #{hgp_sl_forward.17} parent=0 // pred_check
    _
  $region31: #{hgp_sl_forward.17} parent=0 // pred_check_branch
    %216 = sbr.rel (0) target = $region33
  $region32: #{hgp_sl_forward.17} parent=0 // pred_region
    _
  $region33: #{hgp_sl_forward.17} parent=0 // pred_fallthru
    _

// kernel: hgp_sl_forward.14
$region0: #{hgp_sl_forward.14}
  #allocation0 [shape = 'u32[]', space=smem, size = 0x4, offset = 0x4, fixed_abs, tag = 'smem constant byte address 0x4 - core index']
  #allocation1 [shape = 'u32[144,128]{1,0:T(1,128)}', space=vmem, size = 0x12000, scoped, tag = 'internal scratch']
  %s0 = inlined_call_operand.vmem [shape: f32[2,4,128], index: 0, kind: input, shape index: {}]
  %s1 = inlined_call_operand.vmem [shape: f32[2,256], index: 1, kind: output, shape index: {}]
  %s2 = sld [smem:[#allocation0]]
  $region14: #{hgp_sl_forward.14} parent=0
    _
  %s4 = ssub.s32 1, %s2
  %s5 = scalar_select 0, %s4, %s2
  // Predicated region
  $region2: #{hgp_sl_forward.14} parent=0 // pred_check
    _
  $region3: #{hgp_sl_forward.14} parent=0 // pred_check_branch
    %7 = sbr.rel (0) target = $region5
  $region4: #{hgp_sl_forward.14} parent=0 // pred_region
    _
  $region5: #{hgp_sl_forward.14} parent=0 // pred_fallthru
    _
  %v8 = vld [vmem:[%s0] sm:$0xf]
  %v9 = vld [vmem:[%s0 + $0x4] sm:$0xf]
  %vm10 = vcmask 1043456
  %v11 = vsel %vm10, %v8, -inf
  %v12 = vrot.slane %v11, 4
  %v13 = vmax.f32 %v11, %v12
  %v14 = vrot.slane %v13, 2
  %v15 = vmax.f32 %v13, %v14
  %v16 = vrot.slane %v15, 1
  %v17 = vmax.f32 %v15, %v16
  %v18 = vsel %vm10, %v9, -inf
  %v19 = vrot.slane %v18, 4
  %v20 = vmax.f32 %v18, %v19
  %v21 = vrot.slane %v20, 2
  %v22 = vmax.f32 %v20, %v21
  %v23 = vrot.slane %v22, 1
  %v24 = vmax.f32 %v22, %v23
  %v25 = vsel %vm10, %v8, 0.0
  %v26 = vrot.slane %v25, 4
  %v27 = vadd.f32 %v25, %v26
  %v28 = vrot.slane %v27, 2
  %v29 = vadd.f32 %v27, %v28
  %v30 = vrot.slane %v29, 1
  %v31 = vadd.f32 %v29, %v30
  %v32 = vsel %vm10, %v9, 0.0
  %v33 = vrot.slane %v32, 4
  %v34 = vadd.f32 %v32, %v33
  %v35 = vrot.slane %v34, 2
  %v36 = vadd.f32 %v34, %v35
  %v37 = vrot.slane %v36, 1
  %v38 = vadd.f32 %v36, %v37
  %v39 = vmul.f32 %v31, 0.25
  %v40 = vmul.f32 %v38, 0.25
  %vm43 = vcmask 1041409
  %v44 = vsel %vm43, %v24, %v17
  %v47 = vsel %vm43, %v40, %v39
  %v48 = vcombine.low %v44, %v47
  %v50 = vunpack.c.l.s4 1983009808
  %v51 = vunpack.c.0.s8 %v50
  %v52 = vlaneseq
  %v53 = vshrl.u32 %v52, 7
  %v54 = vsub.s32 %v51, %v53
  %v55 = vrot.slane %v48, %v54
  %57 = vst [vmem:[%s1] sm:$0xf] %v55
  // Predicated region
  $region6: #{hgp_sl_forward.14} parent=0 // pred_check
    _
  $region7: #{hgp_sl_forward.14} parent=0 // pred_check_branch
    %59 = sbr.rel (0) target = $region9
  $region8: #{hgp_sl_forward.14} parent=0 // pred_region
    _
  $region9: #{hgp_sl_forward.14} parent=0 // pred_fallthru
    _
  // Predicated region
  $region10: #{hgp_sl_forward.14} parent=0 // pred_check
    _
  $region11: #{hgp_sl_forward.14} parent=0 // pred_check_branch
    %61 = sbr.rel (0) target = $region13
  $region12: #{hgp_sl_forward.14} parent=0 // pred_region
    _
  $region13: #{hgp_sl_forward.14} parent=0 // pred_fallthru
    _

// kernel: hgp_sl_forward.19
$region0: #{hgp_sl_forward.19}
  #allocation0 [shape = 'u32[]', space=smem, size = 0x4, offset = 0x4, fixed_abs, tag = 'smem constant byte address 0x4 - core index']
  #allocation1 [shape = 'u32[144,128]{1,0:T(1,128)}', space=vmem, size = 0x12000, scoped, tag = 'internal scratch']
  #allocation2 [shape = 'f32[4,128]{1,0:T(4,128)}', space=vmem, size = 0x800, scoped, tag = 'scratch operand']
  %s0 = inlined_call_operand.vmem [shape: f32[4,4], index: 0, kind: input, shape index: {}]
  %s1 = inlined_call_operand.vmem [shape: f32[4,1], index: 1, kind: input, shape index: {}]
  %s2 = inlined_call_operand.vmem [shape: f32[1,4], index: 2, kind: input, shape index: {}]
  %s3 = inlined_call_operand.vmem [shape: f32[4,128], index: 3, kind: input, shape index: {}]
  %s4 = inlined_call_operand.vmem [shape: f32[128,128], index: 4, kind: input, shape index: {}]
  %s5 = inlined_call_operand.vmem [shape: f32[1,128], index: 5, kind: input, shape index: {}]
  %s6 = inlined_call_operand.vmem [shape: f32[4,128], index: 6, kind: output, shape index: {}]
  %s7 = sld [smem:[#allocation0]]
  $region42: #{hgp_sl_forward.19} parent=0
    _
  %s9 = ssub.s32 1, %s7
  %s10 = scalar_select 0, %s9, %s7
  // Predicated region
  $region2: #{hgp_sl_forward.19} parent=0 // pred_check
    _
  $region3: #{hgp_sl_forward.19} parent=0 // pred_check_branch
    %12 = sbr.rel (0) target = $region5
  $region4: #{hgp_sl_forward.19} parent=0 // pred_region
    _
  $region5: #{hgp_sl_forward.19} parent=0 // pred_fallthru
    _
  // Predicated region
  $region6: #{hgp_sl_forward.19} parent=0 // pred_check
    _
  $region7: #{hgp_sl_forward.19} parent=0 // pred_check_branch
    %14 = sbr.rel (0) target = $region9
  $region8: #{hgp_sl_forward.19} parent=0 // pred_region
    _
  $region9: #{hgp_sl_forward.19} parent=0 // pred_fallthru
    _
  // Predicated region
  $region10: #{hgp_sl_forward.19} parent=0 // pred_check
    _
  $region11: #{hgp_sl_forward.19} parent=0 // pred_check_branch
    %16 = sbr.rel (0) target = $region13
  $region12: #{hgp_sl_forward.19} parent=0 // pred_region
    _
  $region13: #{hgp_sl_forward.19} parent=0 // pred_fallthru
    _
  // Predicated region
  $region14: #{hgp_sl_forward.19} parent=0 // pred_check
    _
  $region15: #{hgp_sl_forward.19} parent=0 // pred_check_branch
    %18 = sbr.rel (0) target = $region17
  $region16: #{hgp_sl_forward.19} parent=0 // pred_region
    _
  $region17: #{hgp_sl_forward.19} parent=0 // pred_fallthru
    _
  // Predicated region
  $region18: #{hgp_sl_forward.19} parent=0 // pred_check
    _
  $region19: #{hgp_sl_forward.19} parent=0 // pred_check_branch
    %20 = sbr.rel (0) target = $region21
  $region20: #{hgp_sl_forward.19} parent=0 // pred_region
    _
  $region21: #{hgp_sl_forward.19} parent=0 // pred_fallthru
    _
  // Predicated region
  $region22: #{hgp_sl_forward.19} parent=0 // pred_check
    _
  $region23: #{hgp_sl_forward.19} parent=0 // pred_check_branch
    %22 = sbr.rel (0) target = $region25
  $region24: #{hgp_sl_forward.19} parent=0 // pred_region
    _
  $region25: #{hgp_sl_forward.19} parent=0 // pred_fallthru
    _
  %p24 = scmp.eq.s32.totalorder 0, 0
  // Predicated region
  $region26: #{hgp_sl_forward.19} parent=0 // pred_check
    %p25 = pneg %p24
  $region27: #{hgp_sl_forward.19} parent=0 // pred_check_branch
    %27 = sbr.rel (%p25) target = $region29
  $region28: #{hgp_sl_forward.19} parent=0 // pred_region
    %28 = vst [vmem:[#allocation2] sm:$0xf] 0.0
  $region29: #{hgp_sl_forward.19} parent=0 // pred_fallthru
    _
  %s29 = smul.u32 0, 4
  %v30 = vlaneseq
  %v31 = vshrl.u32 %v30, 7
  %v32 = vstv %s29
  %v33 = vadd.s32 %v32, %v31
  %s34 = smul.u32 0, 4
  %v35 = vlaneseq
  %v36 = vand.u32 %v35, 127
  %v37 = vstv %s34
  %v38 = vadd.s32 %v37, %v36
  %v39 = vld [vmem:[%s0] sm:$0xf]
  %vm40 = vcmp.eq.s32.totalorder %v33, %v38
  %vm41 = vcmp.eq.f32.partialorder %v39, 0.0
  %vm42 = vmand %vm40, %vm41
  %v43 = vsel %vm42, 1.0, 0.0
  %v44 = vadd.f32 %v39, %v43
  %v45 = vld [vmem:[%s1] sm:$0xf]
  %47 = vset.pattern.permute.xlu0 0
  %48 = vperm.xlu0 %47, %v45
  %v49 = vpop.permute.xlu0 %48
  %v51 = vmul.f32 %v44, %v49
  %v52 = vld [vmem:[%s2] sm:$0x1]
  %v54 = vlaneseq
  %v55 = vshrl.u32 %v54, 7
  %v56 = vsub.s32 0, %v55
  %v57 = vrot.slane %v52, %v56
  %v59 = vmul.f32 %v51, %v57
  %v60 = vld [vmem:[#allocation2] sm:$0xf]
  %v61 = vpack.c.bf16 %v59, %v59
  %v62 = vld [vmem:[%s3] sm:$0xf]
  %v63 = vpack.c.bf16 %v62, %v62
  %vm64 = vcmask 31744
  %v66 = vsel %vm64, %v61, 0
  %vm68 = vcmask 1041408
  %v70 = vsel %vm68, %v63, 0
  %72 = vmatprep.subr.bf16.mxu0 0
  %73 = vmatpush1.bf16.msra.mxu0 0
  %74 = vmatprep.subr.bf16.mxu0 0
  %75 = vmatpush1.bf16.msra.mxu0 0
  %76 = vmatprep.subr.bf16.mxu0 0
  %77 = vmatpush1.bf16.msra.mxu0 0
  %78 = vmatprep.subr.bf16.mxu0 0
  %79 = vmatpush1.bf16.msra.mxu0 0
  %80 = vmatprep.subr.bf16.mxu0 0
  %81 = vmatpush1.bf16.msra.mxu0 0
  %82 = vmatprep.subr.bf16.mxu0 0
  %83 = vmatpush1.bf16.msra.mxu0 0
  %84 = vmatprep.subr.bf16.mxu0 0
  %85 = vmatpush1.bf16.msra.mxu0 0
  %86 = vmatprep.subr.bf16.mxu0 0
  %87 = vmatpush1.bf16.msra.mxu0 %v70
  %88 = vmatprep.subr.bf16.mxu0 0
  %89 = vmatpush2.bf16.msra.mxu0 0
  %90 = vmatprep.subr.bf16.mxu0 0
  %91 = vmatpush2.bf16.msra.mxu0 0
  %92 = vmatprep.subr.bf16.mxu0 0
  %93 = vmatpush2.bf16.msra.mxu0 0
  %94 = vmatprep.subr.bf16.mxu0 0
  %95 = vmatpush2.bf16.msra.mxu0 0
  %96 = vmatprep.subr.bf16.mxu0 0
  %97 = vmatpush2.bf16.msra.mxu0 0
  %98 = vmatprep.subr.bf16.mxu0 0
  %99 = vmatpush2.bf16.msra.mxu0 0
  %100 = vmatprep.subr.bf16.mxu0 0
  %101 = vmatpush2.bf16.msra.mxu0 0
  %102 = vmatprep.subr.bf16.mxu0 0
  %103 = vmatpush2.bf16.msra.mxu0 0
  %104 = vmatprep.mubr.bf16.mxu0 0
  %105 = vmatmul.mubr.bf16.gmra.mxu0 %v66
  %v106 = vpop.f32.mrf.mxu0
  %v107 = vadd.f32 0.0, %v106
  %v108 = vpop.f32.mrf.mxu0
  %v109 = vpop.f32.mrf.mxu0
  %v110 = vpop.f32.mrf.mxu0
  %111 = vdwg.mxu0
  %v112 = vadd.f32 %v60, %v107
  %113 = vst [vmem:[#allocation2] sm:$0xf] %v112
  // Predicated region
  $region30: #{hgp_sl_forward.19} parent=0 // pred_check
    %p114 = pneg %p24
  $region31: #{hgp_sl_forward.19} parent=0 // pred_check_branch
    %116 = sbr.rel (%p114) target = $region33
  $region32: #{hgp_sl_forward.19} parent=0 // pred_region
    %v117 = vld [vmem:[#allocation2] sm:$0xf]
    %v118 = vld [vmem:[%s4] sm:$0xff]
    %v119 = vld [vmem:[%s4 + $0x8] sm:$0xff]
    %v120 = vld [vmem:[%s4 + $0x10] sm:$0xff]
    %v121 = vld [vmem:[%s4 + $0x18] sm:$0xff]
    %v122 = vld [vmem:[%s4 + $0x20] sm:$0xff]
    %v123 = vld [vmem:[%s4 + $0x28] sm:$0xff]
    %v124 = vld [vmem:[%s4 + $0x30] sm:$0xff]
    %v125 = vld [vmem:[%s4 + $0x38] sm:$0xff]
    %v126 = vld [vmem:[%s4 + $0x40] sm:$0xff]
    %v127 = vld [vmem:[%s4 + $0x48] sm:$0xff]
    %v128 = vld [vmem:[%s4 + $0x50] sm:$0xff]
    %v129 = vld [vmem:[%s4 + $0x58] sm:$0xff]
    %v130 = vld [vmem:[%s4 + $0x60] sm:$0xff]
    %v131 = vld [vmem:[%s4 + $0x68] sm:$0xff]
    %v132 = vld [vmem:[%s4 + $0x70] sm:$0xff]
    %v133 = vld [vmem:[%s4 + $0x78] sm:$0xff]
    %v134 = vld [vmem:[%s5] sm:$0x1]
    %v136 = vlaneseq
    %v137 = vshrl.u32 %v136, 7
    %v138 = vsub.s32 0, %v137
    %v139 = vrot.slane %v134, %v138
    %141 = vmatprep.subr.mxu0 0.0
    %142 = vmatpush1.msra.mxu0 %v133
    %143 = vmatprep.subr.mxu0 0.0
    %144 = vmatpush1.msra.mxu0 %v132
    %145 = vmatprep.subr.mxu0 0.0
    %146 = vmatpush1.msra.mxu0 %v131
    %147 = vmatprep.subr.mxu0 0.0
    %148 = vmatpush1.msra.mxu0 %v130
    %149 = vmatprep.subr.mxu0 0.0
    %150 = vmatpush1.msra.mxu0 %v129
    %151 = vmatprep.subr.mxu0 0.0
    %152 = vmatpush1.msra.mxu0 %v128
    %153 = vmatprep.subr.mxu0 0.0
    %154 = vmatpush1.msra.mxu0 %v127
    %155 = vmatprep.subr.mxu0 0.0
    %156 = vmatpush1.msra.mxu0 %v126
    %157 = vmatprep.subr.mxu0 0.0
    %158 = vmatpush1.msra.mxu0 %v125
    %159 = vmatprep.subr.mxu0 0.0
    %160 = vmatpush1.msra.mxu0 %v124
    %161 = vmatprep.subr.mxu0 0.0
    %162 = vmatpush1.msra.mxu0 %v123
    %163 = vmatprep.subr.mxu0 0.0
    %164 = vmatpush1.msra.mxu0 %v122
    %165 = vmatprep.subr.mxu0 0.0
    %166 = vmatpush1.msra.mxu0 %v121
    %167 = vmatprep.subr.mxu0 0.0
    %168 = vmatpush1.msra.mxu0 %v120
    %169 = vmatprep.subr.mxu0 0.0
    %170 = vmatpush1.msra.mxu0 %v119
    %171 = vmatprep.subr.mxu0 0.0
    %172 = vmatpush1.msra.mxu0 %v118
    %173 = vmatprep.subr.mxu0 0.0
    %174 = vmatpush2.msra.mxu0 0.0
    %175 = vmatprep.subr.mxu0 0.0
    %176 = vmatpush2.msra.mxu0 0.0
    %177 = vmatprep.subr.mxu0 0.0
    %178 = vmatpush2.msra.mxu0 0.0
    %179 = vmatprep.subr.mxu0 0.0
    %180 = vmatpush2.msra.mxu0 0.0
    %181 = vmatprep.subr.mxu0 0.0
    %182 = vmatpush2.msra.mxu0 0.0
    %183 = vmatprep.subr.mxu0 0.0
    %184 = vmatpush2.msra.mxu0 0.0
    %185 = vmatprep.subr.mxu0 0.0
    %186 = vmatpush2.msra.mxu0 0.0
    %187 = vmatprep.subr.mxu0 0.0
    %188 = vmatpush2.msra.mxu0 0.0
    %189 = vmatprep.subr.mxu0 0.0
    %190 = vmatpush2.msra.mxu0 0.0
    %191 = vmatprep.subr.mxu0 0.0
    %192 = vmatpush2.msra.mxu0 0.0
    %193 = vmatprep.subr.mxu0 0.0
    %194 = vmatpush2.msra.mxu0 0.0
    %195 = vmatprep.subr.mxu0 0.0
    %196 = vmatpush2.msra.mxu0 0.0
    %197 = vmatprep.subr.mxu0 0.0
    %198 = vmatpush2.msra.mxu0 0.0
    %199 = vmatprep.subr.mxu0 0.0
    %200 = vmatpush2.msra.mxu0 0.0
    %201 = vmatprep.subr.mxu0 0.0
    %202 = vmatpush2.msra.mxu0 0.0
    %203 = vmatprep.subr.mxu0 0.0
    %204 = vmatpush2.msra.mxu0 0.0
    %205 = vmatprep.mubr.f32.mxu0 0.0
    %206 = vmatmul.mubr.f32.gmra.mxu0 %v117
    %v207 = vpop.f32.mrf.mxu0
    %v208 = vadd.f32 %v139, %v207
    %v209 = vpop.f32.mrf.mxu0
    %210 = vdwg.mxu0
    %v211 = vmax.f32 %v208, 0.0
    %212 = vst [vmem:[%s6] sm:$0xf] %v211
  $region33: #{hgp_sl_forward.19} parent=0 // pred_fallthru
    _
  // Predicated region
  $region34: #{hgp_sl_forward.19} parent=0 // pred_check
    _
  $region35: #{hgp_sl_forward.19} parent=0 // pred_check_branch
    %214 = sbr.rel (0) target = $region37
  $region36: #{hgp_sl_forward.19} parent=0 // pred_region
    _
  $region37: #{hgp_sl_forward.19} parent=0 // pred_fallthru
    _
  // Predicated region
  $region38: #{hgp_sl_forward.19} parent=0 // pred_check
    _
  $region39: #{hgp_sl_forward.19} parent=0 // pred_check_branch
    %216 = sbr.rel (0) target = $region41
  $region40: #{hgp_sl_forward.19} parent=0 // pred_region
    _
  $region41: #{hgp_sl_forward.19} parent=0 // pred_fallthru
    _

// kernel: hgp_sl_forward.20
$region0: #{hgp_sl_forward.20}
  #allocation0 [shape = 'u32[]', space=smem, size = 0x4, offset = 0x4, fixed_abs, tag = 'smem constant byte address 0x4 - core index']
  #allocation1 [shape = 'u32[144,128]{1,0:T(1,128)}', space=vmem, size = 0x12000, scoped, tag = 'internal scratch']
  %s0 = inlined_call_operand.vmem [shape: f32[2,2,128], index: 0, kind: input, shape index: {}]
  %s1 = inlined_call_operand.vmem [shape: f32[2,256], index: 1, kind: output, shape index: {}]
  %s2 = sld [smem:[#allocation0]]
  $region14: #{hgp_sl_forward.20} parent=0
    _
  %s4 = ssub.s32 1, %s2
  %s5 = scalar_select 0, %s4, %s2
  // Predicated region
  $region2: #{hgp_sl_forward.20} parent=0 // pred_check
    _
  $region3: #{hgp_sl_forward.20} parent=0 // pred_check_branch
    %7 = sbr.rel (0) target = $region5
  $region4: #{hgp_sl_forward.20} parent=0 // pred_region
    _
  $region5: #{hgp_sl_forward.20} parent=0 // pred_fallthru
    _
  %v8 = vld [vmem:[%s0] sm:$0x3]
  %v9 = vld [vmem:[%s0 + $0x2] sm:$0x3]
  %vm10 = vcmask 1041408
  %v11 = vsel %vm10, %v8, -inf
  %v12 = vrot.slane %v11, 4
  %v13 = vmax.f32 %v11, %v12
  %v14 = vrot.slane %v13, 2
  %v15 = vmax.f32 %v13, %v14
  %v16 = vrot.slane %v15, 1
  %v17 = vmax.f32 %v15, %v16
  %v18 = vsel %vm10, %v9, -inf
  %v19 = vrot.slane %v18, 4
  %v20 = vmax.f32 %v18, %v19
  %v21 = vrot.slane %v20, 2
  %v22 = vmax.f32 %v20, %v21
  %v23 = vrot.slane %v22, 1
  %v24 = vmax.f32 %v22, %v23
  %v25 = vsel %vm10, %v8, 0.0
  %v26 = vrot.slane %v25, 4
  %v27 = vadd.f32 %v25, %v26
  %v28 = vrot.slane %v27, 2
  %v29 = vadd.f32 %v27, %v28
  %v30 = vrot.slane %v29, 1
  %v31 = vadd.f32 %v29, %v30
  %v32 = vsel %vm10, %v9, 0.0
  %v33 = vrot.slane %v32, 4
  %v34 = vadd.f32 %v32, %v33
  %v35 = vrot.slane %v34, 2
  %v36 = vadd.f32 %v34, %v35
  %v37 = vrot.slane %v36, 1
  %v38 = vadd.f32 %v36, %v37
  %v39 = vmul.f32 %v31, 0.5
  %v40 = vmul.f32 %v38, 0.5
  %vm43 = vcmask 1041409
  %v44 = vsel %vm43, %v24, %v17
  %v47 = vsel %vm43, %v40, %v39
  %v48 = vcombine.low %v44, %v47
  %v50 = vunpack.c.l.s4 1983009808
  %v51 = vunpack.c.0.s8 %v50
  %v52 = vlaneseq
  %v53 = vshrl.u32 %v52, 7
  %v54 = vsub.s32 %v51, %v53
  %v55 = vrot.slane %v48, %v54
  %57 = vst [vmem:[%s1] sm:$0xf] %v55
  // Predicated region
  $region6: #{hgp_sl_forward.20} parent=0 // pred_check
    _
  $region7: #{hgp_sl_forward.20} parent=0 // pred_check_branch
    %59 = sbr.rel (0) target = $region9
  $region8: #{hgp_sl_forward.20} parent=0 // pred_region
    _
  $region9: #{hgp_sl_forward.20} parent=0 // pred_fallthru
    _
  // Predicated region
  $region10: #{hgp_sl_forward.20} parent=0 // pred_check
    _
  $region11: #{hgp_sl_forward.20} parent=0 // pred_check_branch
    %61 = sbr.rel (0) target = $region13
  $region12: #{hgp_sl_forward.20} parent=0 // pred_region
    _
  $region13: #{hgp_sl_forward.20} parent=0 // pred_fallthru
    _

// kernel: hgp_sl_forward.21
$region0: #{hgp_sl_forward.21}
  #allocation0 [shape = 'u32[]', space=smem, size = 0x4, offset = 0x4, fixed_abs, tag = 'smem constant byte address 0x4 - core index']
  #allocation1 [shape = 'u32[144,128]{1,0:T(1,128)}', space=vmem, size = 0x12000, scoped, tag = 'internal scratch']
  %s0 = inlined_call_operand.vmem [shape: f32[2,256], index: 0, kind: input, shape index: {}]
  %s1 = inlined_call_operand.vmem [shape: f32[2,256], index: 1, kind: input, shape index: {}]
  %s2 = inlined_call_operand.vmem [shape: f32[2,256], index: 2, kind: input, shape index: {}]
  %s3 = inlined_call_operand.vmem [shape: f32[256,128], index: 3, kind: input, shape index: {}]
  %s4 = inlined_call_operand.vmem [shape: f32[1,128], index: 4, kind: input, shape index: {}]
  %s5 = inlined_call_operand.vmem [shape: f32[128,128], index: 5, kind: input, shape index: {}]
  %s6 = inlined_call_operand.vmem [shape: f32[1,128], index: 6, kind: input, shape index: {}]
  %s7 = inlined_call_operand.vmem [shape: f32[128,128], index: 7, kind: input, shape index: {}]
  %s8 = inlined_call_operand.vmem [shape: f32[1,128], index: 8, kind: input, shape index: {}]
  %s9 = inlined_call_operand.hbm [shape: f32[2,128], index: 9, kind: output, shape index: {}]
  %s10 = sld [smem:[#allocation0]]
  $region46: #{hgp_sl_forward.21} parent=0
    _
  %s12 = ssub.s32 1, %s10
  %s13 = scalar_select 0, %s12, %s10
  $region1: #{hgp_sl_forward.21} parent=0
    #allocation2 [shape = 'u8[1024]{0}', space=vmem, size = 0x400, scoped, tag = 'output window, operand 0, single buffered']
    #allocation3 [shape = 's32[1]{0}', space=sflag, size = 0x4, scoped, tag = 'scoped memory for hgp_sl_forward.21']
    %14 = vsyncpa [#allocation3], 0
    // Predicated region
    $region2: #{hgp_sl_forward.21} parent=1 // pred_check
      _
    $region3: #{hgp_sl_forward.21} parent=1 // pred_check_branch
      %16 = sbr.rel (0) target = $region5
    $region4: #{hgp_sl_forward.21} parent=1 // pred_region
      _
    $region5: #{hgp_sl_forward.21} parent=1 // pred_fallthru
      _
    // Predicated region
    $region6: #{hgp_sl_forward.21} parent=1 // pred_check
      _
    $region7: #{hgp_sl_forward.21} parent=1 // pred_check_branch
      %18 = sbr.rel (0) target = $region9
    $region8: #{hgp_sl_forward.21} parent=1 // pred_region
      _
    $region9: #{hgp_sl_forward.21} parent=1 // pred_fallthru
      _
    // Predicated region
    $region10: #{hgp_sl_forward.21} parent=1 // pred_check
      _
    $region11: #{hgp_sl_forward.21} parent=1 // pred_check_branch
      %20 = sbr.rel (0) target = $region13
    $region12: #{hgp_sl_forward.21} parent=1 // pred_region
      _
    $region13: #{hgp_sl_forward.21} parent=1 // pred_fallthru
      _
    // Predicated region
    $region14: #{hgp_sl_forward.21} parent=1 // pred_check
      _
    $region15: #{hgp_sl_forward.21} parent=1 // pred_check_branch
      %22 = sbr.rel (0) target = $region17
    $region16: #{hgp_sl_forward.21} parent=1 // pred_region
      _
    $region17: #{hgp_sl_forward.21} parent=1 // pred_fallthru
      _
    // Predicated region
    $region18: #{hgp_sl_forward.21} parent=1 // pred_check
      _
    $region19: #{hgp_sl_forward.21} parent=1 // pred_check_branch
      %24 = sbr.rel (0) target = $region21
    $region20: #{hgp_sl_forward.21} parent=1 // pred_region
      _
    $region21: #{hgp_sl_forward.21} parent=1 // pred_fallthru
      _
    // Predicated region
    $region22: #{hgp_sl_forward.21} parent=1 // pred_check
      _
    $region23: #{hgp_sl_forward.21} parent=1 // pred_check_branch
      %26 = sbr.rel (0) target = $region25
    $region24: #{hgp_sl_forward.21} parent=1 // pred_region
      _
    $region25: #{hgp_sl_forward.21} parent=1 // pred_fallthru
      _
    // Predicated region
    $region26: #{hgp_sl_forward.21} parent=1 // pred_check
      _
    $region27: #{hgp_sl_forward.21} parent=1 // pred_check_branch
      %28 = sbr.rel (0) target = $region29
    $region28: #{hgp_sl_forward.21} parent=1 // pred_region
      _
    $region29: #{hgp_sl_forward.21} parent=1 // pred_fallthru
      _
    // Predicated region
    $region30: #{hgp_sl_forward.21} parent=1 // pred_check
      _
    $region31: #{hgp_sl_forward.21} parent=1 // pred_check_branch
      %30 = sbr.rel (0) target = $region33
    $region32: #{hgp_sl_forward.21} parent=1 // pred_region
      _
    $region33: #{hgp_sl_forward.21} parent=1 // pred_fallthru
      _
    // Predicated region
    $region34: #{hgp_sl_forward.21} parent=1 // pred_check
      _
    $region35: #{hgp_sl_forward.21} parent=1 // pred_check_branch
      %32 = sbr.rel (0) target = $region37
    $region36: #{hgp_sl_forward.21} parent=1 // pred_region
      _
    $region37: #{hgp_sl_forward.21} parent=1 // pred_fallthru
      _
    %v33 = vld [vmem:[%s0] sm:$0xf]
    %v34 = vmax.f32 %v33, 0.0
    %v35 = vld [vmem:[%s1] sm:$0xf]
    %v36 = vmax.f32 %v35, 0.0
    %v37 = vadd.f32 %v34, %v36
    %v38 = vld [vmem:[%s2] sm:$0xf]
    %v39 = vmax.f32 %v38, 0.0
    %v40 = vadd.f32 %v37, %v39
    %v41 = vld [vmem:[%s3] sm:$0xff]
    %v42 = vld [vmem:[%s3 + $0x8] sm:$0xff]
    %v43 = vld [vmem:[%s3 + $0x10] sm:$0xff]
    %v44 = vld [vmem:[%s3 + $0x18] sm:$0xff]
    %v45 = vld [vmem:[%s3 + $0x20] sm:$0xff]
    %v46 = vld [vmem:[%s3 + $0x28] sm:$0xff]
    %v47 = vld [vmem:[%s3 + $0x30] sm:$0xff]
    %v48 = vld [vmem:[%s3 + $0x38] sm:$0xff]
    %v49 = vld [vmem:[%s3 + $0x40] sm:$0xff]
    %v50 = vld [vmem:[%s3 + $0x48] sm:$0xff]
    %v51 = vld [vmem:[%s3 + $0x50] sm:$0xff]
    %v52 = vld [vmem:[%s3 + $0x58] sm:$0xff]
    %v53 = vld [vmem:[%s3 + $0x60] sm:$0xff]
    %v54 = vld [vmem:[%s3 + $0x68] sm:$0xff]
    %v55 = vld [vmem:[%s3 + $0x70] sm:$0xff]
    %v56 = vld [vmem:[%s3 + $0x78] sm:$0xff]
    %v57 = vld [vmem:[%s3 + $0x80] sm:$0xff]
    %v58 = vld [vmem:[%s3 + $0x88] sm:$0xff]
    %v59 = vld [vmem:[%s3 + $0x90] sm:$0xff]
    %v60 = vld [vmem:[%s3 + $0x98] sm:$0xff]
    %v61 = vld [vmem:[%s3 + $0xa0] sm:$0xff]
    %v62 = vld [vmem:[%s3 + $0xa8] sm:$0xff]
    %v63 = vld [vmem:[%s3 + $0xb0] sm:$0xff]
    %v64 = vld [vmem:[%s3 + $0xb8] sm:$0xff]
    %v65 = vld [vmem:[%s3 + $0xc0] sm:$0xff]
    %v66 = vld [vmem:[%s3 + $0xc8] sm:$0xff]
    %v67 = vld [vmem:[%s3 + $0xd0] sm:$0xff]
    %v68 = vld [vmem:[%s3 + $0xd8] sm:$0xff]
    %v69 = vld [vmem:[%s3 + $0xe0] sm:$0xff]
    %v70 = vld [vmem:[%s3 + $0xe8] sm:$0xff]
    %v71 = vld [vmem:[%s3 + $0xf0] sm:$0xff]
    %v72 = vld [vmem:[%s3 + $0xf8] sm:$0xff]
    %v73 = vld [vmem:[%s4] sm:$0x1]
    %v75 = vlaneseq
    %v76 = vshrl.u32 %v75, 7
    %v77 = vsub.s32 0, %v76
    %v78 = vrot.slane %v73, %v77
    %v82 = vunpack.c.l.s4 1983009808
    %v83 = vunpack.c.0.s8 %v82
    %v84 = vlaneseq
    %v85 = vshrl.u32 %v84, 7
    %v86 = vsub.s32 %v83, %v85
    %v87 = vrot.slane %v40, %v86
    %v88 = vcombine.high %v87, %v87
    %91 = vmatprep.subr.mxu0 0.0
    %92 = vmatpush1.msra.mxu0 %v56
    %93 = vmatprep.subr.mxu0 0.0
    %94 = vmatpush1.msra.mxu0 %v55
    %95 = vmatprep.subr.mxu0 0.0
    %96 = vmatpush1.msra.mxu0 %v54
    %97 = vmatprep.subr.mxu0 0.0
    %98 = vmatpush1.msra.mxu0 %v53
    %99 = vmatprep.subr.mxu0 0.0
    %100 = vmatpush1.msra.mxu0 %v52
    %101 = vmatprep.subr.mxu0 0.0
    %102 = vmatpush1.msra.mxu0 %v51
    %103 = vmatprep.subr.mxu0 0.0
    %104 = vmatpush1.msra.mxu0 %v50
    %105 = vmatprep.subr.mxu0 0.0
    %106 = vmatpush1.msra.mxu0 %v49
    %107 = vmatprep.subr.mxu0 0.0
    %108 = vmatpush1.msra.mxu0 %v48
    %109 = vmatprep.subr.mxu0 0.0
    %110 = vmatpush1.msra.mxu0 %v47
    %111 = vmatprep.subr.mxu0 0.0
    %112 = vmatpush1.msra.mxu0 %v46
    %113 = vmatprep.subr.mxu0 0.0
    %114 = vmatpush1.msra.mxu0 %v45
    %115 = vmatprep.subr.mxu0 0.0
    %116 = vmatpush1.msra.mxu0 %v44
    %117 = vmatprep.subr.mxu0 0.0
    %118 = vmatpush1.msra.mxu0 %v43
    %119 = vmatprep.subr.mxu0 0.0
    %120 = vmatpush1.msra.mxu0 %v42
    %121 = vmatprep.subr.mxu0 0.0
    %122 = vmatpush1.msra.mxu0 %v41
    %123 = vmatprep.subr.mxu0 0.0
    %124 = vmatpush2.msra.mxu0 %v72
    %125 = vmatprep.subr.mxu0 0.0
    %126 = vmatpush2.msra.mxu0 %v71
    %127 = vmatprep.subr.mxu0 0.0
    %128 = vmatpush2.msra.mxu0 %v70
    %129 = vmatprep.subr.mxu0 0.0
    %130 = vmatpush2.msra.mxu0 %v69
    %131 = vmatprep.subr.mxu0 0.0
    %132 = vmatpush2.msra.mxu0 %v68
    %133 = vmatprep.subr.mxu0 0.0
    %134 = vmatpush2.msra.mxu0 %v67
    %135 = vmatprep.subr.mxu0 0.0
    %136 = vmatpush2.msra.mxu0 %v66
    %137 = vmatprep.subr.mxu0 0.0
    %138 = vmatpush2.msra.mxu0 %v65
    %139 = vmatprep.subr.mxu0 0.0
    %140 = vmatpush2.msra.mxu0 %v64
    %141 = vmatprep.subr.mxu0 0.0
    %142 = vmatpush2.msra.mxu0 %v63
    %143 = vmatprep.subr.mxu0 0.0
    %144 = vmatpush2.msra.mxu0 %v62
    %145 = vmatprep.subr.mxu0 0.0
    %146 = vmatpush2.msra.mxu0 %v61
    %147 = vmatprep.subr.mxu0 0.0
    %148 = vmatpush2.msra.mxu0 %v60
    %149 = vmatprep.subr.mxu0 0.0
    %150 = vmatpush2.msra.mxu0 %v59
    %151 = vmatprep.subr.mxu0 0.0
    %152 = vmatpush2.msra.mxu0 %v58
    %153 = vmatprep.subr.mxu0 0.0
    %154 = vmatpush2.msra.mxu0 %v57
    %155 = vmatprep.mubr.f32.mxu0 %v88
    %156 = vmatmul.mubr.f32.gmra.mxu0 %v87
    %v157 = vpop.f32.mrf.mxu0
    %v158 = vadd.f32 %v78, %v157
    %v159 = vpop.f32.mrf.mxu0
    %160 = vdwg.mxu0
    %v161 = vmax.f32 %v158, 0.0
    %v162 = vld [vmem:[%s5] sm:$0xff]
    %v163 = vld [vmem:[%s5 + $0x8] sm:$0xff]
    %v164 = vld [vmem:[%s5 + $0x10] sm:$0xff]
    %v165 = vld [vmem:[%s5 + $0x18] sm:$0xff]
    %v166 = vld [vmem:[%s5 + $0x20] sm:$0xff]
    %v167 = vld [vmem:[%s5 + $0x28] sm:$0xff]
    %v168 = vld [vmem:[%s5 + $0x30] sm:$0xff]
    %v169 = vld [vmem:[%s5 + $0x38] sm:$0xff]
    %v170 = vld [vmem:[%s5 + $0x40] sm:$0xff]
    %v171 = vld [vmem:[%s5 + $0x48] sm:$0xff]
    %v172 = vld [vmem:[%s5 + $0x50] sm:$0xff]
    %v173 = vld [vmem:[%s5 + $0x58] sm:$0xff]
    %v174 = vld [vmem:[%s5 + $0x60] sm:$0xff]
    %v175 = vld [vmem:[%s5 + $0x68] sm:$0xff]
    %v176 = vld [vmem:[%s5 + $0x70] sm:$0xff]
    %v177 = vld [vmem:[%s5 + $0x78] sm:$0xff]
    %v178 = vld [vmem:[%s6] sm:$0x1]
    %v180 = vlaneseq
    %v181 = vshrl.u32 %v180, 7
    %v182 = vsub.s32 0, %v181
    %v183 = vrot.slane %v178, %v182
    %185 = vmatprep.subr.mxu0 0.0
    %186 = vmatpush1.msra.mxu0 %v177
    %187 = vmatprep.subr.mxu0 0.0
    %188 = vmatpush1.msra.mxu0 %v176
    %189 = vmatprep.subr.mxu0 0.0
    %190 = vmatpush1.msra.mxu0 %v175
    %191 = vmatprep.subr.mxu0 0.0
    %192 = vmatpush1.msra.mxu0 %v174
    %193 = vmatprep.subr.mxu0 0.0
    %194 = vmatpush1.msra.mxu0 %v173
    %195 = vmatprep.subr.mxu0 0.0
    %196 = vmatpush1.msra.mxu0 %v172
    %197 = vmatprep.subr.mxu0 0.0
    %198 = vmatpush1.msra.mxu0 %v171
    %199 = vmatprep.subr.mxu0 0.0
    %200 = vmatpush1.msra.mxu0 %v170
    %201 = vmatprep.subr.mxu0 0.0
    %202 = vmatpush1.msra.mxu0 %v169
    %203 = vmatprep.subr.mxu0 0.0
    %204 = vmatpush1.msra.mxu0 %v168
    %205 = vmatprep.subr.mxu0 0.0
    %206 = vmatpush1.msra.mxu0 %v167
    %207 = vmatprep.subr.mxu0 0.0
    %208 = vmatpush1.msra.mxu0 %v166
    %209 = vmatprep.subr.mxu0 0.0
    %210 = vmatpush1.msra.mxu0 %v165
    %211 = vmatprep.subr.mxu0 0.0
    %212 = vmatpush1.msra.mxu0 %v164
    %213 = vmatprep.subr.mxu0 0.0
    %214 = vmatpush1.msra.mxu0 %v163
    %215 = vmatprep.subr.mxu0 0.0
    %216 = vmatpush1.msra.mxu0 %v162
    %217 = vmatprep.subr.mxu0 0.0
    %218 = vmatpush2.msra.mxu0 0.0
    %219 = vmatprep.subr.mxu0 0.0
    %220 = vmatpush2.msra.mxu0 0.0
    %221 = vmatprep.subr.mxu0 0.0
    %222 = vmatpush2.msra.mxu0 0.0
    %223 = vmatprep.subr.mxu0 0.0
    %224 = vmatpush2.msra.mxu0 0.0
    %225 = vmatprep.subr.mxu0 0.0
    %226 = vmatpush2.msra.mxu0 0.0
    %227 = vmatprep.subr.mxu0 0.0
    %228 = vmatpush2.msra.mxu0 0.0
    %229 = vmatprep.subr.mxu0 0.0
    %230 = vmatpush2.msra.mxu0 0.0
    %231 = vmatprep.subr.mxu0 0.0
    %232 = vmatpush2.msra.mxu0 0.0
    %233 = vmatprep.subr.mxu0 0.0
    %234 = vmatpush2.msra.mxu0 0.0
    %235 = vmatprep.subr.mxu0 0.0
    %236 = vmatpush2.msra.mxu0 0.0
    %237 = vmatprep.subr.mxu0 0.0
    %238 = vmatpush2.msra.mxu0 0.0
    %239 = vmatprep.subr.mxu0 0.0
    %240 = vmatpush2.msra.mxu0 0.0
    %241 = vmatprep.subr.mxu0 0.0
    %242 = vmatpush2.msra.mxu0 0.0
    %243 = vmatprep.subr.mxu0 0.0
    %244 = vmatpush2.msra.mxu0 0.0
    %245 = vmatprep.subr.mxu0 0.0
    %246 = vmatpush2.msra.mxu0 0.0
    %247 = vmatprep.subr.mxu0 0.0
    %248 = vmatpush2.msra.mxu0 0.0
    %249 = vmatprep.mubr.f32.mxu0 0.0
    %250 = vmatmul.mubr.f32.gmra.mxu0 %v161
    %v251 = vpop.f32.mrf.mxu0
    %v252 = vadd.f32 %v183, %v251
    %v253 = vpop.f32.mrf.mxu0
    %254 = vdwg.mxu0
    %v255 = vmax.f32 %v252, 0.0
    %v256 = vld [vmem:[%s7] sm:$0xff]
    %v257 = vld [vmem:[%s7 + $0x8] sm:$0xff]
    %v258 = vld [vmem:[%s7 + $0x10] sm:$0xff]
    %v259 = vld [vmem:[%s7 + $0x18] sm:$0xff]
    %v260 = vld [vmem:[%s7 + $0x20] sm:$0xff]
    %v261 = vld [vmem:[%s7 + $0x28] sm:$0xff]
    %v262 = vld [vmem:[%s7 + $0x30] sm:$0xff]
    %v263 = vld [vmem:[%s7 + $0x38] sm:$0xff]
    %v264 = vld [vmem:[%s7 + $0x40] sm:$0xff]
    %v265 = vld [vmem:[%s7 + $0x48] sm:$0xff]
    %v266 = vld [vmem:[%s7 + $0x50] sm:$0xff]
    %v267 = vld [vmem:[%s7 + $0x58] sm:$0xff]
    %v268 = vld [vmem:[%s7 + $0x60] sm:$0xff]
    %v269 = vld [vmem:[%s7 + $0x68] sm:$0xff]
    %v270 = vld [vmem:[%s7 + $0x70] sm:$0xff]
    %v271 = vld [vmem:[%s7 + $0x78] sm:$0xff]
    %v272 = vld [vmem:[%s8] sm:$0x1]
    %v274 = vlaneseq
    %v275 = vshrl.u32 %v274, 7
    %v276 = vsub.s32 0, %v275
    %v277 = vrot.slane %v272, %v276
    %279 = vmatprep.subr.mxu0 0.0
    %280 = vmatpush1.msra.mxu0 %v271
    %281 = vmatprep.subr.mxu0 0.0
    %282 = vmatpush1.msra.mxu0 %v270
    %283 = vmatprep.subr.mxu0 0.0
    %284 = vmatpush1.msra.mxu0 %v269
    %285 = vmatprep.subr.mxu0 0.0
    %286 = vmatpush1.msra.mxu0 %v268
    %287 = vmatprep.subr.mxu0 0.0
    %288 = vmatpush1.msra.mxu0 %v267
    %289 = vmatprep.subr.mxu0 0.0
    %290 = vmatpush1.msra.mxu0 %v266
    %291 = vmatprep.subr.mxu0 0.0
    %292 = vmatpush1.msra.mxu0 %v265
    %293 = vmatprep.subr.mxu0 0.0
    %294 = vmatpush1.msra.mxu0 %v264
    %295 = vmatprep.subr.mxu0 0.0
    %296 = vmatpush1.msra.mxu0 %v263
    %297 = vmatprep.subr.mxu0 0.0
    %298 = vmatpush1.msra.mxu0 %v262
    %299 = vmatprep.subr.mxu0 0.0
    %300 = vmatpush1.msra.mxu0 %v261
    %301 = vmatprep.subr.mxu0 0.0
    %302 = vmatpush1.msra.mxu0 %v260
    %303 = vmatprep.subr.mxu0 0.0
    %304 = vmatpush1.msra.mxu0 %v259
    %305 = vmatprep.subr.mxu0 0.0
    %306 = vmatpush1.msra.mxu0 %v258
    %307 = vmatprep.subr.mxu0 0.0
    %308 = vmatpush1.msra.mxu0 %v257
    %309 = vmatprep.subr.mxu0 0.0
    %310 = vmatpush1.msra.mxu0 %v256
    %311 = vmatprep.subr.mxu0 0.0
    %312 = vmatpush2.msra.mxu0 0.0
    %313 = vmatprep.subr.mxu0 0.0
    %314 = vmatpush2.msra.mxu0 0.0
    %315 = vmatprep.subr.mxu0 0.0
    %316 = vmatpush2.msra.mxu0 0.0
    %317 = vmatprep.subr.mxu0 0.0
    %318 = vmatpush2.msra.mxu0 0.0
    %319 = vmatprep.subr.mxu0 0.0
    %320 = vmatpush2.msra.mxu0 0.0
    %321 = vmatprep.subr.mxu0 0.0
    %322 = vmatpush2.msra.mxu0 0.0
    %323 = vmatprep.subr.mxu0 0.0
    %324 = vmatpush2.msra.mxu0 0.0
    %325 = vmatprep.subr.mxu0 0.0
    %326 = vmatpush2.msra.mxu0 0.0
    %327 = vmatprep.subr.mxu0 0.0
    %328 = vmatpush2.msra.mxu0 0.0
    %329 = vmatprep.subr.mxu0 0.0
    %330 = vmatpush2.msra.mxu0 0.0
    %331 = vmatprep.subr.mxu0 0.0
    %332 = vmatpush2.msra.mxu0 0.0
    %333 = vmatprep.subr.mxu0 0.0
    %334 = vmatpush2.msra.mxu0 0.0
    %335 = vmatprep.subr.mxu0 0.0
    %336 = vmatpush2.msra.mxu0 0.0
    %337 = vmatprep.subr.mxu0 0.0
    %338 = vmatpush2.msra.mxu0 0.0
    %339 = vmatprep.subr.mxu0 0.0
    %340 = vmatpush2.msra.mxu0 0.0
    %341 = vmatprep.subr.mxu0 0.0
    %342 = vmatpush2.msra.mxu0 0.0
    %343 = vmatprep.mubr.f32.mxu0 0.0
    %344 = vmatmul.mubr.f32.gmra.mxu0 %v255
    %v345 = vpop.f32.mrf.mxu0
    %v346 = vadd.f32 %v277, %v345
    %v347 = vpop.f32.mrf.mxu0
    %348 = vdwg.mxu0
    %v349 = vlaneseq
    %v350 = vand.u32 %v349, 127
    %vm351 = vcmp.lt.s32.totalorder %v350, 4
    %v352 = vsel %vm351, %v346, -1e+30
    %vm353 = vcmask 1041408
    %v354 = vsel %vm353, %v352, -inf
    %355 = vmax.xlane.f32.xlu0 %v354
    %v356 = vpop.xlane.xlu0 %355
    %v357 = vsub.f32 %v352, %v356
    %v358 = vmul.f32 %v357, 1.442695
    %v359 = vpow.pop %v358
    %v360 = vsel %vm351, %v359, 0.0
    %v361 = vsel %vm353, %v360, 0.0
    %362 = vadd.xlane.f32.xlu0 %v361
    %v363 = vpop.xlane.xlu0 %362
    %v364 = vlog2.pop %v363
    %v365 = vmul.f32 %v364, 0.6931472
    %v366 = vsub.f32 %v357, %v365
    %367 = vst [vmem:[#allocation2] sm:$0x3] %v366
    // Predicated region
    $region38: #{hgp_sl_forward.21} parent=1 // pred_check
      _
    $region39: #{hgp_sl_forward.21} parent=1 // pred_check_branch
      %369 = sbr.rel (0) target = $region41
    $region40: #{hgp_sl_forward.21} parent=1 // pred_region
      %s371 = ssub.s32 32, 32
      %372 = vsyncadd [#allocation3], %s371
      %s374 = sshll.u32 [#allocation2], 4
      %s375 = int_to_ptr.vmem [resolvable:$true] %s374
      %377 = dma.vmem_to_hbm [thread:$0]  %s375, 32, %s9, [#allocation3]
    $region41: #{hgp_sl_forward.21} parent=1 // pred_fallthru
      _
    // Predicated region
    $region42: #{hgp_sl_forward.21} parent=1 // pred_check
      _
    $region43: #{hgp_sl_forward.21} parent=1 // pred_check_branch
      %379 = sbr.rel (0) target = $region45
    $region44: #{hgp_sl_forward.21} parent=1 // pred_region
      %380 = dma.done [#allocation3], 32
    $region45: #{hgp_sl_forward.21} parent=1 // pred_fallthru
      _
    %381 = vsyncpa [#allocation3], 1

</llo_original>
